<compile_context>
chip_gen: v7x
topology: tpu7x:2x2x1
jax: 0.10.0
libtpu: 0.0.40
codegen_flags: <defaults>
</compile_context>

<pallas_src>
import functools

import jax
import jax.numpy as jnp
from jax.experimental import pallas as pl
from jax.experimental.pallas import tpu as pltpu

LANES = 128  # TPU lane width: every channel axis is zero-padded to this.


# ------------------------------ fused Pallas kernel ---------------------------------

def _lrelu(x, slope):
    return jnp.where(x >= 0.0, x, slope * x)


def _discriminator_kernel(
        p0_ref, w0_ref, b0_ref, w1_ref, b1_ref, w2_ref, b2_ref, wred_ref, bfin_ref,
        o_ref,                                   # output (B, 1)
        h1_ref, h2_ref,                          # VMEM scratch (f32, per-sample S1 blocks)
        *, B, Hp0, Mp, S1, Ho1, kh, slope):
    f32 = jnp.float32
    bf16 = jnp.bfloat16
    n_out = B * S1 - (kh - 1)                    # conv1/conv2 rows over the whole batch

    # ---- conv0 + folded-BN bias + LeakyReLU: ONE MXU dot for all 4 pool partners ----
    a0 = _lrelu(jnp.dot(p0_ref[...], w0_ref[...], preferred_element_type=f32)
                + b0_ref[...], slope)                                   # (4*Mp, 128)
    # Fused AvgPool2d(2): the four pool partners are contiguous M blocks of a0.
    xpool = 0.25 * (a0[0:Mp] + a0[Mp:2 * Mp] + a0[2 * Mp:3 * Mp] + a0[3 * Mp:4 * Mp])

    def conv_h(src_ref, w_ref, b_ref):
        """Batched 1-D conv along H (kw == 1): kh shifted (n_out,128)@(128,128) dots."""
        acc = jnp.dot(src_ref[pl.ds(0, n_out), :].astype(bf16), w_ref[0],
                      preferred_element_type=f32)
        for i in range(1, kh):
            acc = acc + jnp.dot(src_ref[pl.ds(i, n_out), :].astype(bf16), w_ref[i],
                                preferred_element_type=f32)
        return _lrelu(acc + b_ref[...], slope)

    # ---- stage conv1 input: per-sample S1-row block [zero, pooled rows, zero, ...] ---
    h1_ref[...] = jnp.zeros_like(h1_ref)
    for b in range(B):
        h1_ref[pl.ds(b * S1 + 1, Hp0), :] = xpool[b * Hp0:(b + 1) * Hp0]

    # ---- conv1 over the whole batch (cross-sample junk output rows are never read) ---
    y1 = conv_h(h1_ref, w1_ref, b1_ref)                                 # (n_out, 128)

    # ---- stage conv2 input ------------------------------------------------------------
    h2_ref[...] = jnp.zeros_like(h2_ref)
    for b in range(B):
        h2_ref[pl.ds(b * S1 + 1, Ho1), :] = y1[b * S1:b * S1 + Ho1]

    # ---- conv2 over the whole batch ---------------------------------------------------
    y2 = conv_h(h2_ref, w2_ref, b2_ref)                                 # (n_out, 128)

    # ---- AvgPool2d(2) + Flatten + Linear(900,Hd) + Dropout(eval) + Linear(Hd,1):
    #      the whole dense stack, the pool averaging and every input-independent
    #      (W-padding) column were folded into wred / bfin at weight-prep time, so the
    #      tail is a per-sample multiply + reduce (VPU + XLU), no MXU dots.
    rows = []
    for b in range(B):
        seg = y2[b * S1:b * S1 + Ho1] * wred_ref[...]                   # (Ho1, 128)
        rows.append(jnp.sum(seg, axis=0, keepdims=True))                # (1, 128)
    r = jnp.concatenate(rows, axis=0)                                   # (B, 128)
    logit = jnp.sum(r, axis=1, keepdims=True) + bfin_ref[...]           # (B, 1)
    o_ref[...] = 1.0 / (1.0 + jnp.exp(-logit))


# ---------------------------------- JAX glue ----------------------------------------

def _conv0_pool_patches(x_nhwc, kh0, kw0, *, stride=2, pad=1):
    """im2col for conv0 with the first AvgPool2d(2) pre-arranged: the four pool partners
    of every pooled position are stacked as four contiguous M blocks so the kernel does
    ONE MXU dot and averages contiguous slices of its result.
    Returns (4*Mp, kh0*kw0*C) bf16 with K ordered (i, j, c), and Hp0 (pooled height)."""
    B, H, W, C = x_nhwc.shape
    xp = jnp.pad(x_nhwc, ((0, 0), (pad, pad), (pad, pad), (0, 0)))
    Ho = (H + 2 * pad - kh0) // stride + 1
    Wo = (W + 2 * pad - kw0) // stride + 1
    assert Wo == 2, "module geometry requires conv0 output width == 2"
    Hp0 = Ho // 2
    # Only kh0 H-tap slices; the (kw0, C) part of each patch is a contiguous window.
    taps = jnp.stack(
        [xp[:, i:i + stride * (Ho - 1) + 1:stride, :, :] for i in range(kh0)], axis=2)
    # taps: (B, Ho, kh0, W + 2*pad, C)
    Mp = -(-(B * Hp0) // 8) * 8
    groups = []
    for dh in range(2):
        for dw in range(2):
            g = taps[:, dh::2, :, stride * dw:stride * dw + kw0, :]   # (B, Hp0, kh0, kw0, C)
            g = g.reshape(B * Hp0, kh0 * kw0 * C)
            g = jnp.pad(g, ((0, Mp - B * Hp0), (0, 0)))
            groups.append(g)
    return jnp.concatenate(groups, axis=0).astype(jnp.bfloat16), Hp0


def discriminator_forward(prep, beats, notes, *, slope=0.1):
    """Eval-mode forward pass of the Discriminator via one fused Pallas kernel."""
    ids = jnp.concatenate([beats, notes], axis=2).astype(jnp.int32)     # (B, S, L)
    emb = jnp.take(prep["embed"], ids, axis=0)                          # (B, S, L, E)
    x = emb.transpose(0, 2, 3, 1)                                       # NHWC: (B, L, E, S)
    B, L, E, S = x.shape

    kw0 = E                                         # conv0 kernel width == embed_dim
    kh0 = prep["w0"].shape[0] // (kw0 * S)          # conv0 kernel height (16)
    kh = prep["w1"].shape[0]                        # conv1/conv2 kernel height (8)

    p0, Hp0 = _conv0_pool_patches(x, kh0, kw0, stride=2, pad=1)
    Mp = p0.shape[0] // 4
    Ho1 = Hp0 + 2 - kh + 1                          # conv1 output height (24)
    assert prep["wred"].shape[0] == Ho1
    S1 = -(-(Hp0 + 2) // 8) * 8                     # per-sample row stride (32)

    kernel = functools.partial(
        _discriminator_kernel,
        B=B, Hp0=Hp0, Mp=Mp, S1=S1, Ho1=Ho1, kh=kh, slope=slope)

    return pl.pallas_call(
        kernel,
        out_shape=jax.ShapeDtypeStruct((B, 1), jnp.float32),
        in_specs=[pl.BlockSpec(memory_space=pltpu.MemorySpace.VMEM)] * 9,
        out_specs=pl.BlockSpec(memory_space=pltpu.MemorySpace.VMEM),
        scratch_shapes=[
            pltpu.VMEM((B * S1, LANES), jnp.float32),   # H-padded conv1 input (per-sample blocks)
            pltpu.VMEM((B * S1, LANES), jnp.float32),   # H-padded conv2 input
        ],
    )(p0, prep["w0"], prep["b0"], prep["w1"], prep["b1"], prep["w2"], prep["b2"],
      prep["wred"], prep["bfin"])


# -------------------------------- parameters ----------------------------------------

def init_params(key, num_notes, seq_len, embed_dim, dense_hidden_size):
    """PyTorch-layout parameters for the Discriminator."""
    n_f0, n_f1, n_f2 = 100, 50, 50
    k0, k1, k2 = 16, 8, 8
    dense_input_size = 900
    ks = jax.random.split(key, 20)
    f32 = jnp.float32

    def bn_params(ka, kb, kc, kd, n):
        gamma = 1.0 + 0.1 * jax.random.normal(ka, (n,), f32)
        beta = 0.1 * jax.random.normal(kb, (n,), f32)
        mean = 0.1 * jax.random.normal(kc, (n,), f32)
        var = 0.5 + jax.random.uniform(kd, (n,), f32)
        return gamma, beta, mean, var

    p = {}
    p["embed"] = jax.random.normal(ks[0], (num_notes, embed_dim), f32)
    p["w0"] = 0.05 * jax.random.normal(ks[1], (n_f0, seq_len, k0, embed_dim), f32)
    p["bn0"] = bn_params(ks[2], ks[3], ks[4], ks[5], n_f0)
    p["w1"] = 0.05 * jax.random.normal(ks[6], (n_f1, n_f0, k1, 1), f32)
    p["bn1"] = bn_params(ks[7], ks[8], ks[9], ks[10], n_f1)
    p["w2"] = 0.05 * jax.random.normal(ks[11], (n_f2, n_f1, k2, 1), f32)
    p["bn2"] = bn_params(ks[12], ks[13], ks[14], ks[15], n_f2)
    # nn.Linear stores weight as (out, in); y = x @ W.T + b
    p["w_d1"] = 0.05 * jax.random.normal(ks[16], (dense_hidden_size, dense_input_size), f32)
    p["b_d1"] = 0.05 * jax.random.normal(ks[17], (dense_hidden_size,), f32)
    p["w_d2"] = 0.05 * jax.random.normal(ks[18], (1, dense_hidden_size), f32)
    p["b_d2"] = 0.05 * jax.random.normal(ks[19], (1,), f32)
    return p


def fold_bn(gamma, beta, mean, var, eps=1e-5):
    scale = gamma / jnp.sqrt(var + eps)
    return scale, beta - mean * scale


def prepare_inference_params(p, *, token_len=128, slope=0.1):
    """One-time weight prep: fold eval-mode BatchNorm into the conv weights, pad channel
    axes to the 128-lane width, cast MXU operands to bf16, precompute the input-
    independent W-padding ("constant border") contributions, and fold AvgPool(2) +
    Flatten + Linear(900,Hd) + Dropout(eval) + Linear(Hd,1) into one (Ho1,128) reduction
    slab `wred` plus a scalar bias `bfin`."""
    f32, bf16 = jnp.float32, jnp.bfloat16
    s0, bias0 = fold_bn(*p["bn0"])
    s1, bias1 = fold_bn(*p["bn1"])
    s2, bias2 = fold_bn(*p["bn2"])

    def lrelu(x):
        return jnp.where(x >= 0.0, x, slope * x)

    def pad_bias(b):
        return jnp.pad(b, (0, LANES - b.shape[0])).reshape(1, LANES).astype(f32)

    # ---- conv0: (O,C,kh,kw) -> (kh*kw*C, 128), K order (i, j, c); BN scale folded ----
    O0, C0, kh0, kw0 = p["w0"].shape
    w0 = p["w0"].transpose(2, 3, 1, 0).reshape(kh0 * kw0 * C0, O0) * s0[None, :]
    w0 = jnp.pad(w0, ((0, 0), (0, LANES - O0))).astype(bf16)

    # ---- conv1 / conv2: (O,C,kh,1) -> (kh, 128, 128); BN scale folded -----------------
    def prep_conv(w, scale):
        O, C, kh_, kw_ = w.shape
        assert kw_ == 1 and O <= LANES and C <= LANES
        wt = w[:, :, :, 0].transpose(2, 1, 0) * scale[None, None, :]      # (kh, C, O)
        return jnp.pad(wt, ((0, 0), (0, LANES - C), (0, LANES - O))).astype(bf16)

    w1p = prep_conv(p["w1"], s1)
    w2p = prep_conv(p["w2"], s2)

    # ---- geometry (fixed by the module) ------------------------------------------------
    c1_out, c1_in, kh, _ = p["w1"].shape            # 50, 100, 8
    c2_out = p["w2"].shape[0]                       # 50
    Hd, Din = p["w_d1"].shape
    Ho0 = (token_len + 2 - kh0) // 2 + 1            # 58
    Hp0 = Ho0 // 2                                  # 29
    Ho1 = Hp0 + 2 - kh + 1                          # 24
    Ho2 = Ho1 + 2 - kh + 1                          # 19
    Hf = Ho2 // 2                                   # 9
    Wf = 2
    assert c2_out * Hf * Wf == Din

    # ---- input-independent constant-border path (computed once, in f32) ---------------
    w2s = p["w2"][:, :, :, 0] * s2[:, None, None]                        # (O, C, kh)
    const1 = lrelu(bias1)                 # conv1 output on a zero (W-pad) column
    const2 = lrelu(bias2)                 # conv2 output on a zero (W-pad) column
    col = jnp.concatenate([jnp.zeros((1, c1_out), f32),
                           jnp.tile(const1[None, :], (Ho1, 1)),
                           jnp.zeros((1, c1_out), f32)], axis=0)         # (Ho1+2, 50)
    win = jnp.stack([col[j:j + kh] for j in range(Ho2)], axis=0)         # (Ho2, kh, 50)
    col2 = lrelu(jnp.einsum("jic,oci->jo", win, w2s) + bias2[None, :])   # (Ho2, 50)
    hp_const = 0.5 * (col2[0:2 * Hf:2] + col2[1:2 * Hf:2])               # (Hf, 50)
    pooled_w0 = 0.5 * (const2[None, :] + hp_const)                       # (Hf, 50)

    # ---- dense fold: Linear(900,Hd) o Dropout(eval) o Linear(Hd,1) == Linear(900,1) ----
    w_comb = (p["w_d2"] @ p["w_d1"]).reshape(c2_out, Hf, Wf)             # (c, h, w) order
    b_comb = (p["w_d2"] @ p["b_d1"] + p["b_d2"])[0]

    bias_final = (b_comb
                  + jnp.sum(pooled_w0 * w_comb[:, :, 0].T)
                  + jnp.sum(0.5 * hp_const * w_comb[:, :, 1].T))

    # data-path slab: folds the 2nd AvgPool's H averaging + flatten + both Linears onto
    # the conv2 data-column output rows directly.
    wdata = 0.25 * w_comb[:, :, 1].T                                     # (Hf, 50)
    wred = jnp.zeros((Ho1, c2_out), f32)
    wred = wred.at[0:2 * Hf:2].set(wdata).at[1:2 * Hf:2].set(wdata)
    wred = jnp.pad(wred, ((0, 0), (0, LANES - c2_out)))

    return {
        "embed": p["embed"].astype(f32),
        "w0": w0, "b0": pad_bias(bias0),
        "w1": w1p, "b1": pad_bias(bias1),
        "w2": w2p, "b2": pad_bias(bias2),
        "wred": wred.astype(f32),
        "bfin": jnp.reshape(bias_final, (1, 1)).astype(f32),
    }


# ------------------------------ pure-JAX reference -----------------------------------

def discriminator_reference(params, beats, notes, *, slope=0.1):
    """Pure-XLA eval-mode reference mirroring the PyTorch module (for verification)."""
    ids = jnp.concatenate([beats, notes], axis=2).astype(jnp.int32)
    x = jnp.take(params["embed"], ids, axis=0)         # (B, S, L, E) treated as NCHW

    def conv(v, w, stride):
        return jax.lax.conv_general_dilated(
            v, w, window_strides=(stride, stride), padding=((1, 1), (1, 1)),
            dimension_numbers=("NCHW", "OIHW", "NCHW"))

    def bn(v, bnp):
        g, b, m, s = (t[None, :, None, None] for t in bnp)
        return (v - m) / jnp.sqrt(s + 1e-5) * g + b

    def lrelu(v):
        return jnp.where(v >= 0, v, slope * v)

    def pool(v):
        B, C, H, W = v.shape
        v = v[:, :, :H // 2 * 2, :W // 2 * 2].reshape(B, C, H // 2, 2, W // 2, 2)
        return v.mean(axis=(3, 5))

    y = pool(lrelu(bn(conv(x, params["w0"], 2), params["bn0"])))
    y = lrelu(bn(conv(y, params["w1"], 1), params["bn1"]))
    y = pool(lrelu(bn(conv(y, params["w2"], 1), params["bn2"])))
    y = y.reshape(y.shape[0], -1)
    y = y @ params["w_d1"].T + params["b_d1"]
    y = y @ params["w_d2"].T + params["b_d2"]
    return jax.nn.sigmoid(y)


# ------------------------------------ main -------------------------------------------

if __name__ == "__main__":
    # Shapes consistent with the module: dense_input_size=900 forces the concatenated
    # token length to 128 (beats_len = notes_len = 64).
    num_notes, seq_len, embed_dim, dense_hidden = 32, 4, 8, 32
    batch = 2
    beats_len = notes_len = 64

    key = jax.random.PRNGKey(0)
    pkey, bkey, nkey = jax.random.split(key, 3)
    params = init_params(pkey, num_notes, seq_len, embed_dim, dense_hidden)
    prep = prepare_inference_params(params, token_len=beats_len + notes_len)

    beats = jax.random.randint(bkey, (batch, seq_len, beats_len), 0, num_notes)
    notes = jax.random.randint(nkey, (batch, seq_len, notes_len), 0, num_notes)

    fwd = jax.jit(discriminator_forward)
    pred = jax.block_until_ready(fwd(prep, beats, notes))

    assert pred.shape == (batch, 1), pred.shape
    assert bool(jnp.all(jnp.isfinite(pred)))
    assert bool(jnp.all((pred >= 0.0) & (pred <= 1.0)))

    # Cross-check against the pure-XLA reference of the same eval-mode forward
    # (tolerance accounts for the bf16 MXU operands used in the Pallas path).
    ref = discriminator_reference(params, beats, notes)
    assert bool(jnp.allclose(pred, ref, atol=3e-2)), (pred, ref)

    print("KERNEL_OK")
</pallas_src>

<mosaic_0001>
module attributes {stable_mosaic.version = 11 : i64} {
  func.func @_discriminator_kernel(%arg0: memref<256x512xbf16, #tpu.memory_space<vmem>>, %arg1: memref<512x128xbf16, #tpu.memory_space<vmem>>, %arg2: memref<1x128xf32, #tpu.memory_space<vmem>>, %arg3: memref<8x128x128xbf16, #tpu.memory_space<vmem>>, %arg4: memref<1x128xf32, #tpu.memory_space<vmem>>, %arg5: memref<8x128x128xbf16, #tpu.memory_space<vmem>>, %arg6: memref<1x128xf32, #tpu.memory_space<vmem>>, %arg7: memref<24x128xf32, #tpu.memory_space<vmem>>, %arg8: memref<1x1xf32, #tpu.memory_space<vmem>>, %arg9: memref<2x1xf32, #tpu.memory_space<vmem>>, %arg10: memref<64x128xf32, #tpu.memory_space<vmem>>, %arg11: memref<64x128xf32, #tpu.memory_space<vmem>>) attributes {dimension_semantics = [], scalar_prefetch = 0 : i64, scratch_operands = 2 : i64, tpu.core_type = #tpu.core_type<tc>} {
    %c0 = arith.constant 0 : index
    %c0_0 = arith.constant 0 : index
    %0 = vector.load %arg0[%c0, %c0_0] : memref<256x512xbf16, #tpu.memory_space<vmem>>, vector<256x512xbf16>
    %c0_1 = arith.constant 0 : index
    %c0_2 = arith.constant 0 : index
    %1 = vector.load %arg1[%c0_1, %c0_2] : memref<512x128xbf16, #tpu.memory_space<vmem>>, vector<512x128xbf16>
    %cst = arith.constant dense<0.000000e+00> : vector<256x128xf32>
    %2 = tpu.matmul %0, %1, %cst {dimension_numbers = #tpu.dot_dimension_numbers<[1], [0], [0], [1], [0, 0, 1, 1], [], []>} : vector<256x512xbf16>, vector<512x128xbf16>, vector<256x128xf32> -> vector<256x128xf32>
    %c0_3 = arith.constant 0 : index
    %c0_4 = arith.constant 0 : index
    %3 = vector.load %arg2[%c0_3, %c0_4] : memref<1x128xf32, #tpu.memory_space<vmem>>, vector<1x128xf32>
    %4 = vector.broadcast %3 : vector<1x128xf32> to vector<256x128xf32>
    %5 = arith.addf %2, %4 : vector<256x128xf32>
    %cst_5 = arith.constant 0.000000e+00 : f32
    %6 = vector.broadcast %cst_5 : f32 to vector<256x128xf32>
    %7 = arith.cmpf oge, %5, %6 : vector<256x128xf32>
    %cst_6 = arith.constant 1.000000e-01 : f32
    %8 = vector.broadcast %cst_6 : f32 to vector<256x128xf32>
    %9 = arith.mulf %8, %5 : vector<256x128xf32>
    %10 = arith.select %7, %5, %9 : vector<256x128xi1>, vector<256x128xf32>
    %11 = vector.extract_strided_slice %10 {offsets = [0, 0], sizes = [64, 128], strides = [1, 1]} : vector<256x128xf32> to vector<64x128xf32>
    %12 = vector.extract_strided_slice %10 {offsets = [64, 0], sizes = [64, 128], strides = [1, 1]} : vector<256x128xf32> to vector<64x128xf32>
    %13 = arith.addf %11, %12 : vector<64x128xf32>
    %14 = vector.extract_strided_slice %10 {offsets = [128, 0], sizes = [64, 128], strides = [1, 1]} : vector<256x128xf32> to vector<64x128xf32>
    %15 = arith.addf %13, %14 : vector<64x128xf32>
    %16 = vector.extract_strided_slice %10 {offsets = [192, 0], sizes = [64, 128], strides = [1, 1]} : vector<256x128xf32> to vector<64x128xf32>
    %17 = arith.addf %15, %16 : vector<64x128xf32>
    %cst_7 = arith.constant 2.500000e-01 : f32
    %18 = vector.broadcast %cst_7 : f32 to vector<64x128xf32>
    %19 = arith.mulf %18, %17 : vector<64x128xf32>
    %cst_8 = arith.constant 0.000000e+00 : f32
    %20 = vector.broadcast %cst_8 : f32 to vector<64x128xf32>
    %c0_9 = arith.constant 0 : index
    %c0_10 = arith.constant 0 : index
    %21 = vector.load %arg10[%c0_9, %c0_10] : memref<64x128xf32, #tpu.memory_space<vmem>>, vector<64x128xf32>
    tpu.vector_store %arg10[%c0_9, %c0_10], %20 {strides = array<i32>} : memref<64x128xf32, #tpu.memory_space<vmem>>, vector<64x128xf32>,
    %22 = vector.extract_strided_slice %19 {offsets = [0, 0], sizes = [29, 128], strides = [1, 1]} : vector<64x128xf32> to vector<29x128xf32>
    %c1 = arith.constant 1 : index
    %c0_11 = arith.constant 0 : index
    %23 = vector.load %arg10[%c1, %c0_11] : memref<64x128xf32, #tpu.memory_space<vmem>>, vector<29x128xf32>
    tpu.vector_store %arg10[%c1, %c0_11], %22 {strides = array<i32>} : memref<64x128xf32, #tpu.memory_space<vmem>>, vector<29x128xf32>,
    %24 = vector.extract_strided_slice %19 {offsets = [29, 0], sizes = [29, 128], strides = [1, 1]} : vector<64x128xf32> to vector<29x128xf32>
    %c33 = arith.constant 33 : index
    %c0_12 = arith.constant 0 : index
    %25 = vector.load %arg10[%c33, %c0_12] : memref<64x128xf32, #tpu.memory_space<vmem>>, vector<29x128xf32>
    tpu.vector_store %arg10[%c33, %c0_12], %24 {strides = array<i32>} : memref<64x128xf32, #tpu.memory_space<vmem>>, vector<29x128xf32>,
    %c0_13 = arith.constant 0 : index
    %c0_14 = arith.constant 0 : index
    %26 = vector.load %arg10[%c0_13, %c0_14] : memref<64x128xf32, #tpu.memory_space<vmem>>, vector<57x128xf32>
    %27 = arith.truncf %26 : vector<57x128xf32> to vector<57x128xbf16>
    %c0_15 = arith.constant 0 : index
    %c0_16 = arith.constant 0 : index
    %c0_17 = arith.constant 0 : index
    %28 = vector.load %arg3[%c0_15, %c0_16, %c0_17] : memref<8x128x128xbf16, #tpu.memory_space<vmem>>, vector<1x128x128xbf16>
    %29 = vector.shape_cast %28 : vector<1x128x128xbf16> to vector<128x128xbf16>
    %cst_18 = arith.constant dense<0.000000e+00> : vector<57x128xf32>
    %30 = tpu.matmul %27, %29, %cst_18 {dimension_numbers = #tpu.dot_dimension_numbers<[1], [0], [0], [1], [0, 0, 1, 1], [], []>} : vector<57x128xbf16>, vector<128x128xbf16>, vector<57x128xf32> -> vector<57x128xf32>
    %c1_19 = arith.constant 1 : index
    %c0_20 = arith.constant 0 : index
    %31 = vector.load %arg10[%c1_19, %c0_20] : memref<64x128xf32, #tpu.memory_space<vmem>>, vector<57x128xf32>
    %32 = arith.truncf %31 : vector<57x128xf32> to vector<57x128xbf16>
    %c1_21 = arith.constant 1 : index
    %c0_22 = arith.constant 0 : index
    %c0_23 = arith.constant 0 : index
    %33 = vector.load %arg3[%c1_21, %c0_22, %c0_23] : memref<8x128x128xbf16, #tpu.memory_space<vmem>>, vector<1x128x128xbf16>
    %34 = vector.shape_cast %33 : vector<1x128x128xbf16> to vector<128x128xbf16>
    %cst_24 = arith.constant dense<0.000000e+00> : vector<57x128xf32>
    %35 = tpu.matmul %32, %34, %cst_24 {dimension_numbers = #tpu.dot_dimension_numbers<[1], [0], [0], [1], [0, 0, 1, 1], [], []>} : vector<57x128xbf16>, vector<128x128xbf16>, vector<57x128xf32> -> vector<57x128xf32>
    %36 = arith.addf %30, %35 : vector<57x128xf32>
    %c2 = arith.constant 2 : index
    %c0_25 = arith.constant 0 : index
    %37 = vector.load %arg10[%c2, %c0_25] : memref<64x128xf32, #tpu.memory_space<vmem>>, vector<57x128xf32>
    %38 = arith.truncf %37 : vector<57x128xf32> to vector<57x128xbf16>
    %c2_26 = arith.constant 2 : index
    %c0_27 = arith.constant 0 : index
    %c0_28 = arith.constant 0 : index
    %39 = vector.load %arg3[%c2_26, %c0_27, %c0_28] : memref<8x128x128xbf16, #tpu.memory_space<vmem>>, vector<1x128x128xbf16>
    %40 = vector.shape_cast %39 : vector<1x128x128xbf16> to vector<128x128xbf16>
    %cst_29 = arith.constant dense<0.000000e+00> : vector<57x128xf32>
    %41 = tpu.matmul %38, %40, %cst_29 {dimension_numbers = #tpu.dot_dimension_numbers<[1], [0], [0], [1], [0, 0, 1, 1], [], []>} : vector<57x128xbf16>, vector<128x128xbf16>, vector<57x128xf32> -> vector<57x128xf32>
    %42 = arith.addf %36, %41 : vector<57x128xf32>
    %c3 = arith.constant 3 : index
    %c0_30 = arith.constant 0 : index
    %43 = vector.load %arg10[%c3, %c0_30] : memref<64x128xf32, #tpu.memory_space<vmem>>, vector<57x128xf32>
    %44 = arith.truncf %43 : vector<57x128xf32> to vector<57x128xbf16>
    %c3_31 = arith.constant 3 : index
    %c0_32 = arith.constant 0 : index
    %c0_33 = arith.constant 0 : index
    %45 = vector.load %arg3[%c3_31, %c0_32, %c0_33] : memref<8x128x128xbf16, #tpu.memory_space<vmem>>, vector<1x128x128xbf16>
    %46 = vector.shape_cast %45 : vector<1x128x128xbf16> to vector<128x128xbf16>
    %cst_34 = arith.constant dense<0.000000e+00> : vector<57x128xf32>
    %47 = tpu.matmul %44, %46, %cst_34 {dimension_numbers = #tpu.dot_dimension_numbers<[1], [0], [0], [1], [0, 0, 1, 1], [], []>} : vector<57x128xbf16>, vector<128x128xbf16>, vector<57x128xf32> -> vector<57x128xf32>
    %48 = arith.addf %42, %47 : vector<57x128xf32>
    %c4 = arith.constant 4 : index
    %c0_35 = arith.constant 0 : index
    %49 = vector.load %arg10[%c4, %c0_35] : memref<64x128xf32, #tpu.memory_space<vmem>>, vector<57x128xf32>
    %50 = arith.truncf %49 : vector<57x128xf32> to vector<57x128xbf16>
    %c4_36 = arith.constant 4 : index
    %c0_37 = arith.constant 0 : index
    %c0_38 = arith.constant 0 : index
    %51 = vector.load %arg3[%c4_36, %c0_37, %c0_38] : memref<8x128x128xbf16, #tpu.memory_space<vmem>>, vector<1x128x128xbf16>
    %52 = vector.shape_cast %51 : vector<1x128x128xbf16> to vector<128x128xbf16>
    %cst_39 = arith.constant dense<0.000000e+00> : vector<57x128xf32>
    %53 = tpu.matmul %50, %52, %cst_39 {dimension_numbers = #tpu.dot_dimension_numbers<[1], [0], [0], [1], [0, 0, 1, 1], [], []>} : vector<57x128xbf16>, vector<128x128xbf16>, vector<57x128xf32> -> vector<57x128xf32>
    %54 = arith.addf %48, %53 : vector<57x128xf32>
    %c5 = arith.constant 5 : index
    %c0_40 = arith.constant 0 : index
    %55 = vector.load %arg10[%c5, %c0_40] : memref<64x128xf32, #tpu.memory_space<vmem>>, vector<57x128xf32>
    %56 = arith.truncf %55 : vector<57x128xf32> to vector<57x128xbf16>
    %c5_41 = arith.constant 5 : index
    %c0_42 = arith.constant 0 : index
    %c0_43 = arith.constant 0 : index
    %57 = vector.load %arg3[%c5_41, %c0_42, %c0_43] : memref<8x128x128xbf16, #tpu.memory_space<vmem>>, vector<1x128x128xbf16>
    %58 = vector.shape_cast %57 : vector<1x128x128xbf16> to vector<128x128xbf16>
    %cst_44 = arith.constant dense<0.000000e+00> : vector<57x128xf32>
    %59 = tpu.matmul %56, %58, %cst_44 {dimension_numbers = #tpu.dot_dimension_numbers<[1], [0], [0], [1], [0, 0, 1, 1], [], []>} : vector<57x128xbf16>, vector<128x128xbf16>, vector<57x128xf32> -> vector<57x128xf32>
    %60 = arith.addf %54, %59 : vector<57x128xf32>
    %c6 = arith.constant 6 : index
    %c0_45 = arith.constant 0 : index
    %61 = vector.load %arg10[%c6, %c0_45] : memref<64x128xf32, #tpu.memory_space<vmem>>, vector<57x128xf32>
    %62 = arith.truncf %61 : vector<57x128xf32> to vector<57x128xbf16>
    %c6_46 = arith.constant 6 : index
    %c0_47 = arith.constant 0 : index
    %c0_48 = arith.constant 0 : index
    %63 = vector.load %arg3[%c6_46, %c0_47, %c0_48] : memref<8x128x128xbf16, #tpu.memory_space<vmem>>, vector<1x128x128xbf16>
    %64 = vector.shape_cast %63 : vector<1x128x128xbf16> to vector<128x128xbf16>
    %cst_49 = arith.constant dense<0.000000e+00> : vector<57x128xf32>
    %65 = tpu.matmul %62, %64, %cst_49 {dimension_numbers = #tpu.dot_dimension_numbers<[1], [0], [0], [1], [0, 0, 1, 1], [], []>} : vector<57x128xbf16>, vector<128x128xbf16>, vector<57x128xf32> -> vector<57x128xf32>
    %66 = arith.addf %60, %65 : vector<57x128xf32>
    %c7 = arith.constant 7 : index
    %c0_50 = arith.constant 0 : index
    %67 = vector.load %arg10[%c7, %c0_50] : memref<64x128xf32, #tpu.memory_space<vmem>>, vector<57x128xf32>
    %68 = arith.truncf %67 : vector<57x128xf32> to vector<57x128xbf16>
    %c7_51 = arith.constant 7 : index
    %c0_52 = arith.constant 0 : index
    %c0_53 = arith.constant 0 : index
    %69 = vector.load %arg3[%c7_51, %c0_52, %c0_53] : memref<8x128x128xbf16, #tpu.memory_space<vmem>>, vector<1x128x128xbf16>
    %70 = vector.shape_cast %69 : vector<1x128x128xbf16> to vector<128x128xbf16>
    %cst_54 = arith.constant dense<0.000000e+00> : vector<57x128xf32>
    %71 = tpu.matmul %68, %70, %cst_54 {dimension_numbers = #tpu.dot_dimension_numbers<[1], [0], [0], [1], [0, 0, 1, 1], [], []>} : vector<57x128xbf16>, vector<128x128xbf16>, vector<57x128xf32> -> vector<57x128xf32>
    %72 = arith.addf %66, %71 : vector<57x128xf32>
    %c0_55 = arith.constant 0 : index
    %c0_56 = arith.constant 0 : index
    %73 = vector.load %arg4[%c0_55, %c0_56] : memref<1x128xf32, #tpu.memory_space<vmem>>, vector<1x128xf32>
    %74 = vector.broadcast %73 : vector<1x128xf32> to vector<57x128xf32>
    %75 = arith.addf %72, %74 : vector<57x128xf32>
    %cst_57 = arith.constant 0.000000e+00 : f32
    %76 = vector.broadcast %cst_57 : f32 to vector<57x128xf32>
    %77 = arith.cmpf oge, %75, %76 : vector<57x128xf32>
    %cst_58 = arith.constant 1.000000e-01 : f32
    %78 = vector.broadcast %cst_58 : f32 to vector<57x128xf32>
    %79 = arith.mulf %78, %75 : vector<57x128xf32>
    %80 = arith.select %77, %75, %79 : vector<57x128xi1>, vector<57x128xf32>
    %cst_59 = arith.constant 0.000000e+00 : f32
    %81 = vector.broadcast %cst_59 : f32 to vector<64x128xf32>
    %c0_60 = arith.constant 0 : index
    %c0_61 = arith.constant 0 : index
    %82 = vector.load %arg11[%c0_60, %c0_61] : memref<64x128xf32, #tpu.memory_space<vmem>>, vector<64x128xf32>
    tpu.vector_store %arg11[%c0_60, %c0_61], %81 {strides = array<i32>} : memref<64x128xf32, #tpu.memory_space<vmem>>, vector<64x128xf32>,
    %83 = vector.extract_strided_slice %80 {offsets = [0, 0], sizes = [24, 128], strides = [1, 1]} : vector<57x128xf32> to vector<24x128xf32>
    %c1_62 = arith.constant 1 : index
    %c0_63 = arith.constant 0 : index
    %84 = vector.load %arg11[%c1_62, %c0_63] : memref<64x128xf32, #tpu.memory_space<vmem>>, vector<24x128xf32>
    tpu.vector_store %arg11[%c1_62, %c0_63], %83 {strides = array<i32>} : memref<64x128xf32, #tpu.memory_space<vmem>>, vector<24x128xf32>,
    %85 = vector.extract_strided_slice %80 {offsets = [32, 0], sizes = [24, 128], strides = [1, 1]} : vector<57x128xf32> to vector<24x128xf32>
    %c33_64 = arith.constant 33 : index
    %c0_65 = arith.constant 0 : index
    %86 = vector.load %arg11[%c33_64, %c0_65] : memref<64x128xf32, #tpu.memory_space<vmem>>, vector<24x128xf32>
    tpu.vector_store %arg11[%c33_64, %c0_65], %85 {strides = array<i32>} : memref<64x128xf32, #tpu.memory_space<vmem>>, vector<24x128xf32>,
    %c0_66 = arith.constant 0 : index
    %c0_67 = arith.constant 0 : index
    %87 = vector.load %arg11[%c0_66, %c0_67] : memref<64x128xf32, #tpu.memory_space<vmem>>, vector<57x128xf32>
    %88 = arith.truncf %87 : vector<57x128xf32> to vector<57x128xbf16>
    %c0_68 = arith.constant 0 : index
    %c0_69 = arith.constant 0 : index
    %c0_70 = arith.constant 0 : index
    %89 = vector.load %arg5[%c0_68, %c0_69, %c0_70] : memref<8x128x128xbf16, #tpu.memory_space<vmem>>, vector<1x128x128xbf16>
    %90 = vector.shape_cast %89 : vector<1x128x128xbf16> to vector<128x128xbf16>
    %cst_71 = arith.constant dense<0.000000e+00> : vector<57x128xf32>
    %91 = tpu.matmul %88, %90, %cst_71 {dimension_numbers = #tpu.dot_dimension_numbers<[1], [0], [0], [1], [0, 0, 1, 1], [], []>} : vector<57x128xbf16>, vector<128x128xbf16>, vector<57x128xf32> -> vector<57x128xf32>
    %c1_72 = arith.constant 1 : index
    %c0_73 = arith.constant 0 : index
    %92 = vector.load %arg11[%c1_72, %c0_73] : memref<64x128xf32, #tpu.memory_space<vmem>>, vector<57x128xf32>
    %93 = arith.truncf %92 : vector<57x128xf32> to vector<57x128xbf16>
    %c1_74 = arith.constant 1 : index
    %c0_75 = arith.constant 0 : index
    %c0_76 = arith.constant 0 : index
    %94 = vector.load %arg5[%c1_74, %c0_75, %c0_76] : memref<8x128x128xbf16, #tpu.memory_space<vmem>>, vector<1x128x128xbf16>
    %95 = vector.shape_cast %94 : vector<1x128x128xbf16> to vector<128x128xbf16>
    %cst_77 = arith.constant dense<0.000000e+00> : vector<57x128xf32>
    %96 = tpu.matmul %93, %95, %cst_77 {dimension_numbers = #tpu.dot_dimension_numbers<[1], [0], [0], [1], [0, 0, 1, 1], [], []>} : vector<57x128xbf16>, vector<128x128xbf16>, vector<57x128xf32> -> vector<57x128xf32>
    %97 = arith.addf %91, %96 : vector<57x128xf32>
    %c2_78 = arith.constant 2 : index
    %c0_79 = arith.constant 0 : index
    %98 = vector.load %arg11[%c2_78, %c0_79] : memref<64x128xf32, #tpu.memory_space<vmem>>, vector<57x128xf32>
    %99 = arith.truncf %98 : vector<57x128xf32> to vector<57x128xbf16>
    %c2_80 = arith.constant 2 : index
    %c0_81 = arith.constant 0 : index
    %c0_82 = arith.constant 0 : index
    %100 = vector.load %arg5[%c2_80, %c0_81, %c0_82] : memref<8x128x128xbf16, #tpu.memory_space<vmem>>, vector<1x128x128xbf16>
    %101 = vector.shape_cast %100 : vector<1x128x128xbf16> to vector<128x128xbf16>
    %cst_83 = arith.constant dense<0.000000e+00> : vector<57x128xf32>
    %102 = tpu.matmul %99, %101, %cst_83 {dimension_numbers = #tpu.dot_dimension_numbers<[1], [0], [0], [1], [0, 0, 1, 1], [], []>} : vector<57x128xbf16>, vector<128x128xbf16>, vector<57x128xf32> -> vector<57x128xf32>
    %103 = arith.addf %97, %102 : vector<57x128xf32>
    %c3_84 = arith.constant 3 : index
    %c0_85 = arith.constant 0 : index
    %104 = vector.load %arg11[%c3_84, %c0_85] : memref<64x128xf32, #tpu.memory_space<vmem>>, vector<57x128xf32>
    %105 = arith.truncf %104 : vector<57x128xf32> to vector<57x128xbf16>
    %c3_86 = arith.constant 3 : index
    %c0_87 = arith.constant 0 : index
    %c0_88 = arith.constant 0 : index
    %106 = vector.load %arg5[%c3_86, %c0_87, %c0_88] : memref<8x128x128xbf16, #tpu.memory_space<vmem>>, vector<1x128x128xbf16>
    %107 = vector.shape_cast %106 : vector<1x128x128xbf16> to vector<128x128xbf16>
    %cst_89 = arith.constant dense<0.000000e+00> : vector<57x128xf32>
    %108 = tpu.matmul %105, %107, %cst_89 {dimension_numbers = #tpu.dot_dimension_numbers<[1], [0], [0], [1], [0, 0, 1, 1], [], []>} : vector<57x128xbf16>, vector<128x128xbf16>, vector<57x128xf32> -> vector<57x128xf32>
    %109 = arith.addf %103, %108 : vector<57x128xf32>
    %c4_90 = arith.constant 4 : index
    %c0_91 = arith.constant 0 : index
    %110 = vector.load %arg11[%c4_90, %c0_91] : memref<64x128xf32, #tpu.memory_space<vmem>>, vector<57x128xf32>
    %111 = arith.truncf %110 : vector<57x128xf32> to vector<57x128xbf16>
    %c4_92 = arith.constant 4 : index
    %c0_93 = arith.constant 0 : index
    %c0_94 = arith.constant 0 : index
    %112 = vector.load %arg5[%c4_92, %c0_93, %c0_94] : memref<8x128x128xbf16, #tpu.memory_space<vmem>>, vector<1x128x128xbf16>
    %113 = vector.shape_cast %112 : vector<1x128x128xbf16> to vector<128x128xbf16>
    %cst_95 = arith.constant dense<0.000000e+00> : vector<57x128xf32>
    %114 = tpu.matmul %111, %113, %cst_95 {dimension_numbers = #tpu.dot_dimension_numbers<[1], [0], [0], [1], [0, 0, 1, 1], [], []>} : vector<57x128xbf16>, vector<128x128xbf16>, vector<57x128xf32> -> vector<57x128xf32>
    %115 = arith.addf %109, %114 : vector<57x128xf32>
    %c5_96 = arith.constant 5 : index
    %c0_97 = arith.constant 0 : index
    %116 = vector.load %arg11[%c5_96, %c0_97] : memref<64x128xf32, #tpu.memory_space<vmem>>, vector<57x128xf32>
    %117 = arith.truncf %116 : vector<57x128xf32> to vector<57x128xbf16>
    %c5_98 = arith.constant 5 : index
    %c0_99 = arith.constant 0 : index
    %c0_100 = arith.constant 0 : index
    %118 = vector.load %arg5[%c5_98, %c0_99, %c0_100] : memref<8x128x128xbf16, #tpu.memory_space<vmem>>, vector<1x128x128xbf16>
    %119 = vector.shape_cast %118 : vector<1x128x128xbf16> to vector<128x128xbf16>
    %cst_101 = arith.constant dense<0.000000e+00> : vector<57x128xf32>
    %120 = tpu.matmul %117, %119, %cst_101 {dimension_numbers = #tpu.dot_dimension_numbers<[1], [0], [0], [1], [0, 0, 1, 1], [], []>} : vector<57x128xbf16>, vector<128x128xbf16>, vector<57x128xf32> -> vector<57x128xf32>
    %121 = arith.addf %115, %120 : vector<57x128xf32>
    %c6_102 = arith.constant 6 : index
    %c0_103 = arith.constant 0 : index
    %122 = vector.load %arg11[%c6_102, %c0_103] : memref<64x128xf32, #tpu.memory_space<vmem>>, vector<57x128xf32>
    %123 = arith.truncf %122 : vector<57x128xf32> to vector<57x128xbf16>
    %c6_104 = arith.constant 6 : index
    %c0_105 = arith.constant 0 : index
    %c0_106 = arith.constant 0 : index
    %124 = vector.load %arg5[%c6_104, %c0_105, %c0_106] : memref<8x128x128xbf16, #tpu.memory_space<vmem>>, vector<1x128x128xbf16>
    %125 = vector.shape_cast %124 : vector<1x128x128xbf16> to vector<128x128xbf16>
    %cst_107 = arith.constant dense<0.000000e+00> : vector<57x128xf32>
    %126 = tpu.matmul %123, %125, %cst_107 {dimension_numbers = #tpu.dot_dimension_numbers<[1], [0], [0], [1], [0, 0, 1, 1], [], []>} : vector<57x128xbf16>, vector<128x128xbf16>, vector<57x128xf32> -> vector<57x128xf32>
    %127 = arith.addf %121, %126 : vector<57x128xf32>
    %c7_108 = arith.constant 7 : index
    %c0_109 = arith.constant 0 : index
    %128 = vector.load %arg11[%c7_108, %c0_109] : memref<64x128xf32, #tpu.memory_space<vmem>>, vector<57x128xf32>
    %129 = arith.truncf %128 : vector<57x128xf32> to vector<57x128xbf16>
    %c7_110 = arith.constant 7 : index
    %c0_111 = arith.constant 0 : index
    %c0_112 = arith.constant 0 : index
    %130 = vector.load %arg5[%c7_110, %c0_111, %c0_112] : memref<8x128x128xbf16, #tpu.memory_space<vmem>>, vector<1x128x128xbf16>
    %131 = vector.shape_cast %130 : vector<1x128x128xbf16> to vector<128x128xbf16>
    %cst_113 = arith.constant dense<0.000000e+00> : vector<57x128xf32>
    %132 = tpu.matmul %129, %131, %cst_113 {dimension_numbers = #tpu.dot_dimension_numbers<[1], [0], [0], [1], [0, 0, 1, 1], [], []>} : vector<57x128xbf16>, vector<128x128xbf16>, vector<57x128xf32> -> vector<57x128xf32>
    %133 = arith.addf %127, %132 : vector<57x128xf32>
    %c0_114 = arith.constant 0 : index
    %c0_115 = arith.constant 0 : index
    %134 = vector.load %arg6[%c0_114, %c0_115] : memref<1x128xf32, #tpu.memory_space<vmem>>, vector<1x128xf32>
    %135 = vector.broadcast %134 : vector<1x128xf32> to vector<57x128xf32>
    %136 = arith.addf %133, %135 : vector<57x128xf32>
    %cst_116 = arith.constant 0.000000e+00 : f32
    %137 = vector.broadcast %cst_116 : f32 to vector<57x128xf32>
    %138 = arith.cmpf oge, %136, %137 : vector<57x128xf32>
    %cst_117 = arith.constant 1.000000e-01 : f32
    %139 = vector.broadcast %cst_117 : f32 to vector<57x128xf32>
    %140 = arith.mulf %139, %136 : vector<57x128xf32>
    %141 = arith.select %138, %136, %140 : vector<57x128xi1>, vector<57x128xf32>
    %142 = vector.extract_strided_slice %141 {offsets = [0, 0], sizes = [24, 128], strides = [1, 1]} : vector<57x128xf32> to vector<24x128xf32>
    %c0_118 = arith.constant 0 : index
    %c0_119 = arith.constant 0 : index
    %143 = vector.load %arg7[%c0_118, %c0_119] : memref<24x128xf32, #tpu.memory_space<vmem>>, vector<24x128xf32>
    %144 = arith.mulf %142, %143 : vector<24x128xf32>
    %cst_120 = arith.constant dense<0.000000e+00> : vector<128xf32>
    %145 = vector.multi_reduction <add>, %144, %cst_120 [0] : vector<24x128xf32> to vector<128xf32>
    %146 = vector.shape_cast %145 : vector<128xf32> to vector<1x128xf32>
    %147 = vector.extract_strided_slice %141 {offsets = [32, 0], sizes = [24, 128], strides = [1, 1]} : vector<57x128xf32> to vector<24x128xf32>
    %c0_121 = arith.constant 0 : index
    %c0_122 = arith.constant 0 : index
    %148 = vector.load %arg7[%c0_121, %c0_122] : memref<24x128xf32, #tpu.memory_space<vmem>>, vector<24x128xf32>
    %149 = arith.mulf %147, %148 : vector<24x128xf32>
    %cst_123 = arith.constant dense<0.000000e+00> : vector<128xf32>
    %150 = vector.multi_reduction <add>, %149, %cst_123 [0] : vector<24x128xf32> to vector<128xf32>
    %151 = vector.shape_cast %150 : vector<128xf32> to vector<1x128xf32>
    %152 = tpu.concatenate %146, %151 in 0 : vector<1x128xf32>, vector<1x128xf32> -> vector<2x128xf32>
    %cst_124 = arith.constant dense<0.000000e+00> : vector<2xf32>
    %153 = vector.multi_reduction <add>, %152, %cst_124 [1] : vector<2x128xf32> to vector<2xf32>
    %154 = vector.shape_cast %153 : vector<2xf32> to vector<2x1xf32>
    %c0_125 = arith.constant 0 : index
    %c0_126 = arith.constant 0 : index
    %155 = vector.load %arg8[%c0_125, %c0_126] : memref<1x1xf32, #tpu.memory_space<vmem>>, vector<1x1xf32>
    %156 = vector.broadcast %155 : vector<1x1xf32> to vector<2x1xf32>
    %157 = arith.addf %154, %156 : vector<2x1xf32>
    %cst_127 = arith.constant 0.000000e+00 : f32
    %158 = vector.broadcast %cst_127 : f32 to vector<2x1xf32>
    %159 = arith.subf %158, %157 : vector<2x1xf32>
    %160 = math.exp %159 : vector<2x1xf32>
    %cst_128 = arith.constant 1.000000e+00 : f32
    %161 = vector.broadcast %cst_128 : f32 to vector<2x1xf32>
    %162 = arith.addf %161, %160 : vector<2x1xf32>
    %cst_129 = arith.constant 1.000000e+00 : f32
    %163 = vector.broadcast %cst_129 : f32 to vector<2x1xf32>
    %164 = arith.divf %163, %162 : vector<2x1xf32>
    %c0_130 = arith.constant 0 : index
    %c0_131 = arith.constant 0 : index
    %165 = vector.load %arg9[%c0_130, %c0_131] : memref<2x1xf32, #tpu.memory_space<vmem>>, vector<2x1xf32>
    tpu.vector_store %arg9[%c0_130, %c0_131], %164 {strides = array<i32>} : memref<2x1xf32, #tpu.memory_space<vmem>>, vector<2x1xf32>,
    return
  }
}

</mosaic_0001>

<llo_original>
// kernel: discriminator_forward.1
$region0: #{discriminator_forward.1}
  #allocation0 [shape = 'u32[]', space=smem, size = 0x4, offset = 0x4, fixed_abs, tag = 'smem constant byte address 0x4 - core index']
  #allocation1 [shape = 'u32[144,128]{1,0:T(1,128)}', space=vmem, size = 0x12000, scoped, tag = 'internal scratch']
  #allocation2 [shape = 'f32[64,128]{1,0:T(8,128)}', space=vmem, size = 0x8000, scoped, tag = 'scratch operand']
  #allocation3 [shape = 'f32[64,128]{1,0:T(8,128)}', space=vmem, size = 0x8000, scoped, tag = 'scratch operand']
  #allocation4 [shape = 'f32[1,1]{1,0:T(1,128)S(1)}', space=vmem, size = 0x200, scoped, tag = 'scoped memory for discriminator_forward.1']
  %s0 = inlined_call_operand.vmem [shape: bf16[256,512], index: 0, kind: input, shape index: {}]
  %s1 = inlined_call_operand.vmem [shape: bf16[512,128], index: 1, kind: input, shape index: {}]
  %s2 = inlined_call_operand.vmem [shape: f32[1,128], index: 2, kind: input, shape index: {}]
  %s3 = inlined_call_operand.vmem [shape: bf16[8,128,128], index: 3, kind: input, shape index: {}]
  %s4 = inlined_call_operand.vmem [shape: f32[1,128], index: 4, kind: input, shape index: {}]
  %s5 = inlined_call_operand.vmem [shape: bf16[8,128,128], index: 5, kind: input, shape index: {}]
  %s6 = inlined_call_operand.vmem [shape: f32[1,128], index: 6, kind: input, shape index: {}]
  %s7 = inlined_call_operand.vmem [shape: f32[24,128], index: 7, kind: input, shape index: {}]
  %s8 = inlined_call_operand.<no memory space> [shape: f32[1,1], index: 8, kind: input, shape index: {}]
  %s9 = inlined_call_operand.vmem [shape: f32[2,1], index: 9, kind: output, shape index: {}]
  %s10 = sld [smem:[#allocation0]]
  $region46: #{discriminator_forward.1} parent=0
    _
  %s12 = ssub.s32 1, %s10
  %s13 = scalar_select 0, %s12, %s10
  %v14 = vstv %s8
  %15 = vst [vmem:[#allocation4] sm:$0x1] %v14
  // Predicated region
  $region2: #{discriminator_forward.1} parent=0 // pred_check
    _
  $region3: #{discriminator_forward.1} parent=0 // pred_check_branch
    %17 = sbr.rel (0) target = $region5
  $region4: #{discriminator_forward.1} parent=0 // pred_region
    _
  $region5: #{discriminator_forward.1} parent=0 // pred_fallthru
    _
  // Predicated region
  $region6: #{discriminator_forward.1} parent=0 // pred_check
    _
  $region7: #{discriminator_forward.1} parent=0 // pred_check_branch
    %19 = sbr.rel (0) target = $region9
  $region8: #{discriminator_forward.1} parent=0 // pred_region
    _
  $region9: #{discriminator_forward.1} parent=0 // pred_fallthru
    _
  // Predicated region
  $region10: #{discriminator_forward.1} parent=0 // pred_check
    _
  $region11: #{discriminator_forward.1} parent=0 // pred_check_branch
    %21 = sbr.rel (0) target = $region13
  $region12: #{discriminator_forward.1} parent=0 // pred_region
    _
  $region13: #{discriminator_forward.1} parent=0 // pred_fallthru
    _
  // Predicated region
  $region14: #{discriminator_forward.1} parent=0 // pred_check
    _
  $region15: #{discriminator_forward.1} parent=0 // pred_check_branch
    %23 = sbr.rel (0) target = $region17
  $region16: #{discriminator_forward.1} parent=0 // pred_region
    _
  $region17: #{discriminator_forward.1} parent=0 // pred_fallthru
    _
  // Predicated region
  $region18: #{discriminator_forward.1} parent=0 // pred_check
    _
  $region19: #{discriminator_forward.1} parent=0 // pred_check_branch
    %25 = sbr.rel (0) target = $region21
  $region20: #{discriminator_forward.1} parent=0 // pred_region
    _
  $region21: #{discriminator_forward.1} parent=0 // pred_fallthru
    _
  // Predicated region
  $region22: #{discriminator_forward.1} parent=0 // pred_check
    _
  $region23: #{discriminator_forward.1} parent=0 // pred_check_branch
    %27 = sbr.rel (0) target = $region25
  $region24: #{discriminator_forward.1} parent=0 // pred_region
    _
  $region25: #{discriminator_forward.1} parent=0 // pred_fallthru
    _
  // Predicated region
  $region26: #{discriminator_forward.1} parent=0 // pred_check
    _
  $region27: #{discriminator_forward.1} parent=0 // pred_check_branch
    %29 = sbr.rel (0) target = $region29
  $region28: #{discriminator_forward.1} parent=0 // pred_region
    _
  $region29: #{discriminator_forward.1} parent=0 // pred_fallthru
    _
  // Predicated region
  $region30: #{discriminator_forward.1} parent=0 // pred_check
    _
  $region31: #{discriminator_forward.1} parent=0 // pred_check_branch
    %31 = sbr.rel (0) target = $region33
  $region32: #{discriminator_forward.1} parent=0 // pred_region
    _
  $region33: #{discriminator_forward.1} parent=0 // pred_fallthru
    _
  // Predicated region
  $region34: #{discriminator_forward.1} parent=0 // pred_check
    _
  $region35: #{discriminator_forward.1} parent=0 // pred_check_branch
    %33 = sbr.rel (0) target = $region37
  $region36: #{discriminator_forward.1} parent=0 // pred_region
    _
  $region37: #{discriminator_forward.1} parent=0 // pred_fallthru
    _
  %v35 = vld [vmem:[%s0] sm:$0xff]
  %v36 = vld [vmem:[%s0 + $0x8] sm:$0xff]
  %v37 = vld [vmem:[%s0 + $0x10] sm:$0xff]
  %v38 = vld [vmem:[%s0 + $0x18] sm:$0xff]
  %v39 = vld [vmem:[%s0 + $0x20] sm:$0xff]
  %v40 = vld [vmem:[%s0 + $0x28] sm:$0xff]
  %v41 = vld [vmem:[%s0 + $0x30] sm:$0xff]
  %v42 = vld [vmem:[%s0 + $0x38] sm:$0xff]
  %v43 = vld [vmem:[%s0 + $0x40] sm:$0xff]
  %v44 = vld [vmem:[%s0 + $0x48] sm:$0xff]
  %v45 = vld [vmem:[%s0 + $0x50] sm:$0xff]
  %v46 = vld [vmem:[%s0 + $0x58] sm:$0xff]
  %v47 = vld [vmem:[%s0 + $0x60] sm:$0xff]
  %v48 = vld [vmem:[%s0 + $0x68] sm:$0xff]
  %v49 = vld [vmem:[%s0 + $0x70] sm:$0xff]
  %v50 = vld [vmem:[%s0 + $0x78] sm:$0xff]
  %v51 = vld [vmem:[%s0 + $0x80] sm:$0xff]
  %v52 = vld [vmem:[%s0 + $0x88] sm:$0xff]
  %v53 = vld [vmem:[%s0 + $0x90] sm:$0xff]
  %v54 = vld [vmem:[%s0 + $0x98] sm:$0xff]
  %v55 = vld [vmem:[%s0 + $0xa0] sm:$0xff]
  %v56 = vld [vmem:[%s0 + $0xa8] sm:$0xff]
  %v57 = vld [vmem:[%s0 + $0xb0] sm:$0xff]
  %v58 = vld [vmem:[%s0 + $0xb8] sm:$0xff]
  %v59 = vld [vmem:[%s0 + $0xc0] sm:$0xff]
  %v60 = vld [vmem:[%s0 + $0xc8] sm:$0xff]
  %v61 = vld [vmem:[%s0 + $0xd0] sm:$0xff]
  %v62 = vld [vmem:[%s0 + $0xd8] sm:$0xff]
  %v63 = vld [vmem:[%s0 + $0xe0] sm:$0xff]
  %v64 = vld [vmem:[%s0 + $0xe8] sm:$0xff]
  %v65 = vld [vmem:[%s0 + $0xf0] sm:$0xff]
  %v66 = vld [vmem:[%s0 + $0xf8] sm:$0xff]
  %v67 = vld [vmem:[%s0 + $0x100] sm:$0xff]
  %v68 = vld [vmem:[%s0 + $0x108] sm:$0xff]
  %v69 = vld [vmem:[%s0 + $0x110] sm:$0xff]
  %v70 = vld [vmem:[%s0 + $0x118] sm:$0xff]
  %v71 = vld [vmem:[%s0 + $0x120] sm:$0xff]
  %v72 = vld [vmem:[%s0 + $0x128] sm:$0xff]
  %v73 = vld [vmem:[%s0 + $0x130] sm:$0xff]
  %v74 = vld [vmem:[%s0 + $0x138] sm:$0xff]
  %v75 = vld [vmem:[%s0 + $0x140] sm:$0xff]
  %v76 = vld [vmem:[%s0 + $0x148] sm:$0xff]
  %v77 = vld [vmem:[%s0 + $0x150] sm:$0xff]
  %v78 = vld [vmem:[%s0 + $0x158] sm:$0xff]
  %v79 = vld [vmem:[%s0 + $0x160] sm:$0xff]
  %v80 = vld [vmem:[%s0 + $0x168] sm:$0xff]
  %v81 = vld [vmem:[%s0 + $0x170] sm:$0xff]
  %v82 = vld [vmem:[%s0 + $0x178] sm:$0xff]
  %v83 = vld [vmem:[%s0 + $0x180] sm:$0xff]
  %v84 = vld [vmem:[%s0 + $0x188] sm:$0xff]
  %v85 = vld [vmem:[%s0 + $0x190] sm:$0xff]
  %v86 = vld [vmem:[%s0 + $0x198] sm:$0xff]
  %v87 = vld [vmem:[%s0 + $0x1a0] sm:$0xff]
  %v88 = vld [vmem:[%s0 + $0x1a8] sm:$0xff]
  %v89 = vld [vmem:[%s0 + $0x1b0] sm:$0xff]
  %v90 = vld [vmem:[%s0 + $0x1b8] sm:$0xff]
  %v91 = vld [vmem:[%s0 + $0x1c0] sm:$0xff]
  %v92 = vld [vmem:[%s0 + $0x1c8] sm:$0xff]
  %v93 = vld [vmem:[%s0 + $0x1d0] sm:$0xff]
  %v94 = vld [vmem:[%s0 + $0x1d8] sm:$0xff]
  %v95 = vld [vmem:[%s0 + $0x1e0] sm:$0xff]
  %v96 = vld [vmem:[%s0 + $0x1e8] sm:$0xff]
  %v97 = vld [vmem:[%s0 + $0x1f0] sm:$0xff]
  %v98 = vld [vmem:[%s0 + $0x1f8] sm:$0xff]
  %v99 = vld [vmem:[%s1] sm:$0xf]
  %v100 = vld [vmem:[%s1 + $0x4] sm:$0xf]
  %v101 = vld [vmem:[%s1 + $0x8] sm:$0xf]
  %v102 = vld [vmem:[%s1 + $0xc] sm:$0xf]
  %v103 = vld [vmem:[%s1 + $0x10] sm:$0xf]
  %v104 = vld [vmem:[%s1 + $0x14] sm:$0xf]
  %v105 = vld [vmem:[%s1 + $0x18] sm:$0xf]
  %v106 = vld [vmem:[%s1 + $0x1c] sm:$0xf]
  %v107 = vld [vmem:[%s1 + $0x20] sm:$0xf]
  %v108 = vld [vmem:[%s1 + $0x24] sm:$0xf]
  %v109 = vld [vmem:[%s1 + $0x28] sm:$0xf]
  %v110 = vld [vmem:[%s1 + $0x2c] sm:$0xf]
  %v111 = vld [vmem:[%s1 + $0x30] sm:$0xf]
  %v112 = vld [vmem:[%s1 + $0x34] sm:$0xf]
  %v113 = vld [vmem:[%s1 + $0x38] sm:$0xf]
  %v114 = vld [vmem:[%s1 + $0x3c] sm:$0xf]
  %v115 = vld [vmem:[%s1 + $0x40] sm:$0xf]
  %v116 = vld [vmem:[%s1 + $0x44] sm:$0xf]
  %v117 = vld [vmem:[%s1 + $0x48] sm:$0xf]
  %v118 = vld [vmem:[%s1 + $0x4c] sm:$0xf]
  %v119 = vld [vmem:[%s1 + $0x50] sm:$0xf]
  %v120 = vld [vmem:[%s1 + $0x54] sm:$0xf]
  %v121 = vld [vmem:[%s1 + $0x58] sm:$0xf]
  %v122 = vld [vmem:[%s1 + $0x5c] sm:$0xf]
  %v123 = vld [vmem:[%s1 + $0x60] sm:$0xf]
  %v124 = vld [vmem:[%s1 + $0x64] sm:$0xf]
  %v125 = vld [vmem:[%s1 + $0x68] sm:$0xf]
  %v126 = vld [vmem:[%s1 + $0x6c] sm:$0xf]
  %v127 = vld [vmem:[%s1 + $0x70] sm:$0xf]
  %v128 = vld [vmem:[%s1 + $0x74] sm:$0xf]
  %v129 = vld [vmem:[%s1 + $0x78] sm:$0xf]
  %v130 = vld [vmem:[%s1 + $0x7c] sm:$0xf]
  %v131 = vld [vmem:[%s1 + $0x80] sm:$0xf]
  %v132 = vld [vmem:[%s1 + $0x84] sm:$0xf]
  %v133 = vld [vmem:[%s1 + $0x88] sm:$0xf]
  %v134 = vld [vmem:[%s1 + $0x8c] sm:$0xf]
  %v135 = vld [vmem:[%s1 + $0x90] sm:$0xf]
  %v136 = vld [vmem:[%s1 + $0x94] sm:$0xf]
  %v137 = vld [vmem:[%s1 + $0x98] sm:$0xf]
  %v138 = vld [vmem:[%s1 + $0x9c] sm:$0xf]
  %v139 = vld [vmem:[%s1 + $0xa0] sm:$0xf]
  %v140 = vld [vmem:[%s1 + $0xa4] sm:$0xf]
  %v141 = vld [vmem:[%s1 + $0xa8] sm:$0xf]
  %v142 = vld [vmem:[%s1 + $0xac] sm:$0xf]
  %v143 = vld [vmem:[%s1 + $0xb0] sm:$0xf]
  %v144 = vld [vmem:[%s1 + $0xb4] sm:$0xf]
  %v145 = vld [vmem:[%s1 + $0xb8] sm:$0xf]
  %v146 = vld [vmem:[%s1 + $0xbc] sm:$0xf]
  %v147 = vld [vmem:[%s1 + $0xc0] sm:$0xf]
  %v148 = vld [vmem:[%s1 + $0xc4] sm:$0xf]
  %v149 = vld [vmem:[%s1 + $0xc8] sm:$0xf]
  %v150 = vld [vmem:[%s1 + $0xcc] sm:$0xf]
  %v151 = vld [vmem:[%s1 + $0xd0] sm:$0xf]
  %v152 = vld [vmem:[%s1 + $0xd4] sm:$0xf]
  %v153 = vld [vmem:[%s1 + $0xd8] sm:$0xf]
  %v154 = vld [vmem:[%s1 + $0xdc] sm:$0xf]
  %v155 = vld [vmem:[%s1 + $0xe0] sm:$0xf]
  %v156 = vld [vmem:[%s1 + $0xe4] sm:$0xf]
  %v157 = vld [vmem:[%s1 + $0xe8] sm:$0xf]
  %v158 = vld [vmem:[%s1 + $0xec] sm:$0xf]
  %v159 = vld [vmem:[%s1 + $0xf0] sm:$0xf]
  %v160 = vld [vmem:[%s1 + $0xf4] sm:$0xf]
  %v161 = vld [vmem:[%s1 + $0xf8] sm:$0xf]
  %v162 = vld [vmem:[%s1 + $0xfc] sm:$0xf]
  %v163 = vld [vmem:[%s2] sm:$0x1]
  %v165 = vlaneseq
  %v166 = vshrl.u32 %v165, 7
  %v167 = vsub.s32 0, %v166
  %v168 = vrot.slane %v163, %v167
  %v234 = vunpack.c.l.b16 %v35
  %v235 = vunpack.c.h.b16 %v35
  %v236 = vunpack.c.l.b16 %v36
  %v237 = vunpack.c.h.b16 %v36
  %v238 = vunpack.c.l.b16 %v37
  %v239 = vunpack.c.h.b16 %v37
  %v240 = vunpack.c.l.b16 %v38
  %v241 = vunpack.c.h.b16 %v38
  %v242 = vunpack.c.l.b16 %v39
  %v243 = vunpack.c.h.b16 %v39
  %v244 = vunpack.c.l.b16 %v40
  %v245 = vunpack.c.h.b16 %v40
  %v246 = vunpack.c.l.b16 %v41
  %v247 = vunpack.c.h.b16 %v41
  %v248 = vunpack.c.l.b16 %v42
  %v249 = vunpack.c.h.b16 %v42
  %v250 = vunpack.c.l.b16 %v43
  %v251 = vunpack.c.h.b16 %v43
  %v252 = vunpack.c.l.b16 %v44
  %v253 = vunpack.c.h.b16 %v44
  %v254 = vunpack.c.l.b16 %v45
  %v255 = vunpack.c.h.b16 %v45
  %v256 = vunpack.c.l.b16 %v46
  %v257 = vunpack.c.h.b16 %v46
  %v258 = vunpack.c.l.b16 %v47
  %v259 = vunpack.c.h.b16 %v47
  %v260 = vunpack.c.l.b16 %v48
  %v261 = vunpack.c.h.b16 %v48
  %v262 = vunpack.c.l.b16 %v49
  %v263 = vunpack.c.h.b16 %v49
  %v264 = vunpack.c.l.b16 %v50
  %v265 = vunpack.c.h.b16 %v50
  %v266 = vunpack.c.l.b16 %v51
  %v267 = vunpack.c.h.b16 %v51
  %v268 = vunpack.c.l.b16 %v52
  %v269 = vunpack.c.h.b16 %v52
  %v270 = vunpack.c.l.b16 %v53
  %v271 = vunpack.c.h.b16 %v53
  %v272 = vunpack.c.l.b16 %v54
  %v273 = vunpack.c.h.b16 %v54
  %v274 = vunpack.c.l.b16 %v55
  %v275 = vunpack.c.h.b16 %v55
  %v276 = vunpack.c.l.b16 %v56
  %v277 = vunpack.c.h.b16 %v56
  %v278 = vunpack.c.l.b16 %v57
  %v279 = vunpack.c.h.b16 %v57
  %v280 = vunpack.c.l.b16 %v58
  %v281 = vunpack.c.h.b16 %v58
  %v282 = vunpack.c.l.b16 %v59
  %v283 = vunpack.c.h.b16 %v59
  %v284 = vunpack.c.l.b16 %v60
  %v285 = vunpack.c.h.b16 %v60
  %v286 = vunpack.c.l.b16 %v61
  %v287 = vunpack.c.h.b16 %v61
  %v288 = vunpack.c.l.b16 %v62
  %v289 = vunpack.c.h.b16 %v62
  %v290 = vunpack.c.l.b16 %v63
  %v291 = vunpack.c.h.b16 %v63
  %v292 = vunpack.c.l.b16 %v64
  %v293 = vunpack.c.h.b16 %v64
  %v294 = vunpack.c.l.b16 %v65
  %v295 = vunpack.c.h.b16 %v65
  %v296 = vunpack.c.l.b16 %v66
  %v297 = vunpack.c.h.b16 %v66
  %v298 = vunpack.c.l.b16 %v67
  %v299 = vunpack.c.h.b16 %v67
  %v300 = vunpack.c.l.b16 %v68
  %v301 = vunpack.c.h.b16 %v68
  %v302 = vunpack.c.l.b16 %v69
  %v303 = vunpack.c.h.b16 %v69
  %v304 = vunpack.c.l.b16 %v70
  %v305 = vunpack.c.h.b16 %v70
  %v306 = vunpack.c.l.b16 %v71
  %v307 = vunpack.c.h.b16 %v71
  %v308 = vunpack.c.l.b16 %v72
  %v309 = vunpack.c.h.b16 %v72
  %v310 = vunpack.c.l.b16 %v73
  %v311 = vunpack.c.h.b16 %v73
  %v312 = vunpack.c.l.b16 %v74
  %v313 = vunpack.c.h.b16 %v74
  %v314 = vunpack.c.l.b16 %v75
  %v315 = vunpack.c.h.b16 %v75
  %v316 = vunpack.c.l.b16 %v76
  %v317 = vunpack.c.h.b16 %v76
  %v318 = vunpack.c.l.b16 %v77
  %v319 = vunpack.c.h.b16 %v77
  %v320 = vunpack.c.l.b16 %v78
  %v321 = vunpack.c.h.b16 %v78
  %v322 = vunpack.c.l.b16 %v79
  %v323 = vunpack.c.h.b16 %v79
  %v324 = vunpack.c.l.b16 %v80
  %v325 = vunpack.c.h.b16 %v80
  %v326 = vunpack.c.l.b16 %v81
  %v327 = vunpack.c.h.b16 %v81
  %v328 = vunpack.c.l.b16 %v82
  %v329 = vunpack.c.h.b16 %v82
  %v330 = vunpack.c.l.b16 %v83
  %v331 = vunpack.c.h.b16 %v83
  %v332 = vunpack.c.l.b16 %v84
  %v333 = vunpack.c.h.b16 %v84
  %v334 = vunpack.c.l.b16 %v85
  %v335 = vunpack.c.h.b16 %v85
  %v336 = vunpack.c.l.b16 %v86
  %v337 = vunpack.c.h.b16 %v86
  %v338 = vunpack.c.l.b16 %v87
  %v339 = vunpack.c.h.b16 %v87
  %v340 = vunpack.c.l.b16 %v88
  %v341 = vunpack.c.h.b16 %v88
  %v342 = vunpack.c.l.b16 %v89
  %v343 = vunpack.c.h.b16 %v89
  %v344 = vunpack.c.l.b16 %v90
  %v345 = vunpack.c.h.b16 %v90
  %v346 = vunpack.c.l.b16 %v91
  %v347 = vunpack.c.h.b16 %v91
  %v348 = vunpack.c.l.b16 %v92
  %v349 = vunpack.c.h.b16 %v92
  %v350 = vunpack.c.l.b16 %v93
  %v351 = vunpack.c.h.b16 %v93
  %v352 = vunpack.c.l.b16 %v94
  %v353 = vunpack.c.h.b16 %v94
  %v354 = vunpack.c.l.b16 %v95
  %v355 = vunpack.c.h.b16 %v95
  %v356 = vunpack.c.l.b16 %v96
  %v357 = vunpack.c.h.b16 %v96
  %v358 = vunpack.c.l.b16 %v97
  %v359 = vunpack.c.h.b16 %v97
  %v360 = vunpack.c.l.b16 %v98
  %v361 = vunpack.c.h.b16 %v98
  %v362 = vpack.c.b16 %v238, %v234
  %v363 = vpack.c.b16 %v239, %v235
  %v364 = vpack.c.b16 %v240, %v236
  %v365 = vpack.c.b16 %v241, %v237
  %v366 = vpack.c.b16 %v246, %v242
  %v367 = vpack.c.b16 %v247, %v243
  %v368 = vpack.c.b16 %v248, %v244
  %v369 = vpack.c.b16 %v249, %v245
  %v370 = vpack.c.b16 %v254, %v250
  %v371 = vpack.c.b16 %v255, %v251
  %v372 = vpack.c.b16 %v256, %v252
  %v373 = vpack.c.b16 %v257, %v253
  %v374 = vpack.c.b16 %v262, %v258
  %v375 = vpack.c.b16 %v263, %v259
  %v376 = vpack.c.b16 %v264, %v260
  %v377 = vpack.c.b16 %v265, %v261
  %v378 = vpack.c.b16 %v270, %v266
  %v379 = vpack.c.b16 %v271, %v267
  %v380 = vpack.c.b16 %v272, %v268
  %v381 = vpack.c.b16 %v273, %v269
  %v382 = vpack.c.b16 %v278, %v274
  %v383 = vpack.c.b16 %v279, %v275
  %v384 = vpack.c.b16 %v280, %v276
  %v385 = vpack.c.b16 %v281, %v277
  %v386 = vpack.c.b16 %v286, %v282
  %v387 = vpack.c.b16 %v287, %v283
  %v388 = vpack.c.b16 %v288, %v284
  %v389 = vpack.c.b16 %v289, %v285
  %v390 = vpack.c.b16 %v294, %v290
  %v391 = vpack.c.b16 %v295, %v291
  %v392 = vpack.c.b16 %v296, %v292
  %v393 = vpack.c.b16 %v297, %v293
  %v394 = vpack.c.b16 %v302, %v298
  %v395 = vpack.c.b16 %v303, %v299
  %v396 = vpack.c.b16 %v304, %v300
  %v397 = vpack.c.b16 %v305, %v301
  %v398 = vpack.c.b16 %v310, %v306
  %v399 = vpack.c.b16 %v311, %v307
  %v400 = vpack.c.b16 %v312, %v308
  %v401 = vpack.c.b16 %v313, %v309
  %v402 = vpack.c.b16 %v318, %v314
  %v403 = vpack.c.b16 %v319, %v315
  %v404 = vpack.c.b16 %v320, %v316
  %v405 = vpack.c.b16 %v321, %v317
  %v406 = vpack.c.b16 %v326, %v322
  %v407 = vpack.c.b16 %v327, %v323
  %v408 = vpack.c.b16 %v328, %v324
  %v409 = vpack.c.b16 %v329, %v325
  %v410 = vpack.c.b16 %v334, %v330
  %v411 = vpack.c.b16 %v335, %v331
  %v412 = vpack.c.b16 %v336, %v332
  %v413 = vpack.c.b16 %v337, %v333
  %v414 = vpack.c.b16 %v342, %v338
  %v415 = vpack.c.b16 %v343, %v339
  %v416 = vpack.c.b16 %v344, %v340
  %v417 = vpack.c.b16 %v345, %v341
  %v418 = vpack.c.b16 %v350, %v346
  %v419 = vpack.c.b16 %v351, %v347
  %v420 = vpack.c.b16 %v352, %v348
  %v421 = vpack.c.b16 %v353, %v349
  %v422 = vpack.c.b16 %v358, %v354
  %v423 = vpack.c.b16 %v359, %v355
  %v424 = vpack.c.b16 %v360, %v356
  %v425 = vpack.c.b16 %v361, %v357
  %v554 = vunpack.c.l.b16 %v99
  %v555 = vunpack.c.l.b16 %v100
  %v556 = vunpack.c.l.b16 %v101
  %v557 = vunpack.c.l.b16 %v102
  %v558 = vunpack.c.l.b16 %v103
  %v559 = vunpack.c.l.b16 %v104
  %v560 = vunpack.c.l.b16 %v105
  %v561 = vunpack.c.l.b16 %v106
  %v562 = vunpack.c.l.b16 %v107
  %v563 = vunpack.c.l.b16 %v108
  %v564 = vunpack.c.l.b16 %v109
  %v565 = vunpack.c.l.b16 %v110
  %v566 = vunpack.c.l.b16 %v111
  %v567 = vunpack.c.l.b16 %v112
  %v568 = vunpack.c.l.b16 %v113
  %v569 = vunpack.c.l.b16 %v114
  %v570 = vunpack.c.l.b16 %v115
  %v571 = vunpack.c.l.b16 %v116
  %v572 = vunpack.c.l.b16 %v117
  %v573 = vunpack.c.l.b16 %v118
  %v574 = vunpack.c.l.b16 %v119
  %v575 = vunpack.c.l.b16 %v120
  %v576 = vunpack.c.l.b16 %v121
  %v577 = vunpack.c.l.b16 %v122
  %v578 = vunpack.c.l.b16 %v123
  %v579 = vunpack.c.l.b16 %v124
  %v580 = vunpack.c.l.b16 %v125
  %v581 = vunpack.c.l.b16 %v126
  %v582 = vunpack.c.l.b16 %v127
  %v583 = vunpack.c.l.b16 %v128
  %v584 = vunpack.c.l.b16 %v129
  %v585 = vunpack.c.l.b16 %v130
  %v586 = vunpack.c.l.b16 %v131
  %v587 = vunpack.c.l.b16 %v132
  %v588 = vunpack.c.l.b16 %v133
  %v589 = vunpack.c.l.b16 %v134
  %v590 = vunpack.c.l.b16 %v135
  %v591 = vunpack.c.l.b16 %v136
  %v592 = vunpack.c.l.b16 %v137
  %v593 = vunpack.c.l.b16 %v138
  %v594 = vunpack.c.l.b16 %v139
  %v595 = vunpack.c.l.b16 %v140
  %v596 = vunpack.c.l.b16 %v141
  %v597 = vunpack.c.l.b16 %v142
  %v598 = vunpack.c.l.b16 %v143
  %v599 = vunpack.c.l.b16 %v144
  %v600 = vunpack.c.l.b16 %v145
  %v601 = vunpack.c.l.b16 %v146
  %v602 = vunpack.c.l.b16 %v147
  %v603 = vunpack.c.l.b16 %v148
  %v604 = vunpack.c.l.b16 %v149
  %v605 = vunpack.c.l.b16 %v150
  %v606 = vunpack.c.l.b16 %v151
  %v607 = vunpack.c.l.b16 %v152
  %v608 = vunpack.c.l.b16 %v153
  %v609 = vunpack.c.l.b16 %v154
  %v610 = vunpack.c.l.b16 %v155
  %v611 = vunpack.c.l.b16 %v156
  %v612 = vunpack.c.l.b16 %v157
  %v613 = vunpack.c.l.b16 %v158
  %v614 = vunpack.c.l.b16 %v159
  %v615 = vunpack.c.l.b16 %v160
  %v616 = vunpack.c.l.b16 %v161
  %v617 = vunpack.c.l.b16 %v162
  %v618 = vpack.c.b16 %v555, %v554
  %v619 = vpack.c.b16 %v557, %v556
  %v620 = vpack.c.b16 %v559, %v558
  %v621 = vpack.c.b16 %v561, %v560
  %v622 = vpack.c.b16 %v563, %v562
  %v623 = vpack.c.b16 %v565, %v564
  %v624 = vpack.c.b16 %v567, %v566
  %v625 = vpack.c.b16 %v569, %v568
  %v626 = vpack.c.b16 %v571, %v570
  %v627 = vpack.c.b16 %v573, %v572
  %v628 = vpack.c.b16 %v575, %v574
  %v629 = vpack.c.b16 %v577, %v576
  %v630 = vpack.c.b16 %v579, %v578
  %v631 = vpack.c.b16 %v581, %v580
  %v632 = vpack.c.b16 %v583, %v582
  %v633 = vpack.c.b16 %v585, %v584
  %v634 = vpack.c.b16 %v587, %v586
  %v635 = vpack.c.b16 %v589, %v588
  %v636 = vpack.c.b16 %v591, %v590
  %v637 = vpack.c.b16 %v593, %v592
  %v638 = vpack.c.b16 %v595, %v594
  %v639 = vpack.c.b16 %v597, %v596
  %v640 = vpack.c.b16 %v599, %v598
  %v641 = vpack.c.b16 %v601, %v600
  %v642 = vpack.c.b16 %v603, %v602
  %v643 = vpack.c.b16 %v605, %v604
  %v644 = vpack.c.b16 %v607, %v606
  %v645 = vpack.c.b16 %v609, %v608
  %v646 = vpack.c.b16 %v611, %v610
  %v647 = vpack.c.b16 %v613, %v612
  %v648 = vpack.c.b16 %v615, %v614
  %v649 = vpack.c.b16 %v617, %v616
  %682 = vmatprep.subr.bf16.mxu0 0
  %683 = vmatpush1.bf16.msra.mxu0 %v618
  %684 = vmatprep.subr.bf16.mxu0 0
  %685 = vmatpush1.bf16.msra.mxu0 %v619
  %686 = vmatprep.subr.bf16.mxu0 0
  %687 = vmatpush1.bf16.msra.mxu0 %v620
  %688 = vmatprep.subr.bf16.mxu0 0
  %689 = vmatpush1.bf16.msra.mxu0 %v621
  %690 = vmatprep.subr.bf16.mxu0 0
  %691 = vmatpush1.bf16.msra.mxu0 %v622
  %692 = vmatprep.subr.bf16.mxu0 0
  %693 = vmatpush1.bf16.msra.mxu0 %v623
  %694 = vmatprep.subr.bf16.mxu0 0
  %695 = vmatpush1.bf16.msra.mxu0 %v624
  %696 = vmatprep.subr.bf16.mxu0 0
  %697 = vmatpush1.bf16.msra.mxu0 %v625
  %698 = vmatprep.subr.bf16.mxu0 0
  %699 = vmatpush1.bf16.msra.mxu0 %v626
  %700 = vmatprep.subr.bf16.mxu0 0
  %701 = vmatpush1.bf16.msra.mxu0 %v627
  %702 = vmatprep.subr.bf16.mxu0 0
  %703 = vmatpush1.bf16.msra.mxu0 %v628
  %704 = vmatprep.subr.bf16.mxu0 0
  %705 = vmatpush1.bf16.msra.mxu0 %v629
  %706 = vmatprep.subr.bf16.mxu0 0
  %707 = vmatpush1.bf16.msra.mxu0 %v630
  %708 = vmatprep.subr.bf16.mxu0 0
  %709 = vmatpush1.bf16.msra.mxu0 %v631
  %710 = vmatprep.subr.bf16.mxu0 0
  %711 = vmatpush1.bf16.msra.mxu0 %v632
  %712 = vmatprep.subr.bf16.mxu0 0
  %713 = vmatpush1.bf16.msra.mxu0 %v633
  %714 = vmatprep.mubr.bf16.mxu0 %v363
  %715 = vmatmul.mubr.bf16.gmra.mrb[0].mxu0 %v362
  %v716 = vpop.f32.mrb[0].mxu0
  %v717 = vadd.f32 %v168, %v716
  %v718 = vpop.f32.mrb[0].mxu0
  %v719 = vpop.f32.mrb[0].mxu0
  %v720 = vadd.f32 %v168, %v719
  %v721 = vpop.f32.mrb[0].mxu0
  %722 = vmatprep.mubr.bf16.mxu0 %v367
  %723 = vmatmul.mubr.bf16.gmra.mrb[0].mxu0 %v366
  %v724 = vpop.f32.mrb[0].mxu0
  %v725 = vadd.f32 %v168, %v724
  %v726 = vpop.f32.mrb[0].mxu0
  %v727 = vpop.f32.mrb[0].mxu0
  %v728 = vadd.f32 %v168, %v727
  %v729 = vpop.f32.mrb[0].mxu0
  %730 = vmatprep.mubr.bf16.mxu0 %v371
  %731 = vmatmul.mubr.bf16.gmra.mrb[0].mxu0 %v370
  %v732 = vpop.f32.mrb[0].mxu0
  %v733 = vadd.f32 %v168, %v732
  %v734 = vpop.f32.mrb[0].mxu0
  %v735 = vpop.f32.mrb[0].mxu0
  %v736 = vadd.f32 %v168, %v735
  %v737 = vpop.f32.mrb[0].mxu0
  %738 = vmatprep.mubr.bf16.mxu0 %v375
  %739 = vmatmul.mubr.bf16.gmra.mrb[0].mxu0 %v374
  %v740 = vpop.f32.mrb[0].mxu0
  %v741 = vadd.f32 %v168, %v740
  %v742 = vpop.f32.mrb[0].mxu0
  %v743 = vpop.f32.mrb[0].mxu0
  %v744 = vadd.f32 %v168, %v743
  %v745 = vpop.f32.mrb[0].mxu0
  %746 = vmatprep.mubr.bf16.mxu0 %v379
  %747 = vmatmul.mubr.bf16.gmra.mrb[0].mxu0 %v378
  %v748 = vpop.f32.mrb[0].mxu0
  %v749 = vadd.f32 %v168, %v748
  %v750 = vpop.f32.mrb[0].mxu0
  %v751 = vpop.f32.mrb[0].mxu0
  %v752 = vadd.f32 %v168, %v751
  %v753 = vpop.f32.mrb[0].mxu0
  %754 = vmatprep.mubr.bf16.mxu0 %v383
  %755 = vmatmul.mubr.bf16.gmra.mrb[0].mxu0 %v382
  %v756 = vpop.f32.mrb[0].mxu0
  %v757 = vadd.f32 %v168, %v756
  %v758 = vpop.f32.mrb[0].mxu0
  %v759 = vpop.f32.mrb[0].mxu0
  %v760 = vadd.f32 %v168, %v759
  %v761 = vpop.f32.mrb[0].mxu0
  %762 = vmatprep.mubr.bf16.mxu0 %v387
  %763 = vmatmul.mubr.bf16.gmra.mrb[0].mxu0 %v386
  %v764 = vpop.f32.mrb[0].mxu0
  %v765 = vadd.f32 %v168, %v764
  %v766 = vpop.f32.mrb[0].mxu0
  %v767 = vpop.f32.mrb[0].mxu0
  %v768 = vadd.f32 %v168, %v767
  %v769 = vpop.f32.mrb[0].mxu0
  %770 = vmatprep.mubr.bf16.mxu0 %v391
  %771 = vmatmul.mubr.bf16.gmra.mrb[0].mxu0 %v390
  %v772 = vpop.f32.mrb[0].mxu0
  %v773 = vadd.f32 %v168, %v772
  %v774 = vpop.f32.mrb[0].mxu0
  %v775 = vpop.f32.mrb[0].mxu0
  %v776 = vadd.f32 %v168, %v775
  %v777 = vpop.f32.mrb[0].mxu0
  %778 = vmatprep.mubr.bf16.mxu0 %v395
  %779 = vmatmul.mubr.bf16.gmra.mrb[0].mxu0 %v394
  %v780 = vpop.f32.mrb[0].mxu0
  %v781 = vadd.f32 %v168, %v780
  %v782 = vpop.f32.mrb[0].mxu0
  %v783 = vpop.f32.mrb[0].mxu0
  %v784 = vadd.f32 %v168, %v783
  %v785 = vpop.f32.mrb[0].mxu0
  %786 = vmatprep.mubr.bf16.mxu0 %v399
  %787 = vmatmul.mubr.bf16.gmra.mrb[0].mxu0 %v398
  %v788 = vpop.f32.mrb[0].mxu0
  %v789 = vadd.f32 %v168, %v788
  %v790 = vpop.f32.mrb[0].mxu0
  %v791 = vpop.f32.mrb[0].mxu0
  %v792 = vadd.f32 %v168, %v791
  %v793 = vpop.f32.mrb[0].mxu0
  %794 = vmatprep.mubr.bf16.mxu0 %v403
  %795 = vmatmul.mubr.bf16.gmra.mrb[0].mxu0 %v402
  %v796 = vpop.f32.mrb[0].mxu0
  %v797 = vadd.f32 %v168, %v796
  %v798 = vpop.f32.mrb[0].mxu0
  %v799 = vpop.f32.mrb[0].mxu0
  %v800 = vadd.f32 %v168, %v799
  %v801 = vpop.f32.mrb[0].mxu0
  %802 = vmatprep.mubr.bf16.mxu0 %v407
  %803 = vmatmul.mubr.bf16.gmra.mrb[0].mxu0 %v406
  %v804 = vpop.f32.mrb[0].mxu0
  %v805 = vadd.f32 %v168, %v804
  %v806 = vpop.f32.mrb[0].mxu0
  %v807 = vpop.f32.mrb[0].mxu0
  %v808 = vadd.f32 %v168, %v807
  %v809 = vpop.f32.mrb[0].mxu0
  %810 = vmatprep.mubr.bf16.mxu0 %v411
  %811 = vmatmul.mubr.bf16.gmra.mrb[0].mxu0 %v410
  %v812 = vpop.f32.mrb[0].mxu0
  %v813 = vadd.f32 %v168, %v812
  %v814 = vpop.f32.mrb[0].mxu0
  %v815 = vpop.f32.mrb[0].mxu0
  %v816 = vadd.f32 %v168, %v815
  %v817 = vpop.f32.mrb[0].mxu0
  %818 = vmatprep.mubr.bf16.mxu0 %v415
  %819 = vmatmul.mubr.bf16.gmra.mrb[0].mxu0 %v414
  %v820 = vpop.f32.mrb[0].mxu0
  %v821 = vadd.f32 %v168, %v820
  %v822 = vpop.f32.mrb[0].mxu0
  %v823 = vpop.f32.mrb[0].mxu0
  %v824 = vadd.f32 %v168, %v823
  %v825 = vpop.f32.mrb[0].mxu0
  %826 = vmatprep.mubr.bf16.mxu0 %v419
  %827 = vmatmul.mubr.bf16.gmra.mrb[0].mxu0 %v418
  %v828 = vpop.f32.mrb[0].mxu0
  %v829 = vadd.f32 %v168, %v828
  %v830 = vpop.f32.mrb[0].mxu0
  %v831 = vpop.f32.mrb[0].mxu0
  %v832 = vadd.f32 %v168, %v831
  %v833 = vpop.f32.mrb[0].mxu0
  %834 = vmatprep.mubr.bf16.mxu0 %v423
  %835 = vmatmul.mubr.bf16.gmra.mrb[0].mxu0 %v422
  %v836 = vpop.f32.mrb[0].mxu0
  %v837 = vadd.f32 %v168, %v836
  %v838 = vpop.f32.mrb[0].mxu0
  %v839 = vpop.f32.mrb[0].mxu0
  %v840 = vadd.f32 %v168, %v839
  %v841 = vpop.f32.mrb[0].mxu0
  %842 = vdwg.mxu0
  %843 = vmatprep.subr.bf16.mxu0 0
  %844 = vmatpush1.bf16.msra.mxu0 %v634
  %845 = vmatprep.subr.bf16.mxu0 0
  %846 = vmatpush1.bf16.msra.mxu0 %v635
  %847 = vmatprep.subr.bf16.mxu0 0
  %848 = vmatpush1.bf16.msra.mxu0 %v636
  %849 = vmatprep.subr.bf16.mxu0 0
  %850 = vmatpush1.bf16.msra.mxu0 %v637
  %851 = vmatprep.subr.bf16.mxu0 0
  %852 = vmatpush1.bf16.msra.mxu0 %v638
  %853 = vmatprep.subr.bf16.mxu0 0
  %854 = vmatpush1.bf16.msra.mxu0 %v639
  %855 = vmatprep.subr.bf16.mxu0 0
  %856 = vmatpush1.bf16.msra.mxu0 %v640
  %857 = vmatprep.subr.bf16.mxu0 0
  %858 = vmatpush1.bf16.msra.mxu0 %v641
  %859 = vmatprep.subr.bf16.mxu0 0
  %860 = vmatpush1.bf16.msra.mxu0 %v642
  %861 = vmatprep.subr.bf16.mxu0 0
  %862 = vmatpush1.bf16.msra.mxu0 %v643
  %863 = vmatprep.subr.bf16.mxu0 0
  %864 = vmatpush1.bf16.msra.mxu0 %v644
  %865 = vmatprep.subr.bf16.mxu0 0
  %866 = vmatpush1.bf16.msra.mxu0 %v645
  %867 = vmatprep.subr.bf16.mxu0 0
  %868 = vmatpush1.bf16.msra.mxu0 %v646
  %869 = vmatprep.subr.bf16.mxu0 0
  %870 = vmatpush1.bf16.msra.mxu0 %v647
  %871 = vmatprep.subr.bf16.mxu0 0
  %872 = vmatpush1.bf16.msra.mxu0 %v648
  %873 = vmatprep.subr.bf16.mxu0 0
  %874 = vmatpush1.bf16.msra.mxu0 %v649
  %875 = vmatprep.mubr.bf16.mxu0 %v365
  %876 = vmatmul.mubr.bf16.gmra.mrb[0].mxu0 %v364
  %v877 = vpop.f32.mrb[0].mxu0
  %v878 = vadd.f32 %v717, %v877
  %v879 = vpop.f32.mrb[0].mxu0
  %v880 = vpop.f32.mrb[0].mxu0
  %v881 = vadd.f32 %v720, %v880
  %v882 = vpop.f32.mrb[0].mxu0
  %883 = vmatprep.mubr.bf16.mxu0 %v369
  %884 = vmatmul.mubr.bf16.gmra.mrb[0].mxu0 %v368
  %v885 = vpop.f32.mrb[0].mxu0
  %v886 = vadd.f32 %v725, %v885
  %v887 = vpop.f32.mrb[0].mxu0
  %v888 = vpop.f32.mrb[0].mxu0
  %v889 = vadd.f32 %v728, %v888
  %v890 = vpop.f32.mrb[0].mxu0
  %891 = vmatprep.mubr.bf16.mxu0 %v373
  %892 = vmatmul.mubr.bf16.gmra.mrb[0].mxu0 %v372
  %v893 = vpop.f32.mrb[0].mxu0
  %v894 = vadd.f32 %v733, %v893
  %v895 = vpop.f32.mrb[0].mxu0
  %v896 = vpop.f32.mrb[0].mxu0
  %v897 = vadd.f32 %v736, %v896
  %v898 = vpop.f32.mrb[0].mxu0
  %899 = vmatprep.mubr.bf16.mxu0 %v377
  %900 = vmatmul.mubr.bf16.gmra.mrb[0].mxu0 %v376
  %v901 = vpop.f32.mrb[0].mxu0
  %v902 = vadd.f32 %v741, %v901
  %v903 = vpop.f32.mrb[0].mxu0
  %v904 = vpop.f32.mrb[0].mxu0
  %v905 = vadd.f32 %v744, %v904
  %v906 = vpop.f32.mrb[0].mxu0
  %907 = vmatprep.mubr.bf16.mxu0 %v381
  %908 = vmatmul.mubr.bf16.gmra.mrb[0].mxu0 %v380
  %v909 = vpop.f32.mrb[0].mxu0
  %v910 = vadd.f32 %v749, %v909
  %v911 = vpop.f32.mrb[0].mxu0
  %v912 = vpop.f32.mrb[0].mxu0
  %v913 = vadd.f32 %v752, %v912
  %v914 = vpop.f32.mrb[0].mxu0
  %915 = vmatprep.mubr.bf16.mxu0 %v385
  %916 = vmatmul.mubr.bf16.gmra.mrb[0].mxu0 %v384
  %v917 = vpop.f32.mrb[0].mxu0
  %v918 = vadd.f32 %v757, %v917
  %v919 = vpop.f32.mrb[0].mxu0
  %v920 = vpop.f32.mrb[0].mxu0
  %v921 = vadd.f32 %v760, %v920
  %v922 = vpop.f32.mrb[0].mxu0
  %923 = vmatprep.mubr.bf16.mxu0 %v389
  %924 = vmatmul.mubr.bf16.gmra.mrb[0].mxu0 %v388
  %v925 = vpop.f32.mrb[0].mxu0
  %v926 = vadd.f32 %v765, %v925
  %v927 = vpop.f32.mrb[0].mxu0
  %v928 = vpop.f32.mrb[0].mxu0
  %v929 = vadd.f32 %v768, %v928
  %v930 = vpop.f32.mrb[0].mxu0
  %931 = vmatprep.mubr.bf16.mxu0 %v393
  %932 = vmatmul.mubr.bf16.gmra.mrb[0].mxu0 %v392
  %v933 = vpop.f32.mrb[0].mxu0
  %v934 = vadd.f32 %v773, %v933
  %v935 = vpop.f32.mrb[0].mxu0
  %v936 = vpop.f32.mrb[0].mxu0
  %v937 = vadd.f32 %v776, %v936
  %v938 = vpop.f32.mrb[0].mxu0
  %939 = vmatprep.mubr.bf16.mxu0 %v397
  %940 = vmatmul.mubr.bf16.gmra.mrb[0].mxu0 %v396
  %v941 = vpop.f32.mrb[0].mxu0
  %v942 = vadd.f32 %v781, %v941
  %v943 = vpop.f32.mrb[0].mxu0
  %v944 = vpop.f32.mrb[0].mxu0
  %v945 = vadd.f32 %v784, %v944
  %v946 = vpop.f32.mrb[0].mxu0
  %947 = vmatprep.mubr.bf16.mxu0 %v401
  %948 = vmatmul.mubr.bf16.gmra.mrb[0].mxu0 %v400
  %v949 = vpop.f32.mrb[0].mxu0
  %v950 = vadd.f32 %v789, %v949
  %v951 = vpop.f32.mrb[0].mxu0
  %v952 = vpop.f32.mrb[0].mxu0
  %v953 = vadd.f32 %v792, %v952
  %v954 = vpop.f32.mrb[0].mxu0
  %955 = vmatprep.mubr.bf16.mxu0 %v405
  %956 = vmatmul.mubr.bf16.gmra.mrb[0].mxu0 %v404
  %v957 = vpop.f32.mrb[0].mxu0
  %v958 = vadd.f32 %v797, %v957
  %v959 = vpop.f32.mrb[0].mxu0
  %v960 = vpop.f32.mrb[0].mxu0
  %v961 = vadd.f32 %v800, %v960
  %v962 = vpop.f32.mrb[0].mxu0
  %963 = vmatprep.mubr.bf16.mxu0 %v409
  %964 = vmatmul.mubr.bf16.gmra.mrb[0].mxu0 %v408
  %v965 = vpop.f32.mrb[0].mxu0
  %v966 = vadd.f32 %v805, %v965
  %v967 = vpop.f32.mrb[0].mxu0
  %v968 = vpop.f32.mrb[0].mxu0
  %v969 = vadd.f32 %v808, %v968
  %v970 = vpop.f32.mrb[0].mxu0
  %971 = vmatprep.mubr.bf16.mxu0 %v413
  %972 = vmatmul.mubr.bf16.gmra.mrb[0].mxu0 %v412
  %v973 = vpop.f32.mrb[0].mxu0
  %v974 = vadd.f32 %v813, %v973
  %v975 = vpop.f32.mrb[0].mxu0
  %v976 = vpop.f32.mrb[0].mxu0
  %v977 = vadd.f32 %v816, %v976
  %v978 = vpop.f32.mrb[0].mxu0
  %979 = vmatprep.mubr.bf16.mxu0 %v417
  %980 = vmatmul.mubr.bf16.gmra.mrb[0].mxu0 %v416
  %v981 = vpop.f32.mrb[0].mxu0
  %v982 = vadd.f32 %v821, %v981
  %v983 = vpop.f32.mrb[0].mxu0
  %v984 = vpop.f32.mrb[0].mxu0
  %v985 = vadd.f32 %v824, %v984
  %v986 = vpop.f32.mrb[0].mxu0
  %987 = vmatprep.mubr.bf16.mxu0 %v421
  %988 = vmatmul.mubr.bf16.gmra.mrb[0].mxu0 %v420
  %v989 = vpop.f32.mrb[0].mxu0
  %v990 = vadd.f32 %v829, %v989
  %v991 = vpop.f32.mrb[0].mxu0
  %v992 = vpop.f32.mrb[0].mxu0
  %v993 = vadd.f32 %v832, %v992
  %v994 = vpop.f32.mrb[0].mxu0
  %995 = vmatprep.mubr.bf16.mxu0 %v425
  %996 = vmatmul.mubr.bf16.gmra.mrb[0].mxu0 %v424
  %v997 = vpop.f32.mrb[0].mxu0
  %v998 = vadd.f32 %v837, %v997
  %v999 = vpop.f32.mrb[0].mxu0
  %v1000 = vpop.f32.mrb[0].mxu0
  %v1001 = vadd.f32 %v840, %v1000
  %v1002 = vpop.f32.mrb[0].mxu0
  %1003 = vdwg.mxu0
  %vm1004 = vcmp.ge.f32.partialorder %v878, 0.0
  %vm1005 = vcmp.ge.f32.partialorder %v881, 0.0
  %vm1006 = vcmp.ge.f32.partialorder %v886, 0.0
  %vm1007 = vcmp.ge.f32.partialorder %v889, 0.0
  %vm1008 = vcmp.ge.f32.partialorder %v894, 0.0
  %vm1009 = vcmp.ge.f32.partialorder %v897, 0.0
  %vm1010 = vcmp.ge.f32.partialorder %v902, 0.0
  %vm1011 = vcmp.ge.f32.partialorder %v905, 0.0
  %vm1012 = vcmp.ge.f32.partialorder %v910, 0.0
  %vm1013 = vcmp.ge.f32.partialorder %v913, 0.0
  %vm1014 = vcmp.ge.f32.partialorder %v918, 0.0
  %vm1015 = vcmp.ge.f32.partialorder %v921, 0.0
  %vm1016 = vcmp.ge.f32.partialorder %v926, 0.0
  %vm1017 = vcmp.ge.f32.partialorder %v929, 0.0
  %vm1018 = vcmp.ge.f32.partialorder %v934, 0.0
  %vm1019 = vcmp.ge.f32.partialorder %v937, 0.0
  %vm1020 = vcmp.ge.f32.partialorder %v942, 0.0
  %vm1021 = vcmp.ge.f32.partialorder %v945, 0.0
  %vm1022 = vcmp.ge.f32.partialorder %v950, 0.0
  %vm1023 = vcmp.ge.f32.partialorder %v953, 0.0
  %vm1024 = vcmp.ge.f32.partialorder %v958, 0.0
  %vm1025 = vcmp.ge.f32.partialorder %v961, 0.0
  %vm1026 = vcmp.ge.f32.partialorder %v966, 0.0
  %vm1027 = vcmp.ge.f32.partialorder %v969, 0.0
  %vm1028 = vcmp.ge.f32.partialorder %v974, 0.0
  %vm1029 = vcmp.ge.f32.partialorder %v977, 0.0
  %vm1030 = vcmp.ge.f32.partialorder %v982, 0.0
  %vm1031 = vcmp.ge.f32.partialorder %v985, 0.0
  %vm1032 = vcmp.ge.f32.partialorder %v990, 0.0
  %vm1033 = vcmp.ge.f32.partialorder %v993, 0.0
  %vm1034 = vcmp.ge.f32.partialorder %v998, 0.0
  %vm1035 = vcmp.ge.f32.partialorder %v1001, 0.0
  %v1036 = vmul.f32 %v878, 0.1
  %v1037 = vmul.f32 %v881, 0.1
  %v1038 = vmul.f32 %v886, 0.1
  %v1039 = vmul.f32 %v889, 0.1
  %v1040 = vmul.f32 %v894, 0.1
  %v1041 = vmul.f32 %v897, 0.1
  %v1042 = vmul.f32 %v902, 0.1
  %v1043 = vmul.f32 %v905, 0.1
  %v1044 = vmul.f32 %v910, 0.1
  %v1045 = vmul.f32 %v913, 0.1
  %v1046 = vmul.f32 %v918, 0.1
  %v1047 = vmul.f32 %v921, 0.1
  %v1048 = vmul.f32 %v926, 0.1
  %v1049 = vmul.f32 %v929, 0.1
  %v1050 = vmul.f32 %v934, 0.1
  %v1051 = vmul.f32 %v937, 0.1
  %v1052 = vmul.f32 %v942, 0.1
  %v1053 = vmul.f32 %v945, 0.1
  %v1054 = vmul.f32 %v950, 0.1
  %v1055 = vmul.f32 %v953, 0.1
  %v1056 = vmul.f32 %v958, 0.1
  %v1057 = vmul.f32 %v961, 0.1
  %v1058 = vmul.f32 %v966, 0.1
  %v1059 = vmul.f32 %v969, 0.1
  %v1060 = vmul.f32 %v974, 0.1
  %v1061 = vmul.f32 %v977, 0.1
  %v1062 = vmul.f32 %v982, 0.1
  %v1063 = vmul.f32 %v985, 0.1
  %v1064 = vmul.f32 %v990, 0.1
  %v1065 = vmul.f32 %v993, 0.1
  %v1066 = vmul.f32 %v998, 0.1
  %v1067 = vmul.f32 %v1001, 0.1
  %v1068 = vsel %vm1004, %v878, %v1036
  %v1069 = vsel %vm1005, %v881, %v1037
  %v1070 = vsel %vm1006, %v886, %v1038
  %v1071 = vsel %vm1007, %v889, %v1039
  %v1072 = vsel %vm1008, %v894, %v1040
  %v1073 = vsel %vm1009, %v897, %v1041
  %v1074 = vsel %vm1010, %v902, %v1042
  %v1075 = vsel %vm1011, %v905, %v1043
  %v1076 = vsel %vm1012, %v910, %v1044
  %v1077 = vsel %vm1013, %v913, %v1045
  %v1078 = vsel %vm1014, %v918, %v1046
  %v1079 = vsel %vm1015, %v921, %v1047
  %v1080 = vsel %vm1016, %v926, %v1048
  %v1081 = vsel %vm1017, %v929, %v1049
  %v1082 = vsel %vm1018, %v934, %v1050
  %v1083 = vsel %vm1019, %v937, %v1051
  %v1084 = vsel %vm1020, %v942, %v1052
  %v1085 = vsel %vm1021, %v945, %v1053
  %v1086 = vsel %vm1022, %v950, %v1054
  %v1087 = vsel %vm1023, %v953, %v1055
  %v1088 = vsel %vm1024, %v958, %v1056
  %v1089 = vsel %vm1025, %v961, %v1057
  %v1090 = vsel %vm1026, %v966, %v1058
  %v1091 = vsel %vm1027, %v969, %v1059
  %v1092 = vsel %vm1028, %v974, %v1060
  %v1093 = vsel %vm1029, %v977, %v1061
  %v1094 = vsel %vm1030, %v982, %v1062
  %v1095 = vsel %vm1031, %v985, %v1063
  %v1096 = vsel %vm1032, %v990, %v1064
  %v1097 = vsel %vm1033, %v993, %v1065
  %v1098 = vsel %vm1034, %v998, %v1066
  %v1099 = vsel %vm1035, %v1001, %v1067
  %v1100 = vadd.f32 %v1068, %v1076
  %v1101 = vadd.f32 %v1069, %v1077
  %v1102 = vadd.f32 %v1070, %v1078
  %v1103 = vadd.f32 %v1071, %v1079
  %v1104 = vadd.f32 %v1072, %v1080
  %v1105 = vadd.f32 %v1073, %v1081
  %v1106 = vadd.f32 %v1074, %v1082
  %v1107 = vadd.f32 %v1075, %v1083
  %v1108 = vadd.f32 %v1100, %v1084
  %v1109 = vadd.f32 %v1101, %v1085
  %v1110 = vadd.f32 %v1102, %v1086
  %v1111 = vadd.f32 %v1103, %v1087
  %v1112 = vadd.f32 %v1104, %v1088
  %v1113 = vadd.f32 %v1105, %v1089
  %v1114 = vadd.f32 %v1106, %v1090
  %v1115 = vadd.f32 %v1107, %v1091
  %v1116 = vadd.f32 %v1108, %v1092
  %v1117 = vadd.f32 %v1109, %v1093
  %v1118 = vadd.f32 %v1110, %v1094
  %v1119 = vadd.f32 %v1111, %v1095
  %v1120 = vadd.f32 %v1112, %v1096
  %v1121 = vadd.f32 %v1113, %v1097
  %v1122 = vadd.f32 %v1114, %v1098
  %v1123 = vadd.f32 %v1115, %v1099
  %v1124 = vmul.f32 %v1116, 0.25
  %v1125 = vmul.f32 %v1117, 0.25
  %v1126 = vmul.f32 %v1118, 0.25
  %v1127 = vmul.f32 %v1119, 0.25
  %v1128 = vmul.f32 %v1120, 0.25
  %v1129 = vmul.f32 %v1121, 0.25
  %v1130 = vmul.f32 %v1122, 0.25
  %v1131 = vmul.f32 %v1123, 0.25
  %1132 = vst [vmem:[#allocation2] sm:$0xff] 0.0
  %1133 = vst [vmem:[#allocation2 + $0x8] sm:$0xff] 0.0
  %1134 = vst [vmem:[#allocation2 + $0x10] sm:$0xff] 0.0
  %1135 = vst [vmem:[#allocation2 + $0x18] sm:$0xff] 0.0
  %1136 = vst [vmem:[#allocation2 + $0x20] sm:$0xff] 0.0
  %1137 = vst [vmem:[#allocation2 + $0x28] sm:$0xff] 0.0
  %1138 = vst [vmem:[#allocation2 + $0x30] sm:$0xff] 0.0
  %1139 = vst [vmem:[#allocation2 + $0x38] sm:$0xff] 0.0
  %1140 = vst [vmem:[#allocation2 + $0x1] sm:$0xff] %v1124
  %1141 = vst [vmem:[#allocation2 + $0x9] sm:$0xff] %v1125
  %1142 = vst [vmem:[#allocation2 + $0x11] sm:$0xff] %v1126
  %1143 = vst [vmem:[#allocation2 + $0x19] sm:$0x1f] %v1127
  %1144 = vst [vmem:[#allocation2 + $0x1c] sm:$0xe0] %v1127
  %1145 = vst [vmem:[#allocation2 + $0x24] sm:$0xff] %v1128
  %1146 = vst [vmem:[#allocation2 + $0x2c] sm:$0xff] %v1129
  %1147 = vst [vmem:[#allocation2 + $0x34] sm:$0xff] %v1130
  %1148 = vst [vmem:[#allocation2 + $0x3c] sm:$0x3] %v1131
  %v1149 = vld [vmem:[#allocation2] sm:$0xff]
  %v1150 = vld [vmem:[#allocation2 + $0x8] sm:$0xff]
  %v1151 = vld [vmem:[#allocation2 + $0x10] sm:$0xff]
  %v1152 = vld [vmem:[#allocation2 + $0x18] sm:$0xff]
  %v1153 = vld [vmem:[#allocation2 + $0x20] sm:$0xff]
  %v1154 = vld [vmem:[#allocation2 + $0x28] sm:$0xff]
  %v1155 = vld [vmem:[#allocation2 + $0x30] sm:$0xff]
  %v1156 = vld [vmem:[#allocation2 + $0x38] sm:$0x1]
  %v1157 = vpack.c.bf16 %v1150, %v1149
  %v1158 = vpack.c.bf16 %v1152, %v1151
  %v1159 = vpack.c.bf16 %v1154, %v1153
  %v1160 = vpack.c.bf16 %v1156, %v1155
  %v1161 = vld [vmem:[%s3] sm:$0xf]
  %v1162 = vld [vmem:[%s3 + $0x4] sm:$0xf]
  %v1163 = vld [vmem:[%s3 + $0x8] sm:$0xf]
  %v1164 = vld [vmem:[%s3 + $0xc] sm:$0xf]
  %v1165 = vld [vmem:[%s3 + $0x10] sm:$0xf]
  %v1166 = vld [vmem:[%s3 + $0x14] sm:$0xf]
  %v1167 = vld [vmem:[%s3 + $0x18] sm:$0xf]
  %v1168 = vld [vmem:[%s3 + $0x1c] sm:$0xf]
  %v1169 = vld [vmem:[%s3 + $0x20] sm:$0xf]
  %v1170 = vld [vmem:[%s3 + $0x24] sm:$0xf]
  %v1171 = vld [vmem:[%s3 + $0x28] sm:$0xf]
  %v1172 = vld [vmem:[%s3 + $0x2c] sm:$0xf]
  %v1173 = vld [vmem:[%s3 + $0x30] sm:$0xf]
  %v1174 = vld [vmem:[%s3 + $0x34] sm:$0xf]
  %v1175 = vld [vmem:[%s3 + $0x38] sm:$0xf]
  %v1176 = vld [vmem:[%s3 + $0x3c] sm:$0xf]
  %v1177 = vld [vmem:[#allocation2 + $0x1] sm:$0xff]
  %v1178 = vld [vmem:[#allocation2 + $0x9] sm:$0xff]
  %v1179 = vld [vmem:[#allocation2 + $0x11] sm:$0xff]
  %v1180 = vld [vmem:[#allocation2 + $0x19] sm:$0xff]
  %v1181 = vld [vmem:[#allocation2 + $0x21] sm:$0xff]
  %v1182 = vld [vmem:[#allocation2 + $0x29] sm:$0xff]
  %v1183 = vld [vmem:[#allocation2 + $0x31] sm:$0xff]
  %v1184 = vld [vmem:[#allocation2 + $0x39] sm:$0x1]
  %v1185 = vpack.c.bf16 %v1178, %v1177
  %v1186 = vpack.c.bf16 %v1180, %v1179
  %v1187 = vpack.c.bf16 %v1182, %v1181
  %v1188 = vpack.c.bf16 %v1184, %v1183
  %s1189 = scalar_lea.vmem %s3, 64
  %v1190 = vld [vmem:[%s1189] sm:$0xf]
  %v1191 = vld [vmem:[%s1189 + $0x4] sm:$0xf]
  %v1192 = vld [vmem:[%s1189 + $0x8] sm:$0xf]
  %v1193 = vld [vmem:[%s1189 + $0xc] sm:$0xf]
  %v1194 = vld [vmem:[%s1189 + $0x10] sm:$0xf]
  %v1195 = vld [vmem:[%s1189 + $0x14] sm:$0xf]
  %v1196 = vld [vmem:[%s1189 + $0x18] sm:$0xf]
  %v1197 = vld [vmem:[%s1189 + $0x1c] sm:$0xf]
  %v1198 = vld [vmem:[%s1189 + $0x20] sm:$0xf]
  %v1199 = vld [vmem:[%s1189 + $0x24] sm:$0xf]
  %v1200 = vld [vmem:[%s1189 + $0x28] sm:$0xf]
  %v1201 = vld [vmem:[%s1189 + $0x2c] sm:$0xf]
  %v1202 = vld [vmem:[%s1189 + $0x30] sm:$0xf]
  %v1203 = vld [vmem:[%s1189 + $0x34] sm:$0xf]
  %v1204 = vld [vmem:[%s1189 + $0x38] sm:$0xf]
  %v1205 = vld [vmem:[%s1189 + $0x3c] sm:$0xf]
  %v1222 = vunpack.c.l.b16 %v1190
  %v1223 = vunpack.c.l.b16 %v1191
  %v1224 = vunpack.c.l.b16 %v1192
  %v1225 = vunpack.c.l.b16 %v1193
  %v1226 = vunpack.c.l.b16 %v1194
  %v1227 = vunpack.c.l.b16 %v1195
  %v1228 = vunpack.c.l.b16 %v1196
  %v1229 = vunpack.c.l.b16 %v1197
  %v1230 = vunpack.c.l.b16 %v1198
  %v1231 = vunpack.c.l.b16 %v1199
  %v1232 = vunpack.c.l.b16 %v1200
  %v1233 = vunpack.c.l.b16 %v1201
  %v1234 = vunpack.c.l.b16 %v1202
  %v1235 = vunpack.c.l.b16 %v1203
  %v1236 = vunpack.c.l.b16 %v1204
  %v1237 = vunpack.c.l.b16 %v1205
  %v1238 = vpack.c.b16 %v1223, %v1222
  %v1239 = vpack.c.b16 %v1225, %v1224
  %v1240 = vpack.c.b16 %v1227, %v1226
  %v1241 = vpack.c.b16 %v1229, %v1228
  %v1242 = vpack.c.b16 %v1231, %v1230
  %v1243 = vpack.c.b16 %v1233, %v1232
  %v1244 = vpack.c.b16 %v1235, %v1234
  %v1245 = vpack.c.b16 %v1237, %v1236
  %1254 = vmatprep.subr.bf16.mxu0 0
  %1255 = vmatpush1.bf16.msra.mxu0 %v1238
  %1256 = vmatprep.subr.bf16.mxu0 0
  %1257 = vmatpush1.bf16.msra.mxu0 %v1239
  %1258 = vmatprep.subr.bf16.mxu0 0
  %1259 = vmatpush1.bf16.msra.mxu0 %v1240
  %1260 = vmatprep.subr.bf16.mxu0 0
  %1261 = vmatpush1.bf16.msra.mxu0 %v1241
  %1262 = vmatprep.subr.bf16.mxu0 0
  %1263 = vmatpush1.bf16.msra.mxu0 %v1242
  %1264 = vmatprep.subr.bf16.mxu0 0
  %1265 = vmatpush1.bf16.msra.mxu0 %v1243
  %1266 = vmatprep.subr.bf16.mxu0 0
  %1267 = vmatpush1.bf16.msra.mxu0 %v1244
  %1268 = vmatprep.subr.bf16.mxu0 0
  %1269 = vmatpush1.bf16.msra.mxu0 %v1245
  %1270 = vmatprep.subr.bf16.mxu0 0
  %1271 = vmatpush1.bf16.msra.mxu0 0
  %1272 = vmatprep.subr.bf16.mxu0 0
  %1273 = vmatpush1.bf16.msra.mxu0 0
  %1274 = vmatprep.subr.bf16.mxu0 0
  %1275 = vmatpush1.bf16.msra.mxu0 0
  %1276 = vmatprep.subr.bf16.mxu0 0
  %1277 = vmatpush1.bf16.msra.mxu0 0
  %1278 = vmatprep.subr.bf16.mxu0 0
  %1279 = vmatpush1.bf16.msra.mxu0 0
  %1280 = vmatprep.subr.bf16.mxu0 0
  %1281 = vmatpush1.bf16.msra.mxu0 0
  %1282 = vmatprep.subr.bf16.mxu0 0
  %1283 = vmatpush1.bf16.msra.mxu0 0
  %1284 = vmatprep.subr.bf16.mxu0 0
  %1285 = vmatpush1.bf16.msra.mxu0 0
  %1286 = vmatprep.mubr.bf16.mxu0 0
  %1287 = vmatmul.mubr.bf16.gmra.mrb[0].mxu0 %v1185
  %v1288 = vpop.f32.mrb[0].mxu0
  %v1289 = vadd.f32 0.0, %v1288
  %v1290 = vpop.f32.mrb[0].mxu0
  %v1291 = vpop.f32.mrb[0].mxu0
  %v1292 = vadd.f32 0.0, %v1291
  %v1293 = vpop.f32.mrb[0].mxu0
  %1294 = vmatprep.mubr.bf16.mxu0 0
  %1295 = vmatmul.mubr.bf16.gmra.mrb[0].mxu0 %v1186
  %v1296 = vpop.f32.mrb[0].mxu0
  %v1297 = vadd.f32 0.0, %v1296
  %v1298 = vpop.f32.mrb[0].mxu0
  %v1299 = vpop.f32.mrb[0].mxu0
  %v1300 = vpop.f32.mrb[0].mxu0
  %1301 = vmatprep.mubr.bf16.mxu0 0
  %1302 = vmatmul.mubr.bf16.gmra.mrb[0].mxu0 %v1187
  %v1303 = vpop.f32.mrb[0].mxu0
  %v1304 = vadd.f32 0.0, %v1303
  %v1305 = vpop.f32.mrb[0].mxu0
  %v1306 = vpop.f32.mrb[0].mxu0
  %v1307 = vadd.f32 0.0, %v1306
  %v1308 = vpop.f32.mrb[0].mxu0
  %1309 = vmatprep.mubr.bf16.mxu0 0
  %1310 = vmatmul.mubr.bf16.gmra.mrb[0].mxu0 %v1188
  %v1311 = vpop.f32.mrb[0].mxu0
  %v1312 = vadd.f32 0.0, %v1311
  %v1313 = vpop.f32.mrb[0].mxu0
  %v1314 = vpop.f32.mrb[0].mxu0
  %v1315 = vpop.f32.mrb[0].mxu0
  %1316 = vdwg.mxu0
  %v1333 = vunpack.c.l.b16 %v1161
  %v1334 = vunpack.c.l.b16 %v1162
  %v1335 = vunpack.c.l.b16 %v1163
  %v1336 = vunpack.c.l.b16 %v1164
  %v1337 = vunpack.c.l.b16 %v1165
  %v1338 = vunpack.c.l.b16 %v1166
  %v1339 = vunpack.c.l.b16 %v1167
  %v1340 = vunpack.c.l.b16 %v1168
  %v1341 = vunpack.c.l.b16 %v1169
  %v1342 = vunpack.c.l.b16 %v1170
  %v1343 = vunpack.c.l.b16 %v1171
  %v1344 = vunpack.c.l.b16 %v1172
  %v1345 = vunpack.c.l.b16 %v1173
  %v1346 = vunpack.c.l.b16 %v1174
  %v1347 = vunpack.c.l.b16 %v1175
  %v1348 = vunpack.c.l.b16 %v1176
  %v1349 = vpack.c.b16 %v1334, %v1333
  %v1350 = vpack.c.b16 %v1336, %v1335
  %v1351 = vpack.c.b16 %v1338, %v1337
  %v1352 = vpack.c.b16 %v1340, %v1339
  %v1353 = vpack.c.b16 %v1342, %v1341
  %v1354 = vpack.c.b16 %v1344, %v1343
  %v1355 = vpack.c.b16 %v1346, %v1345
  %v1356 = vpack.c.b16 %v1348, %v1347
  %1365 = vmatprep.subr.bf16.mxu0 0
  %1366 = vmatpush1.bf16.msra.mxu0 %v1349
  %1367 = vmatprep.subr.bf16.mxu0 0
  %1368 = vmatpush1.bf16.msra.mxu0 %v1350
  %1369 = vmatprep.subr.bf16.mxu0 0
  %1370 = vmatpush1.bf16.msra.mxu0 %v1351
  %1371 = vmatprep.subr.bf16.mxu0 0
  %1372 = vmatpush1.bf16.msra.mxu0 %v1352
  %1373 = vmatprep.subr.bf16.mxu0 0
  %1374 = vmatpush1.bf16.msra.mxu0 %v1353
  %1375 = vmatprep.subr.bf16.mxu0 0
  %1376 = vmatpush1.bf16.msra.mxu0 %v1354
  %1377 = vmatprep.subr.bf16.mxu0 0
  %1378 = vmatpush1.bf16.msra.mxu0 %v1355
  %1379 = vmatprep.subr.bf16.mxu0 0
  %1380 = vmatpush1.bf16.msra.mxu0 %v1356
  %1381 = vmatprep.subr.bf16.mxu0 0
  %1382 = vmatpush1.bf16.msra.mxu0 0
  %1383 = vmatprep.subr.bf16.mxu0 0
  %1384 = vmatpush1.bf16.msra.mxu0 0
  %1385 = vmatprep.subr.bf16.mxu0 0
  %1386 = vmatpush1.bf16.msra.mxu0 0
  %1387 = vmatprep.subr.bf16.mxu0 0
  %1388 = vmatpush1.bf16.msra.mxu0 0
  %1389 = vmatprep.subr.bf16.mxu0 0
  %1390 = vmatpush1.bf16.msra.mxu0 0
  %1391 = vmatprep.subr.bf16.mxu0 0
  %1392 = vmatpush1.bf16.msra.mxu0 0
  %1393 = vmatprep.subr.bf16.mxu0 0
  %1394 = vmatpush1.bf16.msra.mxu0 0
  %1395 = vmatprep.subr.bf16.mxu0 0
  %1396 = vmatpush1.bf16.msra.mxu0 0
  %1397 = vmatprep.mubr.bf16.mxu0 0
  %1398 = vmatmul.mubr.bf16.gmra.mrb[0].mxu0 %v1157
  %v1399 = vpop.f32.mrb[0].mxu0
  %v1400 = vadd.f32 %v1289, %v1399
  %v1401 = vpop.f32.mrb[0].mxu0
  %v1402 = vpop.f32.mrb[0].mxu0
  %v1403 = vadd.f32 %v1292, %v1402
  %v1404 = vpop.f32.mrb[0].mxu0
  %1405 = vmatprep.mubr.bf16.mxu0 0
  %1406 = vmatmul.mubr.bf16.gmra.mrb[0].mxu0 %v1158
  %v1407 = vpop.f32.mrb[0].mxu0
  %v1408 = vadd.f32 %v1297, %v1407
  %v1409 = vpop.f32.mrb[0].mxu0
  %v1410 = vpop.f32.mrb[0].mxu0
  %v1411 = vpop.f32.mrb[0].mxu0
  %1412 = vmatprep.mubr.bf16.mxu0 0
  %1413 = vmatmul.mubr.bf16.gmra.mrb[0].mxu0 %v1159
  %v1414 = vpop.f32.mrb[0].mxu0
  %v1415 = vadd.f32 %v1304, %v1414
  %v1416 = vpop.f32.mrb[0].mxu0
  %v1417 = vpop.f32.mrb[0].mxu0
  %v1418 = vadd.f32 %v1307, %v1417
  %v1419 = vpop.f32.mrb[0].mxu0
  %1420 = vmatprep.mubr.bf16.mxu0 0
  %1421 = vmatmul.mubr.bf16.gmra.mrb[0].mxu0 %v1160
  %v1422 = vpop.f32.mrb[0].mxu0
  %v1423 = vadd.f32 %v1312, %v1422
  %v1424 = vpop.f32.mrb[0].mxu0
  %v1425 = vpop.f32.mrb[0].mxu0
  %v1426 = vpop.f32.mrb[0].mxu0
  %1427 = vdwg.mxu0
  %v1428 = vld [vmem:[#allocation2 + $0x2] sm:$0xff]
  %v1429 = vld [vmem:[#allocation2 + $0xa] sm:$0xff]
  %v1430 = vld [vmem:[#allocation2 + $0x12] sm:$0xff]
  %v1431 = vld [vmem:[#allocation2 + $0x1a] sm:$0xff]
  %v1432 = vld [vmem:[#allocation2 + $0x22] sm:$0xff]
  %v1433 = vld [vmem:[#allocation2 + $0x2a] sm:$0xff]
  %v1434 = vld [vmem:[#allocation2 + $0x32] sm:$0xff]
  %v1435 = vld [vmem:[#allocation2 + $0x3a] sm:$0x1]
  %v1436 = vpack.c.bf16 %v1429, %v1428
  %v1437 = vpack.c.bf16 %v1431, %v1430
  %v1438 = vpack.c.bf16 %v1433, %v1432
  %v1439 = vpack.c.bf16 %v1435, %v1434
  %s1440 = scalar_lea.vmem %s3, 128
  %v1441 = vld [vmem:[%s1440] sm:$0xf]
  %v1442 = vld [vmem:[%s1440 + $0x4] sm:$0xf]
  %v1443 = vld [vmem:[%s1440 + $0x8] sm:$0xf]
  %v1444 = vld [vmem:[%s1440 + $0xc] sm:$0xf]
  %v1445 = vld [vmem:[%s1440 + $0x10] sm:$0xf]
  %v1446 = vld [vmem:[%s1440 + $0x14] sm:$0xf]
  %v1447 = vld [vmem:[%s1440 + $0x18] sm:$0xf]
  %v1448 = vld [vmem:[%s1440 + $0x1c] sm:$0xf]
  %v1449 = vld [vmem:[%s1440 + $0x20] sm:$0xf]
  %v1450 = vld [vmem:[%s1440 + $0x24] sm:$0xf]
  %v1451 = vld [vmem:[%s1440 + $0x28] sm:$0xf]
  %v1452 = vld [vmem:[%s1440 + $0x2c] sm:$0xf]
  %v1453 = vld [vmem:[%s1440 + $0x30] sm:$0xf]
  %v1454 = vld [vmem:[%s1440 + $0x34] sm:$0xf]
  %v1455 = vld [vmem:[%s1440 + $0x38] sm:$0xf]
  %v1456 = vld [vmem:[%s1440 + $0x3c] sm:$0xf]
  %v1473 = vunpack.c.l.b16 %v1441
  %v1474 = vunpack.c.l.b16 %v1442
  %v1475 = vunpack.c.l.b16 %v1443
  %v1476 = vunpack.c.l.b16 %v1444
  %v1477 = vunpack.c.l.b16 %v1445
  %v1478 = vunpack.c.l.b16 %v1446
  %v1479 = vunpack.c.l.b16 %v1447
  %v1480 = vunpack.c.l.b16 %v1448
  %v1481 = vunpack.c.l.b16 %v1449
  %v1482 = vunpack.c.l.b16 %v1450
  %v1483 = vunpack.c.l.b16 %v1451
  %v1484 = vunpack.c.l.b16 %v1452
  %v1485 = vunpack.c.l.b16 %v1453
  %v1486 = vunpack.c.l.b16 %v1454
  %v1487 = vunpack.c.l.b16 %v1455
  %v1488 = vunpack.c.l.b16 %v1456
  %v1489 = vpack.c.b16 %v1474, %v1473
  %v1490 = vpack.c.b16 %v1476, %v1475
  %v1491 = vpack.c.b16 %v1478, %v1477
  %v1492 = vpack.c.b16 %v1480, %v1479
  %v1493 = vpack.c.b16 %v1482, %v1481
  %v1494 = vpack.c.b16 %v1484, %v1483
  %v1495 = vpack.c.b16 %v1486, %v1485
  %v1496 = vpack.c.b16 %v1488, %v1487
  %1505 = vmatprep.subr.bf16.mxu0 0
  %1506 = vmatpush1.bf16.msra.mxu0 %v1489
  %1507 = vmatprep.subr.bf16.mxu0 0
  %1508 = vmatpush1.bf16.msra.mxu0 %v1490
  %1509 = vmatprep.subr.bf16.mxu0 0
  %1510 = vmatpush1.bf16.msra.mxu0 %v1491
  %1511 = vmatprep.subr.bf16.mxu0 0
  %1512 = vmatpush1.bf16.msra.mxu0 %v1492
  %1513 = vmatprep.subr.bf16.mxu0 0
  %1514 = vmatpush1.bf16.msra.mxu0 %v1493
  %1515 = vmatprep.subr.bf16.mxu0 0
  %1516 = vmatpush1.bf16.msra.mxu0 %v1494
  %1517 = vmatprep.subr.bf16.mxu0 0
  %1518 = vmatpush1.bf16.msra.mxu0 %v1495
  %1519 = vmatprep.subr.bf16.mxu0 0
  %1520 = vmatpush1.bf16.msra.mxu0 %v1496
  %1521 = vmatprep.subr.bf16.mxu0 0
  %1522 = vmatpush1.bf16.msra.mxu0 0
  %1523 = vmatprep.subr.bf16.mxu0 0
  %1524 = vmatpush1.bf16.msra.mxu0 0
  %1525 = vmatprep.subr.bf16.mxu0 0
  %1526 = vmatpush1.bf16.msra.mxu0 0
  %1527 = vmatprep.subr.bf16.mxu0 0
  %1528 = vmatpush1.bf16.msra.mxu0 0
  %1529 = vmatprep.subr.bf16.mxu0 0
  %1530 = vmatpush1.bf16.msra.mxu0 0
  %1531 = vmatprep.subr.bf16.mxu0 0
  %1532 = vmatpush1.bf16.msra.mxu0 0
  %1533 = vmatprep.subr.bf16.mxu0 0
  %1534 = vmatpush1.bf16.msra.mxu0 0
  %1535 = vmatprep.subr.bf16.mxu0 0
  %1536 = vmatpush1.bf16.msra.mxu0 0
  %1537 = vmatprep.mubr.bf16.mxu0 0
  %1538 = vmatmul.mubr.bf16.gmra.mrb[0].mxu0 %v1436
  %v1539 = vpop.f32.mrb[0].mxu0
  %v1540 = vadd.f32 0.0, %v1539
  %v1541 = vpop.f32.mrb[0].mxu0
  %v1542 = vpop.f32.mrb[0].mxu0
  %v1543 = vadd.f32 0.0, %v1542
  %v1544 = vpop.f32.mrb[0].mxu0
  %1545 = vmatprep.mubr.bf16.mxu0 0
  %1546 = vmatmul.mubr.bf16.gmra.mrb[0].mxu0 %v1437
  %v1547 = vpop.f32.mrb[0].mxu0
  %v1548 = vadd.f32 0.0, %v1547
  %v1549 = vpop.f32.mrb[0].mxu0
  %v1550 = vpop.f32.mrb[0].mxu0
  %v1551 = vpop.f32.mrb[0].mxu0
  %1552 = vmatprep.mubr.bf16.mxu0 0
  %1553 = vmatmul.mubr.bf16.gmra.mrb[0].mxu0 %v1438
  %v1554 = vpop.f32.mrb[0].mxu0
  %v1555 = vadd.f32 0.0, %v1554
  %v1556 = vpop.f32.mrb[0].mxu0
  %v1557 = vpop.f32.mrb[0].mxu0
  %v1558 = vadd.f32 0.0, %v1557
  %v1559 = vpop.f32.mrb[0].mxu0
  %1560 = vmatprep.mubr.bf16.mxu0 0
  %1561 = vmatmul.mubr.bf16.gmra.mrb[0].mxu0 %v1439
  %v1562 = vpop.f32.mrb[0].mxu0
  %v1563 = vadd.f32 0.0, %v1562
  %v1564 = vpop.f32.mrb[0].mxu0
  %v1565 = vpop.f32.mrb[0].mxu0
  %v1566 = vpop.f32.mrb[0].mxu0
  %1567 = vdwg.mxu0
  %v1568 = vadd.f32 %v1400, %v1540
  %v1569 = vadd.f32 %v1403, %v1543
  %v1570 = vadd.f32 %v1408, %v1548
  %v1571 = vadd.f32 %v1415, %v1555
  %v1572 = vadd.f32 %v1418, %v1558
  %v1573 = vadd.f32 %v1423, %v1563
  %v1574 = vld [vmem:[#allocation2 + $0x3] sm:$0xff]
  %v1575 = vld [vmem:[#allocation2 + $0xb] sm:$0xff]
  %v1576 = vld [vmem:[#allocation2 + $0x13] sm:$0xff]
  %v1577 = vld [vmem:[#allocation2 + $0x1b] sm:$0xff]
  %v1578 = vld [vmem:[#allocation2 + $0x23] sm:$0xff]
  %v1579 = vld [vmem:[#allocation2 + $0x2b] sm:$0xff]
  %v1580 = vld [vmem:[#allocation2 + $0x33] sm:$0xff]
  %v1581 = vld [vmem:[#allocation2 + $0x3b] sm:$0x1]
  %v1582 = vpack.c.bf16 %v1575, %v1574
  %v1583 = vpack.c.bf16 %v1577, %v1576
  %v1584 = vpack.c.bf16 %v1579, %v1578
  %v1585 = vpack.c.bf16 %v1581, %v1580
  %s1586 = scalar_lea.vmem %s3, 192
  %v1587 = vld [vmem:[%s1586] sm:$0xf]
  %v1588 = vld [vmem:[%s1586 + $0x4] sm:$0xf]
  %v1589 = vld [vmem:[%s1586 + $0x8] sm:$0xf]
  %v1590 = vld [vmem:[%s1586 + $0xc] sm:$0xf]
  %v1591 = vld [vmem:[%s1586 + $0x10] sm:$0xf]
  %v1592 = vld [vmem:[%s1586 + $0x14] sm:$0xf]
  %v1593 = vld [vmem:[%s1586 + $0x18] sm:$0xf]
  %v1594 = vld [vmem:[%s1586 + $0x1c] sm:$0xf]
  %v1595 = vld [vmem:[%s1586 + $0x20] sm:$0xf]
  %v1596 = vld [vmem:[%s1586 + $0x24] sm:$0xf]
  %v1597 = vld [vmem:[%s1586 + $0x28] sm:$0xf]
  %v1598 = vld [vmem:[%s1586 + $0x2c] sm:$0xf]
  %v1599 = vld [vmem:[%s1586 + $0x30] sm:$0xf]
  %v1600 = vld [vmem:[%s1586 + $0x34] sm:$0xf]
  %v1601 = vld [vmem:[%s1586 + $0x38] sm:$0xf]
  %v1602 = vld [vmem:[%s1586 + $0x3c] sm:$0xf]
  %v1619 = vunpack.c.l.b16 %v1587
  %v1620 = vunpack.c.l.b16 %v1588
  %v1621 = vunpack.c.l.b16 %v1589
  %v1622 = vunpack.c.l.b16 %v1590
  %v1623 = vunpack.c.l.b16 %v1591
  %v1624 = vunpack.c.l.b16 %v1592
  %v1625 = vunpack.c.l.b16 %v1593
  %v1626 = vunpack.c.l.b16 %v1594
  %v1627 = vunpack.c.l.b16 %v1595
  %v1628 = vunpack.c.l.b16 %v1596
  %v1629 = vunpack.c.l.b16 %v1597
  %v1630 = vunpack.c.l.b16 %v1598
  %v1631 = vunpack.c.l.b16 %v1599
  %v1632 = vunpack.c.l.b16 %v1600
  %v1633 = vunpack.c.l.b16 %v1601
  %v1634 = vunpack.c.l.b16 %v1602
  %v1635 = vpack.c.b16 %v1620, %v1619
  %v1636 = vpack.c.b16 %v1622, %v1621
  %v1637 = vpack.c.b16 %v1624, %v1623
  %v1638 = vpack.c.b16 %v1626, %v1625
  %v1639 = vpack.c.b16 %v1628, %v1627
  %v1640 = vpack.c.b16 %v1630, %v1629
  %v1641 = vpack.c.b16 %v1632, %v1631
  %v1642 = vpack.c.b16 %v1634, %v1633
  %1651 = vmatprep.subr.bf16.mxu0 0
  %1652 = vmatpush1.bf16.msra.mxu0 %v1635
  %1653 = vmatprep.subr.bf16.mxu0 0
  %1654 = vmatpush1.bf16.msra.mxu0 %v1636
  %1655 = vmatprep.subr.bf16.mxu0 0
  %1656 = vmatpush1.bf16.msra.mxu0 %v1637
  %1657 = vmatprep.subr.bf16.mxu0 0
  %1658 = vmatpush1.bf16.msra.mxu0 %v1638
  %1659 = vmatprep.subr.bf16.mxu0 0
  %1660 = vmatpush1.bf16.msra.mxu0 %v1639
  %1661 = vmatprep.subr.bf16.mxu0 0
  %1662 = vmatpush1.bf16.msra.mxu0 %v1640
  %1663 = vmatprep.subr.bf16.mxu0 0
  %1664 = vmatpush1.bf16.msra.mxu0 %v1641
  %1665 = vmatprep.subr.bf16.mxu0 0
  %1666 = vmatpush1.bf16.msra.mxu0 %v1642
  %1667 = vmatprep.subr.bf16.mxu0 0
  %1668 = vmatpush1.bf16.msra.mxu0 0
  %1669 = vmatprep.subr.bf16.mxu0 0
  %1670 = vmatpush1.bf16.msra.mxu0 0
  %1671 = vmatprep.subr.bf16.mxu0 0
  %1672 = vmatpush1.bf16.msra.mxu0 0
  %1673 = vmatprep.subr.bf16.mxu0 0
  %1674 = vmatpush1.bf16.msra.mxu0 0
  %1675 = vmatprep.subr.bf16.mxu0 0
  %1676 = vmatpush1.bf16.msra.mxu0 0
  %1677 = vmatprep.subr.bf16.mxu0 0
  %1678 = vmatpush1.bf16.msra.mxu0 0
  %1679 = vmatprep.subr.bf16.mxu0 0
  %1680 = vmatpush1.bf16.msra.mxu0 0
  %1681 = vmatprep.subr.bf16.mxu0 0
  %1682 = vmatpush1.bf16.msra.mxu0 0
  %1683 = vmatprep.mubr.bf16.mxu0 0
  %1684 = vmatmul.mubr.bf16.gmra.mrb[0].mxu0 %v1582
  %v1685 = vpop.f32.mrb[0].mxu0
  %v1686 = vadd.f32 0.0, %v1685
  %v1687 = vpop.f32.mrb[0].mxu0
  %v1688 = vpop.f32.mrb[0].mxu0
  %v1689 = vadd.f32 0.0, %v1688
  %v1690 = vpop.f32.mrb[0].mxu0
  %1691 = vmatprep.mubr.bf16.mxu0 0
  %1692 = vmatmul.mubr.bf16.gmra.mrb[0].mxu0 %v1583
  %v1693 = vpop.f32.mrb[0].mxu0
  %v1694 = vadd.f32 0.0, %v1693
  %v1695 = vpop.f32.mrb[0].mxu0
  %v1696 = vpop.f32.mrb[0].mxu0
  %v1697 = vpop.f32.mrb[0].mxu0
  %1698 = vmatprep.mubr.bf16.mxu0 0
  %1699 = vmatmul.mubr.bf16.gmra.mrb[0].mxu0 %v1584
  %v1700 = vpop.f32.mrb[0].mxu0
  %v1701 = vadd.f32 0.0, %v1700
  %v1702 = vpop.f32.mrb[0].mxu0
  %v1703 = vpop.f32.mrb[0].mxu0
  %v1704 = vadd.f32 0.0, %v1703
  %v1705 = vpop.f32.mrb[0].mxu0
  %1706 = vmatprep.mubr.bf16.mxu0 0
  %1707 = vmatmul.mubr.bf16.gmra.mrb[0].mxu0 %v1585
  %v1708 = vpop.f32.mrb[0].mxu0
  %v1709 = vadd.f32 0.0, %v1708
  %v1710 = vpop.f32.mrb[0].mxu0
  %v1711 = vpop.f32.mrb[0].mxu0
  %v1712 = vpop.f32.mrb[0].mxu0
  %1713 = vdwg.mxu0
  %v1714 = vadd.f32 %v1568, %v1686
  %v1715 = vadd.f32 %v1569, %v1689
  %v1716 = vadd.f32 %v1570, %v1694
  %v1717 = vadd.f32 %v1571, %v1701
  %v1718 = vadd.f32 %v1572, %v1704
  %v1719 = vadd.f32 %v1573, %v1709
  %v1720 = vld [vmem:[#allocation2 + $0x4] sm:$0xff]
  %v1721 = vld [vmem:[#allocation2 + $0xc] sm:$0xff]
  %v1722 = vld [vmem:[#allocation2 + $0x14] sm:$0xff]
  %v1723 = vld [vmem:[#allocation2 + $0x1c] sm:$0xff]
  %v1724 = vld [vmem:[#allocation2 + $0x24] sm:$0xff]
  %v1725 = vld [vmem:[#allocation2 + $0x2c] sm:$0xff]
  %v1726 = vld [vmem:[#allocation2 + $0x34] sm:$0xff]
  %v1727 = vld [vmem:[#allocation2 + $0x3c] sm:$0x1]
  %v1728 = vpack.c.bf16 %v1721, %v1720
  %v1729 = vpack.c.bf16 %v1723, %v1722
  %v1730 = vpack.c.bf16 %v1725, %v1724
  %v1731 = vpack.c.bf16 %v1727, %v1726
  %s1732 = scalar_lea.vmem %s3, 256
  %v1733 = vld [vmem:[%s1732] sm:$0xf]
  %v1734 = vld [vmem:[%s1732 + $0x4] sm:$0xf]
  %v1735 = vld [vmem:[%s1732 + $0x8] sm:$0xf]
  %v1736 = vld [vmem:[%s1732 + $0xc] sm:$0xf]
  %v1737 = vld [vmem:[%s1732 + $0x10] sm:$0xf]
  %v1738 = vld [vmem:[%s1732 + $0x14] sm:$0xf]
  %v1739 = vld [vmem:[%s1732 + $0x18] sm:$0xf]
  %v1740 = vld [vmem:[%s1732 + $0x1c] sm:$0xf]
  %v1741 = vld [vmem:[%s1732 + $0x20] sm:$0xf]
  %v1742 = vld [vmem:[%s1732 + $0x24] sm:$0xf]
  %v1743 = vld [vmem:[%s1732 + $0x28] sm:$0xf]
  %v1744 = vld [vmem:[%s1732 + $0x2c] sm:$0xf]
  %v1745 = vld [vmem:[%s1732 + $0x30] sm:$0xf]
  %v1746 = vld [vmem:[%s1732 + $0x34] sm:$0xf]
  %v1747 = vld [vmem:[%s1732 + $0x38] sm:$0xf]
  %v1748 = vld [vmem:[%s1732 + $0x3c] sm:$0xf]
  %v1765 = vunpack.c.l.b16 %v1733
  %v1766 = vunpack.c.l.b16 %v1734
  %v1767 = vunpack.c.l.b16 %v1735
  %v1768 = vunpack.c.l.b16 %v1736
  %v1769 = vunpack.c.l.b16 %v1737
  %v1770 = vunpack.c.l.b16 %v1738
  %v1771 = vunpack.c.l.b16 %v1739
  %v1772 = vunpack.c.l.b16 %v1740
  %v1773 = vunpack.c.l.b16 %v1741
  %v1774 = vunpack.c.l.b16 %v1742
  %v1775 = vunpack.c.l.b16 %v1743
  %v1776 = vunpack.c.l.b16 %v1744
  %v1777 = vunpack.c.l.b16 %v1745
  %v1778 = vunpack.c.l.b16 %v1746
  %v1779 = vunpack.c.l.b16 %v1747
  %v1780 = vunpack.c.l.b16 %v1748
  %v1781 = vpack.c.b16 %v1766, %v1765
  %v1782 = vpack.c.b16 %v1768, %v1767
  %v1783 = vpack.c.b16 %v1770, %v1769
  %v1784 = vpack.c.b16 %v1772, %v1771
  %v1785 = vpack.c.b16 %v1774, %v1773
  %v1786 = vpack.c.b16 %v1776, %v1775
  %v1787 = vpack.c.b16 %v1778, %v1777
  %v1788 = vpack.c.b16 %v1780, %v1779
  %1797 = vmatprep.subr.bf16.mxu0 0
  %1798 = vmatpush1.bf16.msra.mxu0 %v1781
  %1799 = vmatprep.subr.bf16.mxu0 0
  %1800 = vmatpush1.bf16.msra.mxu0 %v1782
  %1801 = vmatprep.subr.bf16.mxu0 0
  %1802 = vmatpush1.bf16.msra.mxu0 %v1783
  %1803 = vmatprep.subr.bf16.mxu0 0
  %1804 = vmatpush1.bf16.msra.mxu0 %v1784
  %1805 = vmatprep.subr.bf16.mxu0 0
  %1806 = vmatpush1.bf16.msra.mxu0 %v1785
  %1807 = vmatprep.subr.bf16.mxu0 0
  %1808 = vmatpush1.bf16.msra.mxu0 %v1786
  %1809 = vmatprep.subr.bf16.mxu0 0
  %1810 = vmatpush1.bf16.msra.mxu0 %v1787
  %1811 = vmatprep.subr.bf16.mxu0 0
  %1812 = vmatpush1.bf16.msra.mxu0 %v1788
  %1813 = vmatprep.subr.bf16.mxu0 0
  %1814 = vmatpush1.bf16.msra.mxu0 0
  %1815 = vmatprep.subr.bf16.mxu0 0
  %1816 = vmatpush1.bf16.msra.mxu0 0
  %1817 = vmatprep.subr.bf16.mxu0 0
  %1818 = vmatpush1.bf16.msra.mxu0 0
  %1819 = vmatprep.subr.bf16.mxu0 0
  %1820 = vmatpush1.bf16.msra.mxu0 0
  %1821 = vmatprep.subr.bf16.mxu0 0
  %1822 = vmatpush1.bf16.msra.mxu0 0
  %1823 = vmatprep.subr.bf16.mxu0 0
  %1824 = vmatpush1.bf16.msra.mxu0 0
  %1825 = vmatprep.subr.bf16.mxu0 0
  %1826 = vmatpush1.bf16.msra.mxu0 0
  %1827 = vmatprep.subr.bf16.mxu0 0
  %1828 = vmatpush1.bf16.msra.mxu0 0
  %1829 = vmatprep.mubr.bf16.mxu0 0
  %1830 = vmatmul.mubr.bf16.gmra.mrb[0].mxu0 %v1728
  %v1831 = vpop.f32.mrb[0].mxu0
  %v1832 = vadd.f32 0.0, %v1831
  %v1833 = vpop.f32.mrb[0].mxu0
  %v1834 = vpop.f32.mrb[0].mxu0
  %v1835 = vadd.f32 0.0, %v1834
  %v1836 = vpop.f32.mrb[0].mxu0
  %1837 = vmatprep.mubr.bf16.mxu0 0
  %1838 = vmatmul.mubr.bf16.gmra.mrb[0].mxu0 %v1729
  %v1839 = vpop.f32.mrb[0].mxu0
  %v1840 = vadd.f32 0.0, %v1839
  %v1841 = vpop.f32.mrb[0].mxu0
  %v1842 = vpop.f32.mrb[0].mxu0
  %v1843 = vpop.f32.mrb[0].mxu0
  %1844 = vmatprep.mubr.bf16.mxu0 0
  %1845 = vmatmul.mubr.bf16.gmra.mrb[0].mxu0 %v1730
  %v1846 = vpop.f32.mrb[0].mxu0
  %v1847 = vadd.f32 0.0, %v1846
  %v1848 = vpop.f32.mrb[0].mxu0
  %v1849 = vpop.f32.mrb[0].mxu0
  %v1850 = vadd.f32 0.0, %v1849
  %v1851 = vpop.f32.mrb[0].mxu0
  %1852 = vmatprep.mubr.bf16.mxu0 0
  %1853 = vmatmul.mubr.bf16.gmra.mrb[0].mxu0 %v1731
  %v1854 = vpop.f32.mrb[0].mxu0
  %v1855 = vadd.f32 0.0, %v1854
  %v1856 = vpop.f32.mrb[0].mxu0
  %v1857 = vpop.f32.mrb[0].mxu0
  %v1858 = vpop.f32.mrb[0].mxu0
  %1859 = vdwg.mxu0
  %v1860 = vadd.f32 %v1714, %v1832
  %v1861 = vadd.f32 %v1715, %v1835
  %v1862 = vadd.f32 %v1716, %v1840
  %v1863 = vadd.f32 %v1717, %v1847
  %v1864 = vadd.f32 %v1718, %v1850
  %v1865 = vadd.f32 %v1719, %v1855
  %v1866 = vld [vmem:[#allocation2 + $0x5] sm:$0xff]
  %v1867 = vld [vmem:[#allocation2 + $0xd] sm:$0xff]
  %v1868 = vld [vmem:[#allocation2 + $0x15] sm:$0xff]
  %v1869 = vld [vmem:[#allocation2 + $0x1d] sm:$0xff]
  %v1870 = vld [vmem:[#allocation2 + $0x25] sm:$0xff]
  %v1871 = vld [vmem:[#allocation2 + $0x2d] sm:$0xff]
  %v1872 = vld [vmem:[#allocation2 + $0x35] sm:$0xff]
  %v1873 = vld [vmem:[#allocation2 + $0x3d] sm:$0x1]
  %v1874 = vpack.c.bf16 %v1867, %v1866
  %v1875 = vpack.c.bf16 %v1869, %v1868
  %v1876 = vpack.c.bf16 %v1871, %v1870
  %v1877 = vpack.c.bf16 %v1873, %v1872
  %s1878 = scalar_lea.vmem %s3, 320
  %v1879 = vld [vmem:[%s1878] sm:$0xf]
  %v1880 = vld [vmem:[%s1878 + $0x4] sm:$0xf]
  %v1881 = vld [vmem:[%s1878 + $0x8] sm:$0xf]
  %v1882 = vld [vmem:[%s1878 + $0xc] sm:$0xf]
  %v1883 = vld [vmem:[%s1878 + $0x10] sm:$0xf]
  %v1884 = vld [vmem:[%s1878 + $0x14] sm:$0xf]
  %v1885 = vld [vmem:[%s1878 + $0x18] sm:$0xf]
  %v1886 = vld [vmem:[%s1878 + $0x1c] sm:$0xf]
  %v1887 = vld [vmem:[%s1878 + $0x20] sm:$0xf]
  %v1888 = vld [vmem:[%s1878 + $0x24] sm:$0xf]
  %v1889 = vld [vmem:[%s1878 + $0x28] sm:$0xf]
  %v1890 = vld [vmem:[%s1878 + $0x2c] sm:$0xf]
  %v1891 = vld [vmem:[%s1878 + $0x30] sm:$0xf]
  %v1892 = vld [vmem:[%s1878 + $0x34] sm:$0xf]
  %v1893 = vld [vmem:[%s1878 + $0x38] sm:$0xf]
  %v1894 = vld [vmem:[%s1878 + $0x3c] sm:$0xf]
  %v1911 = vunpack.c.l.b16 %v1879
  %v1912 = vunpack.c.l.b16 %v1880
  %v1913 = vunpack.c.l.b16 %v1881
  %v1914 = vunpack.c.l.b16 %v1882
  %v1915 = vunpack.c.l.b16 %v1883
  %v1916 = vunpack.c.l.b16 %v1884
  %v1917 = vunpack.c.l.b16 %v1885
  %v1918 = vunpack.c.l.b16 %v1886
  %v1919 = vunpack.c.l.b16 %v1887
  %v1920 = vunpack.c.l.b16 %v1888
  %v1921 = vunpack.c.l.b16 %v1889
  %v1922 = vunpack.c.l.b16 %v1890
  %v1923 = vunpack.c.l.b16 %v1891
  %v1924 = vunpack.c.l.b16 %v1892
  %v1925 = vunpack.c.l.b16 %v1893
  %v1926 = vunpack.c.l.b16 %v1894
  %v1927 = vpack.c.b16 %v1912, %v1911
  %v1928 = vpack.c.b16 %v1914, %v1913
  %v1929 = vpack.c.b16 %v1916, %v1915
  %v1930 = vpack.c.b16 %v1918, %v1917
  %v1931 = vpack.c.b16 %v1920, %v1919
  %v1932 = vpack.c.b16 %v1922, %v1921
  %v1933 = vpack.c.b16 %v1924, %v1923
  %v1934 = vpack.c.b16 %v1926, %v1925
  %1943 = vmatprep.subr.bf16.mxu0 0
  %1944 = vmatpush1.bf16.msra.mxu0 %v1927
  %1945 = vmatprep.subr.bf16.mxu0 0
  %1946 = vmatpush1.bf16.msra.mxu0 %v1928
  %1947 = vmatprep.subr.bf16.mxu0 0
  %1948 = vmatpush1.bf16.msra.mxu0 %v1929
  %1949 = vmatprep.subr.bf16.mxu0 0
  %1950 = vmatpush1.bf16.msra.mxu0 %v1930
  %1951 = vmatprep.subr.bf16.mxu0 0
  %1952 = vmatpush1.bf16.msra.mxu0 %v1931
  %1953 = vmatprep.subr.bf16.mxu0 0
  %1954 = vmatpush1.bf16.msra.mxu0 %v1932
  %1955 = vmatprep.subr.bf16.mxu0 0
  %1956 = vmatpush1.bf16.msra.mxu0 %v1933
  %1957 = vmatprep.subr.bf16.mxu0 0
  %1958 = vmatpush1.bf16.msra.mxu0 %v1934
  %1959 = vmatprep.subr.bf16.mxu0 0
  %1960 = vmatpush1.bf16.msra.mxu0 0
  %1961 = vmatprep.subr.bf16.mxu0 0
  %1962 = vmatpush1.bf16.msra.mxu0 0
  %1963 = vmatprep.subr.bf16.mxu0 0
  %1964 = vmatpush1.bf16.msra.mxu0 0
  %1965 = vmatprep.subr.bf16.mxu0 0
  %1966 = vmatpush1.bf16.msra.mxu0 0
  %1967 = vmatprep.subr.bf16.mxu0 0
  %1968 = vmatpush1.bf16.msra.mxu0 0
  %1969 = vmatprep.subr.bf16.mxu0 0
  %1970 = vmatpush1.bf16.msra.mxu0 0
  %1971 = vmatprep.subr.bf16.mxu0 0
  %1972 = vmatpush1.bf16.msra.mxu0 0
  %1973 = vmatprep.subr.bf16.mxu0 0
  %1974 = vmatpush1.bf16.msra.mxu0 0
  %1975 = vmatprep.mubr.bf16.mxu0 0
  %1976 = vmatmul.mubr.bf16.gmra.mrb[0].mxu0 %v1874
  %v1977 = vpop.f32.mrb[0].mxu0
  %v1978 = vadd.f32 0.0, %v1977
  %v1979 = vpop.f32.mrb[0].mxu0
  %v1980 = vpop.f32.mrb[0].mxu0
  %v1981 = vadd.f32 0.0, %v1980
  %v1982 = vpop.f32.mrb[0].mxu0
  %1983 = vmatprep.mubr.bf16.mxu0 0
  %1984 = vmatmul.mubr.bf16.gmra.mrb[0].mxu0 %v1875
  %v1985 = vpop.f32.mrb[0].mxu0
  %v1986 = vadd.f32 0.0, %v1985
  %v1987 = vpop.f32.mrb[0].mxu0
  %v1988 = vpop.f32.mrb[0].mxu0
  %v1989 = vpop.f32.mrb[0].mxu0
  %1990 = vmatprep.mubr.bf16.mxu0 0
  %1991 = vmatmul.mubr.bf16.gmra.mrb[0].mxu0 %v1876
  %v1992 = vpop.f32.mrb[0].mxu0
  %v1993 = vadd.f32 0.0, %v1992
  %v1994 = vpop.f32.mrb[0].mxu0
  %v1995 = vpop.f32.mrb[0].mxu0
  %v1996 = vadd.f32 0.0, %v1995
  %v1997 = vpop.f32.mrb[0].mxu0
  %1998 = vmatprep.mubr.bf16.mxu0 0
  %1999 = vmatmul.mubr.bf16.gmra.mrb[0].mxu0 %v1877
  %v2000 = vpop.f32.mrb[0].mxu0
  %v2001 = vadd.f32 0.0, %v2000
  %v2002 = vpop.f32.mrb[0].mxu0
  %v2003 = vpop.f32.mrb[0].mxu0
  %v2004 = vpop.f32.mrb[0].mxu0
  %2005 = vdwg.mxu0
  %v2006 = vadd.f32 %v1860, %v1978
  %v2007 = vadd.f32 %v1861, %v1981
  %v2008 = vadd.f32 %v1862, %v1986
  %v2009 = vadd.f32 %v1863, %v1993
  %v2010 = vadd.f32 %v1864, %v1996
  %v2011 = vadd.f32 %v1865, %v2001
  %v2012 = vld [vmem:[#allocation2 + $0x6] sm:$0xff]
  %v2013 = vld [vmem:[#allocation2 + $0xe] sm:$0xff]
  %v2014 = vld [vmem:[#allocation2 + $0x16] sm:$0xff]
  %v2015 = vld [vmem:[#allocation2 + $0x1e] sm:$0xff]
  %v2016 = vld [vmem:[#allocation2 + $0x26] sm:$0xff]
  %v2017 = vld [vmem:[#allocation2 + $0x2e] sm:$0xff]
  %v2018 = vld [vmem:[#allocation2 + $0x36] sm:$0xff]
  %v2019 = vld [vmem:[#allocation2 + $0x3e] sm:$0x1]
  %v2020 = vpack.c.bf16 %v2013, %v2012
  %v2021 = vpack.c.bf16 %v2015, %v2014
  %v2022 = vpack.c.bf16 %v2017, %v2016
  %v2023 = vpack.c.bf16 %v2019, %v2018
  %s2024 = scalar_lea.vmem %s3, 384
  %v2025 = vld [vmem:[%s2024] sm:$0xf]
  %v2026 = vld [vmem:[%s2024 + $0x4] sm:$0xf]
  %v2027 = vld [vmem:[%s2024 + $0x8] sm:$0xf]
  %v2028 = vld [vmem:[%s2024 + $0xc] sm:$0xf]
  %v2029 = vld [vmem:[%s2024 + $0x10] sm:$0xf]
  %v2030 = vld [vmem:[%s2024 + $0x14] sm:$0xf]
  %v2031 = vld [vmem:[%s2024 + $0x18] sm:$0xf]
  %v2032 = vld [vmem:[%s2024 + $0x1c] sm:$0xf]
  %v2033 = vld [vmem:[%s2024 + $0x20] sm:$0xf]
  %v2034 = vld [vmem:[%s2024 + $0x24] sm:$0xf]
  %v2035 = vld [vmem:[%s2024 + $0x28] sm:$0xf]
  %v2036 = vld [vmem:[%s2024 + $0x2c] sm:$0xf]
  %v2037 = vld [vmem:[%s2024 + $0x30] sm:$0xf]
  %v2038 = vld [vmem:[%s2024 + $0x34] sm:$0xf]
  %v2039 = vld [vmem:[%s2024 + $0x38] sm:$0xf]
  %v2040 = vld [vmem:[%s2024 + $0x3c] sm:$0xf]
  %v2057 = vunpack.c.l.b16 %v2025
  %v2058 = vunpack.c.l.b16 %v2026
  %v2059 = vunpack.c.l.b16 %v2027
  %v2060 = vunpack.c.l.b16 %v2028
  %v2061 = vunpack.c.l.b16 %v2029
  %v2062 = vunpack.c.l.b16 %v2030
  %v2063 = vunpack.c.l.b16 %v2031
  %v2064 = vunpack.c.l.b16 %v2032
  %v2065 = vunpack.c.l.b16 %v2033
  %v2066 = vunpack.c.l.b16 %v2034
  %v2067 = vunpack.c.l.b16 %v2035
  %v2068 = vunpack.c.l.b16 %v2036
  %v2069 = vunpack.c.l.b16 %v2037
  %v2070 = vunpack.c.l.b16 %v2038
  %v2071 = vunpack.c.l.b16 %v2039
  %v2072 = vunpack.c.l.b16 %v2040
  %v2073 = vpack.c.b16 %v2058, %v2057
  %v2074 = vpack.c.b16 %v2060, %v2059
  %v2075 = vpack.c.b16 %v2062, %v2061
  %v2076 = vpack.c.b16 %v2064, %v2063
  %v2077 = vpack.c.b16 %v2066, %v2065
  %v2078 = vpack.c.b16 %v2068, %v2067
  %v2079 = vpack.c.b16 %v2070, %v2069
  %v2080 = vpack.c.b16 %v2072, %v2071
  %2089 = vmatprep.subr.bf16.mxu0 0
  %2090 = vmatpush1.bf16.msra.mxu0 %v2073
  %2091 = vmatprep.subr.bf16.mxu0 0
  %2092 = vmatpush1.bf16.msra.mxu0 %v2074
  %2093 = vmatprep.subr.bf16.mxu0 0
  %2094 = vmatpush1.bf16.msra.mxu0 %v2075
  %2095 = vmatprep.subr.bf16.mxu0 0
  %2096 = vmatpush1.bf16.msra.mxu0 %v2076
  %2097 = vmatprep.subr.bf16.mxu0 0
  %2098 = vmatpush1.bf16.msra.mxu0 %v2077
  %2099 = vmatprep.subr.bf16.mxu0 0
  %2100 = vmatpush1.bf16.msra.mxu0 %v2078
  %2101 = vmatprep.subr.bf16.mxu0 0
  %2102 = vmatpush1.bf16.msra.mxu0 %v2079
  %2103 = vmatprep.subr.bf16.mxu0 0
  %2104 = vmatpush1.bf16.msra.mxu0 %v2080
  %2105 = vmatprep.subr.bf16.mxu0 0
  %2106 = vmatpush1.bf16.msra.mxu0 0
  %2107 = vmatprep.subr.bf16.mxu0 0
  %2108 = vmatpush1.bf16.msra.mxu0 0
  %2109 = vmatprep.subr.bf16.mxu0 0
  %2110 = vmatpush1.bf16.msra.mxu0 0
  %2111 = vmatprep.subr.bf16.mxu0 0
  %2112 = vmatpush1.bf16.msra.mxu0 0
  %2113 = vmatprep.subr.bf16.mxu0 0
  %2114 = vmatpush1.bf16.msra.mxu0 0
  %2115 = vmatprep.subr.bf16.mxu0 0
  %2116 = vmatpush1.bf16.msra.mxu0 0
  %2117 = vmatprep.subr.bf16.mxu0 0
  %2118 = vmatpush1.bf16.msra.mxu0 0
  %2119 = vmatprep.subr.bf16.mxu0 0
  %2120 = vmatpush1.bf16.msra.mxu0 0
  %2121 = vmatprep.mubr.bf16.mxu0 0
  %2122 = vmatmul.mubr.bf16.gmra.mrb[0].mxu0 %v2020
  %v2123 = vpop.f32.mrb[0].mxu0
  %v2124 = vadd.f32 0.0, %v2123
  %v2125 = vpop.f32.mrb[0].mxu0
  %v2126 = vpop.f32.mrb[0].mxu0
  %v2127 = vadd.f32 0.0, %v2126
  %v2128 = vpop.f32.mrb[0].mxu0
  %2129 = vmatprep.mubr.bf16.mxu0 0
  %2130 = vmatmul.mubr.bf16.gmra.mrb[0].mxu0 %v2021
  %v2131 = vpop.f32.mrb[0].mxu0
  %v2132 = vadd.f32 0.0, %v2131
  %v2133 = vpop.f32.mrb[0].mxu0
  %v2134 = vpop.f32.mrb[0].mxu0
  %v2135 = vpop.f32.mrb[0].mxu0
  %2136 = vmatprep.mubr.bf16.mxu0 0
  %2137 = vmatmul.mubr.bf16.gmra.mrb[0].mxu0 %v2022
  %v2138 = vpop.f32.mrb[0].mxu0
  %v2139 = vadd.f32 0.0, %v2138
  %v2140 = vpop.f32.mrb[0].mxu0
  %v2141 = vpop.f32.mrb[0].mxu0
  %v2142 = vadd.f32 0.0, %v2141
  %v2143 = vpop.f32.mrb[0].mxu0
  %2144 = vmatprep.mubr.bf16.mxu0 0
  %2145 = vmatmul.mubr.bf16.gmra.mrb[0].mxu0 %v2023
  %v2146 = vpop.f32.mrb[0].mxu0
  %v2147 = vadd.f32 0.0, %v2146
  %v2148 = vpop.f32.mrb[0].mxu0
  %v2149 = vpop.f32.mrb[0].mxu0
  %v2150 = vpop.f32.mrb[0].mxu0
  %2151 = vdwg.mxu0
  %v2152 = vadd.f32 %v2006, %v2124
  %v2153 = vadd.f32 %v2007, %v2127
  %v2154 = vadd.f32 %v2008, %v2132
  %v2155 = vadd.f32 %v2009, %v2139
  %v2156 = vadd.f32 %v2010, %v2142
  %v2157 = vadd.f32 %v2011, %v2147
  %v2158 = vld [vmem:[#allocation2 + $0x7] sm:$0xff]
  %v2159 = vld [vmem:[#allocation2 + $0xf] sm:$0xff]
  %v2160 = vld [vmem:[#allocation2 + $0x17] sm:$0xff]
  %v2161 = vld [vmem:[#allocation2 + $0x1f] sm:$0xff]
  %v2162 = vld [vmem:[#allocation2 + $0x27] sm:$0xff]
  %v2163 = vld [vmem:[#allocation2 + $0x2f] sm:$0xff]
  %v2164 = vld [vmem:[#allocation2 + $0x37] sm:$0xff]
  %v2165 = vld [vmem:[#allocation2 + $0x3f] sm:$0x1]
  %v2166 = vpack.c.bf16 %v2159, %v2158
  %v2167 = vpack.c.bf16 %v2161, %v2160
  %v2168 = vpack.c.bf16 %v2163, %v2162
  %v2169 = vpack.c.bf16 %v2165, %v2164
  %s2170 = scalar_lea.vmem %s3, 448
  %v2171 = vld [vmem:[%s2170] sm:$0xf]
  %v2172 = vld [vmem:[%s2170 + $0x4] sm:$0xf]
  %v2173 = vld [vmem:[%s2170 + $0x8] sm:$0xf]
  %v2174 = vld [vmem:[%s2170 + $0xc] sm:$0xf]
  %v2175 = vld [vmem:[%s2170 + $0x10] sm:$0xf]
  %v2176 = vld [vmem:[%s2170 + $0x14] sm:$0xf]
  %v2177 = vld [vmem:[%s2170 + $0x18] sm:$0xf]
  %v2178 = vld [vmem:[%s2170 + $0x1c] sm:$0xf]
  %v2179 = vld [vmem:[%s2170 + $0x20] sm:$0xf]
  %v2180 = vld [vmem:[%s2170 + $0x24] sm:$0xf]
  %v2181 = vld [vmem:[%s2170 + $0x28] sm:$0xf]
  %v2182 = vld [vmem:[%s2170 + $0x2c] sm:$0xf]
  %v2183 = vld [vmem:[%s2170 + $0x30] sm:$0xf]
  %v2184 = vld [vmem:[%s2170 + $0x34] sm:$0xf]
  %v2185 = vld [vmem:[%s2170 + $0x38] sm:$0xf]
  %v2186 = vld [vmem:[%s2170 + $0x3c] sm:$0xf]
  %v2203 = vunpack.c.l.b16 %v2171
  %v2204 = vunpack.c.l.b16 %v2172
  %v2205 = vunpack.c.l.b16 %v2173
  %v2206 = vunpack.c.l.b16 %v2174
  %v2207 = vunpack.c.l.b16 %v2175
  %v2208 = vunpack.c.l.b16 %v2176
  %v2209 = vunpack.c.l.b16 %v2177
  %v2210 = vunpack.c.l.b16 %v2178
  %v2211 = vunpack.c.l.b16 %v2179
  %v2212 = vunpack.c.l.b16 %v2180
  %v2213 = vunpack.c.l.b16 %v2181
  %v2214 = vunpack.c.l.b16 %v2182
  %v2215 = vunpack.c.l.b16 %v2183
  %v2216 = vunpack.c.l.b16 %v2184
  %v2217 = vunpack.c.l.b16 %v2185
  %v2218 = vunpack.c.l.b16 %v2186
  %v2219 = vpack.c.b16 %v2204, %v2203
  %v2220 = vpack.c.b16 %v2206, %v2205
  %v2221 = vpack.c.b16 %v2208, %v2207
  %v2222 = vpack.c.b16 %v2210, %v2209
  %v2223 = vpack.c.b16 %v2212, %v2211
  %v2224 = vpack.c.b16 %v2214, %v2213
  %v2225 = vpack.c.b16 %v2216, %v2215
  %v2226 = vpack.c.b16 %v2218, %v2217
  %2235 = vmatprep.subr.bf16.mxu0 0
  %2236 = vmatpush1.bf16.msra.mxu0 %v2219
  %2237 = vmatprep.subr.bf16.mxu0 0
  %2238 = vmatpush1.bf16.msra.mxu0 %v2220
  %2239 = vmatprep.subr.bf16.mxu0 0
  %2240 = vmatpush1.bf16.msra.mxu0 %v2221
  %2241 = vmatprep.subr.bf16.mxu0 0
  %2242 = vmatpush1.bf16.msra.mxu0 %v2222
  %2243 = vmatprep.subr.bf16.mxu0 0
  %2244 = vmatpush1.bf16.msra.mxu0 %v2223
  %2245 = vmatprep.subr.bf16.mxu0 0
  %2246 = vmatpush1.bf16.msra.mxu0 %v2224
  %2247 = vmatprep.subr.bf16.mxu0 0
  %2248 = vmatpush1.bf16.msra.mxu0 %v2225
  %2249 = vmatprep.subr.bf16.mxu0 0
  %2250 = vmatpush1.bf16.msra.mxu0 %v2226
  %2251 = vmatprep.subr.bf16.mxu0 0
  %2252 = vmatpush1.bf16.msra.mxu0 0
  %2253 = vmatprep.subr.bf16.mxu0 0
  %2254 = vmatpush1.bf16.msra.mxu0 0
  %2255 = vmatprep.subr.bf16.mxu0 0
  %2256 = vmatpush1.bf16.msra.mxu0 0
  %2257 = vmatprep.subr.bf16.mxu0 0
  %2258 = vmatpush1.bf16.msra.mxu0 0
  %2259 = vmatprep.subr.bf16.mxu0 0
  %2260 = vmatpush1.bf16.msra.mxu0 0
  %2261 = vmatprep.subr.bf16.mxu0 0
  %2262 = vmatpush1.bf16.msra.mxu0 0
  %2263 = vmatprep.subr.bf16.mxu0 0
  %2264 = vmatpush1.bf16.msra.mxu0 0
  %2265 = vmatprep.subr.bf16.mxu0 0
  %2266 = vmatpush1.bf16.msra.mxu0 0
  %2267 = vmatprep.mubr.bf16.mxu0 0
  %2268 = vmatmul.mubr.bf16.gmra.mrb[0].mxu0 %v2166
  %v2269 = vpop.f32.mrb[0].mxu0
  %v2270 = vadd.f32 0.0, %v2269
  %v2271 = vpop.f32.mrb[0].mxu0
  %v2272 = vpop.f32.mrb[0].mxu0
  %v2273 = vadd.f32 0.0, %v2272
  %v2274 = vpop.f32.mrb[0].mxu0
  %2275 = vmatprep.mubr.bf16.mxu0 0
  %2276 = vmatmul.mubr.bf16.gmra.mrb[0].mxu0 %v2167
  %v2277 = vpop.f32.mrb[0].mxu0
  %v2278 = vadd.f32 0.0, %v2277
  %v2279 = vpop.f32.mrb[0].mxu0
  %v2280 = vpop.f32.mrb[0].mxu0
  %v2281 = vpop.f32.mrb[0].mxu0
  %2282 = vmatprep.mubr.bf16.mxu0 0
  %2283 = vmatmul.mubr.bf16.gmra.mrb[0].mxu0 %v2168
  %v2284 = vpop.f32.mrb[0].mxu0
  %v2285 = vadd.f32 0.0, %v2284
  %v2286 = vpop.f32.mrb[0].mxu0
  %v2287 = vpop.f32.mrb[0].mxu0
  %v2288 = vadd.f32 0.0, %v2287
  %v2289 = vpop.f32.mrb[0].mxu0
  %2290 = vmatprep.mubr.bf16.mxu0 0
  %2291 = vmatmul.mubr.bf16.gmra.mrb[0].mxu0 %v2169
  %v2292 = vpop.f32.mrb[0].mxu0
  %v2293 = vadd.f32 0.0, %v2292
  %v2294 = vpop.f32.mrb[0].mxu0
  %v2295 = vpop.f32.mrb[0].mxu0
  %v2296 = vpop.f32.mrb[0].mxu0
  %2297 = vdwg.mxu0
  %v2298 = vadd.f32 %v2152, %v2270
  %v2299 = vadd.f32 %v2153, %v2273
  %v2300 = vadd.f32 %v2154, %v2278
  %v2301 = vadd.f32 %v2155, %v2285
  %v2302 = vadd.f32 %v2156, %v2288
  %v2303 = vadd.f32 %v2157, %v2293
  %v2304 = vld [vmem:[%s4] sm:$0x1]
  %v2306 = vlaneseq
  %v2307 = vshrl.u32 %v2306, 7
  %v2308 = vsub.s32 0, %v2307
  %v2309 = vrot.slane %v2304, %v2308
  %v2311 = vadd.f32 %v2298, %v2309
  %v2312 = vadd.f32 %v2299, %v2309
  %v2313 = vadd.f32 %v2300, %v2309
  %v2314 = vadd.f32 %v2301, %v2309
  %v2315 = vadd.f32 %v2302, %v2309
  %v2316 = vadd.f32 %v2303, %v2309
  %vm2317 = vcmp.ge.f32.partialorder %v2311, 0.0
  %vm2318 = vcmp.ge.f32.partialorder %v2312, 0.0
  %vm2319 = vcmp.ge.f32.partialorder %v2313, 0.0
  %vm2320 = vcmp.ge.f32.partialorder %v2314, 0.0
  %vm2321 = vcmp.ge.f32.partialorder %v2315, 0.0
  %vm2322 = vcmp.ge.f32.partialorder %v2316, 0.0
  %v2323 = vmul.f32 %v2311, 0.1
  %v2324 = vmul.f32 %v2312, 0.1
  %v2325 = vmul.f32 %v2313, 0.1
  %v2326 = vmul.f32 %v2314, 0.1
  %v2327 = vmul.f32 %v2315, 0.1
  %v2328 = vmul.f32 %v2316, 0.1
  %v2329 = vsel %vm2317, %v2311, %v2323
  %v2330 = vsel %vm2318, %v2312, %v2324
  %v2331 = vsel %vm2319, %v2313, %v2325
  %v2332 = vsel %vm2320, %v2314, %v2326
  %v2333 = vsel %vm2321, %v2315, %v2327
  %v2334 = vsel %vm2322, %v2316, %v2328
  %2335 = vst [vmem:[#allocation3] sm:$0xff] 0.0
  %2336 = vst [vmem:[#allocation3 + $0x8] sm:$0xff] 0.0
  %2337 = vst [vmem:[#allocation3 + $0x10] sm:$0xff] 0.0
  %2338 = vst [vmem:[#allocation3 + $0x18] sm:$0xff] 0.0
  %2339 = vst [vmem:[#allocation3 + $0x20] sm:$0xff] 0.0
  %2340 = vst [vmem:[#allocation3 + $0x28] sm:$0xff] 0.0
  %2341 = vst [vmem:[#allocation3 + $0x30] sm:$0xff] 0.0
  %2342 = vst [vmem:[#allocation3 + $0x38] sm:$0xff] 0.0
  %2343 = vst [vmem:[#allocation3 + $0x1] sm:$0xff] %v2329
  %2344 = vst [vmem:[#allocation3 + $0x9] sm:$0xff] %v2330
  %2345 = vst [vmem:[#allocation3 + $0x11] sm:$0xff] %v2331
  %2346 = vst [vmem:[#allocation3 + $0x21] sm:$0xff] %v2332
  %2347 = vst [vmem:[#allocation3 + $0x29] sm:$0xff] %v2333
  %2348 = vst [vmem:[#allocation3 + $0x31] sm:$0xff] %v2334
  %v2349 = vld [vmem:[#allocation3] sm:$0xff]
  %v2350 = vld [vmem:[#allocation3 + $0x8] sm:$0xff]
  %v2351 = vld [vmem:[#allocation3 + $0x10] sm:$0xff]
  %v2352 = vld [vmem:[#allocation3 + $0x18] sm:$0xff]
  %v2353 = vld [vmem:[#allocation3 + $0x20] sm:$0xff]
  %v2354 = vld [vmem:[#allocation3 + $0x28] sm:$0xff]
  %v2355 = vld [vmem:[#allocation3 + $0x30] sm:$0xff]
  %v2356 = vld [vmem:[#allocation3 + $0x38] sm:$0x1]
  %v2357 = vpack.c.bf16 %v2350, %v2349
  %v2358 = vpack.c.bf16 %v2352, %v2351
  %v2359 = vpack.c.bf16 %v2354, %v2353
  %v2360 = vpack.c.bf16 %v2356, %v2355
  %v2361 = vld [vmem:[%s5] sm:$0xf]
  %v2362 = vld [vmem:[%s5 + $0x4] sm:$0xf]
  %v2363 = vld [vmem:[%s5 + $0x8] sm:$0xf]
  %v2364 = vld [vmem:[%s5 + $0xc] sm:$0xf]
  %v2365 = vld [vmem:[%s5 + $0x10] sm:$0xf]
  %v2366 = vld [vmem:[%s5 + $0x14] sm:$0xf]
  %v2367 = vld [vmem:[%s5 + $0x18] sm:$0xf]
  %v2368 = vld [vmem:[%s5 + $0x1c] sm:$0xf]
  %v2369 = vld [vmem:[%s5 + $0x20] sm:$0xf]
  %v2370 = vld [vmem:[%s5 + $0x24] sm:$0xf]
  %v2371 = vld [vmem:[%s5 + $0x28] sm:$0xf]
  %v2372 = vld [vmem:[%s5 + $0x2c] sm:$0xf]
  %v2373 = vld [vmem:[%s5 + $0x30] sm:$0xf]
  %v2374 = vld [vmem:[%s5 + $0x34] sm:$0xf]
  %v2375 = vld [vmem:[%s5 + $0x38] sm:$0xf]
  %v2376 = vld [vmem:[%s5 + $0x3c] sm:$0xf]
  %v2377 = vld [vmem:[#allocation3 + $0x1] sm:$0xff]
  %v2378 = vld [vmem:[#allocation3 + $0x9] sm:$0xff]
  %v2379 = vld [vmem:[#allocation3 + $0x11] sm:$0xff]
  %v2380 = vld [vmem:[#allocation3 + $0x19] sm:$0xff]
  %v2381 = vld [vmem:[#allocation3 + $0x21] sm:$0xff]
  %v2382 = vld [vmem:[#allocation3 + $0x29] sm:$0xff]
  %v2383 = vld [vmem:[#allocation3 + $0x31] sm:$0xff]
  %v2384 = vld [vmem:[#allocation3 + $0x39] sm:$0x1]
  %v2385 = vpack.c.bf16 %v2378, %v2377
  %v2386 = vpack.c.bf16 %v2380, %v2379
  %v2387 = vpack.c.bf16 %v2382, %v2381
  %v2388 = vpack.c.bf16 %v2384, %v2383
  %s2389 = scalar_lea.vmem %s5, 64
  %v2390 = vld [vmem:[%s2389] sm:$0xf]
  %v2391 = vld [vmem:[%s2389 + $0x4] sm:$0xf]
  %v2392 = vld [vmem:[%s2389 + $0x8] sm:$0xf]
  %v2393 = vld [vmem:[%s2389 + $0xc] sm:$0xf]
  %v2394 = vld [vmem:[%s2389 + $0x10] sm:$0xf]
  %v2395 = vld [vmem:[%s2389 + $0x14] sm:$0xf]
  %v2396 = vld [vmem:[%s2389 + $0x18] sm:$0xf]
  %v2397 = vld [vmem:[%s2389 + $0x1c] sm:$0xf]
  %v2398 = vld [vmem:[%s2389 + $0x20] sm:$0xf]
  %v2399 = vld [vmem:[%s2389 + $0x24] sm:$0xf]
  %v2400 = vld [vmem:[%s2389 + $0x28] sm:$0xf]
  %v2401 = vld [vmem:[%s2389 + $0x2c] sm:$0xf]
  %v2402 = vld [vmem:[%s2389 + $0x30] sm:$0xf]
  %v2403 = vld [vmem:[%s2389 + $0x34] sm:$0xf]
  %v2404 = vld [vmem:[%s2389 + $0x38] sm:$0xf]
  %v2405 = vld [vmem:[%s2389 + $0x3c] sm:$0xf]
  %v2422 = vunpack.c.l.b16 %v2390
  %v2423 = vunpack.c.l.b16 %v2391
  %v2424 = vunpack.c.l.b16 %v2392
  %v2425 = vunpack.c.l.b16 %v2393
  %v2426 = vunpack.c.l.b16 %v2394
  %v2427 = vunpack.c.l.b16 %v2395
  %v2428 = vunpack.c.l.b16 %v2396
  %v2429 = vunpack.c.l.b16 %v2397
  %v2430 = vunpack.c.l.b16 %v2398
  %v2431 = vunpack.c.l.b16 %v2399
  %v2432 = vunpack.c.l.b16 %v2400
  %v2433 = vunpack.c.l.b16 %v2401
  %v2434 = vunpack.c.l.b16 %v2402
  %v2435 = vunpack.c.l.b16 %v2403
  %v2436 = vunpack.c.l.b16 %v2404
  %v2437 = vunpack.c.l.b16 %v2405
  %v2438 = vpack.c.b16 %v2423, %v2422
  %v2439 = vpack.c.b16 %v2425, %v2424
  %v2440 = vpack.c.b16 %v2427, %v2426
  %v2441 = vpack.c.b16 %v2429, %v2428
  %v2442 = vpack.c.b16 %v2431, %v2430
  %v2443 = vpack.c.b16 %v2433, %v2432
  %v2444 = vpack.c.b16 %v2435, %v2434
  %v2445 = vpack.c.b16 %v2437, %v2436
  %2454 = vmatprep.subr.bf16.mxu0 0
  %2455 = vmatpush1.bf16.msra.mxu0 %v2438
  %2456 = vmatprep.subr.bf16.mxu0 0
  %2457 = vmatpush1.bf16.msra.mxu0 %v2439
  %2458 = vmatprep.subr.bf16.mxu0 0
  %2459 = vmatpush1.bf16.msra.mxu0 %v2440
  %2460 = vmatprep.subr.bf16.mxu0 0
  %2461 = vmatpush1.bf16.msra.mxu0 %v2441
  %2462 = vmatprep.subr.bf16.mxu0 0
  %2463 = vmatpush1.bf16.msra.mxu0 %v2442
  %2464 = vmatprep.subr.bf16.mxu0 0
  %2465 = vmatpush1.bf16.msra.mxu0 %v2443
  %2466 = vmatprep.subr.bf16.mxu0 0
  %2467 = vmatpush1.bf16.msra.mxu0 %v2444
  %2468 = vmatprep.subr.bf16.mxu0 0
  %2469 = vmatpush1.bf16.msra.mxu0 %v2445
  %2470 = vmatprep.subr.bf16.mxu0 0
  %2471 = vmatpush1.bf16.msra.mxu0 0
  %2472 = vmatprep.subr.bf16.mxu0 0
  %2473 = vmatpush1.bf16.msra.mxu0 0
  %2474 = vmatprep.subr.bf16.mxu0 0
  %2475 = vmatpush1.bf16.msra.mxu0 0
  %2476 = vmatprep.subr.bf16.mxu0 0
  %2477 = vmatpush1.bf16.msra.mxu0 0
  %2478 = vmatprep.subr.bf16.mxu0 0
  %2479 = vmatpush1.bf16.msra.mxu0 0
  %2480 = vmatprep.subr.bf16.mxu0 0
  %2481 = vmatpush1.bf16.msra.mxu0 0
  %2482 = vmatprep.subr.bf16.mxu0 0
  %2483 = vmatpush1.bf16.msra.mxu0 0
  %2484 = vmatprep.subr.bf16.mxu0 0
  %2485 = vmatpush1.bf16.msra.mxu0 0
  %2486 = vmatprep.mubr.bf16.mxu0 0
  %2487 = vmatmul.mubr.bf16.gmra.mrb[0].mxu0 %v2385
  %v2488 = vpop.f32.mrb[0].mxu0
  %v2489 = vadd.f32 0.0, %v2488
  %v2490 = vpop.f32.mrb[0].mxu0
  %v2491 = vpop.f32.mrb[0].mxu0
  %v2492 = vadd.f32 0.0, %v2491
  %v2493 = vpop.f32.mrb[0].mxu0
  %2494 = vmatprep.mubr.bf16.mxu0 0
  %2495 = vmatmul.mubr.bf16.gmra.mrb[0].mxu0 %v2386
  %v2496 = vpop.f32.mrb[0].mxu0
  %v2497 = vadd.f32 0.0, %v2496
  %v2498 = vpop.f32.mrb[0].mxu0
  %v2499 = vpop.f32.mrb[0].mxu0
  %v2500 = vpop.f32.mrb[0].mxu0
  %2501 = vmatprep.mubr.bf16.mxu0 0
  %2502 = vmatmul.mubr.bf16.gmra.mrb[0].mxu0 %v2387
  %v2503 = vpop.f32.mrb[0].mxu0
  %v2504 = vadd.f32 0.0, %v2503
  %v2505 = vpop.f32.mrb[0].mxu0
  %v2506 = vpop.f32.mrb[0].mxu0
  %v2507 = vadd.f32 0.0, %v2506
  %v2508 = vpop.f32.mrb[0].mxu0
  %2509 = vmatprep.mubr.bf16.mxu0 0
  %2510 = vmatmul.mubr.bf16.gmra.mrb[0].mxu0 %v2388
  %v2511 = vpop.f32.mrb[0].mxu0
  %v2512 = vadd.f32 0.0, %v2511
  %v2513 = vpop.f32.mrb[0].mxu0
  %v2514 = vpop.f32.mrb[0].mxu0
  %v2515 = vpop.f32.mrb[0].mxu0
  %2516 = vdwg.mxu0
  %v2533 = vunpack.c.l.b16 %v2361
  %v2534 = vunpack.c.l.b16 %v2362
  %v2535 = vunpack.c.l.b16 %v2363
  %v2536 = vunpack.c.l.b16 %v2364
  %v2537 = vunpack.c.l.b16 %v2365
  %v2538 = vunpack.c.l.b16 %v2366
  %v2539 = vunpack.c.l.b16 %v2367
  %v2540 = vunpack.c.l.b16 %v2368
  %v2541 = vunpack.c.l.b16 %v2369
  %v2542 = vunpack.c.l.b16 %v2370
  %v2543 = vunpack.c.l.b16 %v2371
  %v2544 = vunpack.c.l.b16 %v2372
  %v2545 = vunpack.c.l.b16 %v2373
  %v2546 = vunpack.c.l.b16 %v2374
  %v2547 = vunpack.c.l.b16 %v2375
  %v2548 = vunpack.c.l.b16 %v2376
  %v2549 = vpack.c.b16 %v2534, %v2533
  %v2550 = vpack.c.b16 %v2536, %v2535
  %v2551 = vpack.c.b16 %v2538, %v2537
  %v2552 = vpack.c.b16 %v2540, %v2539
  %v2553 = vpack.c.b16 %v2542, %v2541
  %v2554 = vpack.c.b16 %v2544, %v2543
  %v2555 = vpack.c.b16 %v2546, %v2545
  %v2556 = vpack.c.b16 %v2548, %v2547
  %2565 = vmatprep.subr.bf16.mxu0 0
  %2566 = vmatpush1.bf16.msra.mxu0 %v2549
  %2567 = vmatprep.subr.bf16.mxu0 0
  %2568 = vmatpush1.bf16.msra.mxu0 %v2550
  %2569 = vmatprep.subr.bf16.mxu0 0
  %2570 = vmatpush1.bf16.msra.mxu0 %v2551
  %2571 = vmatprep.subr.bf16.mxu0 0
  %2572 = vmatpush1.bf16.msra.mxu0 %v2552
  %2573 = vmatprep.subr.bf16.mxu0 0
  %2574 = vmatpush1.bf16.msra.mxu0 %v2553
  %2575 = vmatprep.subr.bf16.mxu0 0
  %2576 = vmatpush1.bf16.msra.mxu0 %v2554
  %2577 = vmatprep.subr.bf16.mxu0 0
  %2578 = vmatpush1.bf16.msra.mxu0 %v2555
  %2579 = vmatprep.subr.bf16.mxu0 0
  %2580 = vmatpush1.bf16.msra.mxu0 %v2556
  %2581 = vmatprep.subr.bf16.mxu0 0
  %2582 = vmatpush1.bf16.msra.mxu0 0
  %2583 = vmatprep.subr.bf16.mxu0 0
  %2584 = vmatpush1.bf16.msra.mxu0 0
  %2585 = vmatprep.subr.bf16.mxu0 0
  %2586 = vmatpush1.bf16.msra.mxu0 0
  %2587 = vmatprep.subr.bf16.mxu0 0
  %2588 = vmatpush1.bf16.msra.mxu0 0
  %2589 = vmatprep.subr.bf16.mxu0 0
  %2590 = vmatpush1.bf16.msra.mxu0 0
  %2591 = vmatprep.subr.bf16.mxu0 0
  %2592 = vmatpush1.bf16.msra.mxu0 0
  %2593 = vmatprep.subr.bf16.mxu0 0
  %2594 = vmatpush1.bf16.msra.mxu0 0
  %2595 = vmatprep.subr.bf16.mxu0 0
  %2596 = vmatpush1.bf16.msra.mxu0 0
  %2597 = vmatprep.mubr.bf16.mxu0 0
  %2598 = vmatmul.mubr.bf16.gmra.mrb[0].mxu0 %v2357
  %v2599 = vpop.f32.mrb[0].mxu0
  %v2600 = vadd.f32 %v2489, %v2599
  %v2601 = vpop.f32.mrb[0].mxu0
  %v2602 = vpop.f32.mrb[0].mxu0
  %v2603 = vadd.f32 %v2492, %v2602
  %v2604 = vpop.f32.mrb[0].mxu0
  %2605 = vmatprep.mubr.bf16.mxu0 0
  %2606 = vmatmul.mubr.bf16.gmra.mrb[0].mxu0 %v2358
  %v2607 = vpop.f32.mrb[0].mxu0
  %v2608 = vadd.f32 %v2497, %v2607
  %v2609 = vpop.f32.mrb[0].mxu0
  %v2610 = vpop.f32.mrb[0].mxu0
  %v2611 = vpop.f32.mrb[0].mxu0
  %2612 = vmatprep.mubr.bf16.mxu0 0
  %2613 = vmatmul.mubr.bf16.gmra.mrb[0].mxu0 %v2359
  %v2614 = vpop.f32.mrb[0].mxu0
  %v2615 = vadd.f32 %v2504, %v2614
  %v2616 = vpop.f32.mrb[0].mxu0
  %v2617 = vpop.f32.mrb[0].mxu0
  %v2618 = vadd.f32 %v2507, %v2617
  %v2619 = vpop.f32.mrb[0].mxu0
  %2620 = vmatprep.mubr.bf16.mxu0 0
  %2621 = vmatmul.mubr.bf16.gmra.mrb[0].mxu0 %v2360
  %v2622 = vpop.f32.mrb[0].mxu0
  %v2623 = vadd.f32 %v2512, %v2622
  %v2624 = vpop.f32.mrb[0].mxu0
  %v2625 = vpop.f32.mrb[0].mxu0
  %v2626 = vpop.f32.mrb[0].mxu0
  %2627 = vdwg.mxu0
  %v2628 = vld [vmem:[#allocation3 + $0x2] sm:$0xff]
  %v2629 = vld [vmem:[#allocation3 + $0xa] sm:$0xff]
  %v2630 = vld [vmem:[#allocation3 + $0x12] sm:$0xff]
  %v2631 = vld [vmem:[#allocation3 + $0x1a] sm:$0xff]
  %v2632 = vld [vmem:[#allocation3 + $0x22] sm:$0xff]
  %v2633 = vld [vmem:[#allocation3 + $0x2a] sm:$0xff]
  %v2634 = vld [vmem:[#allocation3 + $0x32] sm:$0xff]
  %v2635 = vld [vmem:[#allocation3 + $0x3a] sm:$0x1]
  %v2636 = vpack.c.bf16 %v2629, %v2628
  %v2637 = vpack.c.bf16 %v2631, %v2630
  %v2638 = vpack.c.bf16 %v2633, %v2632
  %v2639 = vpack.c.bf16 %v2635, %v2634
  %s2640 = scalar_lea.vmem %s5, 128
  %v2641 = vld [vmem:[%s2640] sm:$0xf]
  %v2642 = vld [vmem:[%s2640 + $0x4] sm:$0xf]
  %v2643 = vld [vmem:[%s2640 + $0x8] sm:$0xf]
  %v2644 = vld [vmem:[%s2640 + $0xc] sm:$0xf]
  %v2645 = vld [vmem:[%s2640 + $0x10] sm:$0xf]
  %v2646 = vld [vmem:[%s2640 + $0x14] sm:$0xf]
  %v2647 = vld [vmem:[%s2640 + $0x18] sm:$0xf]
  %v2648 = vld [vmem:[%s2640 + $0x1c] sm:$0xf]
  %v2649 = vld [vmem:[%s2640 + $0x20] sm:$0xf]
  %v2650 = vld [vmem:[%s2640 + $0x24] sm:$0xf]
  %v2651 = vld [vmem:[%s2640 + $0x28] sm:$0xf]
  %v2652 = vld [vmem:[%s2640 + $0x2c] sm:$0xf]
  %v2653 = vld [vmem:[%s2640 + $0x30] sm:$0xf]
  %v2654 = vld [vmem:[%s2640 + $0x34] sm:$0xf]
  %v2655 = vld [vmem:[%s2640 + $0x38] sm:$0xf]
  %v2656 = vld [vmem:[%s2640 + $0x3c] sm:$0xf]
  %v2673 = vunpack.c.l.b16 %v2641
  %v2674 = vunpack.c.l.b16 %v2642
  %v2675 = vunpack.c.l.b16 %v2643
  %v2676 = vunpack.c.l.b16 %v2644
  %v2677 = vunpack.c.l.b16 %v2645
  %v2678 = vunpack.c.l.b16 %v2646
  %v2679 = vunpack.c.l.b16 %v2647
  %v2680 = vunpack.c.l.b16 %v2648
  %v2681 = vunpack.c.l.b16 %v2649
  %v2682 = vunpack.c.l.b16 %v2650
  %v2683 = vunpack.c.l.b16 %v2651
  %v2684 = vunpack.c.l.b16 %v2652
  %v2685 = vunpack.c.l.b16 %v2653
  %v2686 = vunpack.c.l.b16 %v2654
  %v2687 = vunpack.c.l.b16 %v2655
  %v2688 = vunpack.c.l.b16 %v2656
  %v2689 = vpack.c.b16 %v2674, %v2673
  %v2690 = vpack.c.b16 %v2676, %v2675
  %v2691 = vpack.c.b16 %v2678, %v2677
  %v2692 = vpack.c.b16 %v2680, %v2679
  %v2693 = vpack.c.b16 %v2682, %v2681
  %v2694 = vpack.c.b16 %v2684, %v2683
  %v2695 = vpack.c.b16 %v2686, %v2685
  %v2696 = vpack.c.b16 %v2688, %v2687
  %2705 = vmatprep.subr.bf16.mxu0 0
  %2706 = vmatpush1.bf16.msra.mxu0 %v2689
  %2707 = vmatprep.subr.bf16.mxu0 0
  %2708 = vmatpush1.bf16.msra.mxu0 %v2690
  %2709 = vmatprep.subr.bf16.mxu0 0
  %2710 = vmatpush1.bf16.msra.mxu0 %v2691
  %2711 = vmatprep.subr.bf16.mxu0 0
  %2712 = vmatpush1.bf16.msra.mxu0 %v2692
  %2713 = vmatprep.subr.bf16.mxu0 0
  %2714 = vmatpush1.bf16.msra.mxu0 %v2693
  %2715 = vmatprep.subr.bf16.mxu0 0
  %2716 = vmatpush1.bf16.msra.mxu0 %v2694
  %2717 = vmatprep.subr.bf16.mxu0 0
  %2718 = vmatpush1.bf16.msra.mxu0 %v2695
  %2719 = vmatprep.subr.bf16.mxu0 0
  %2720 = vmatpush1.bf16.msra.mxu0 %v2696
  %2721 = vmatprep.subr.bf16.mxu0 0
  %2722 = vmatpush1.bf16.msra.mxu0 0
  %2723 = vmatprep.subr.bf16.mxu0 0
  %2724 = vmatpush1.bf16.msra.mxu0 0
  %2725 = vmatprep.subr.bf16.mxu0 0
  %2726 = vmatpush1.bf16.msra.mxu0 0
  %2727 = vmatprep.subr.bf16.mxu0 0
  %2728 = vmatpush1.bf16.msra.mxu0 0
  %2729 = vmatprep.subr.bf16.mxu0 0
  %2730 = vmatpush1.bf16.msra.mxu0 0
  %2731 = vmatprep.subr.bf16.mxu0 0
  %2732 = vmatpush1.bf16.msra.mxu0 0
  %2733 = vmatprep.subr.bf16.mxu0 0
  %2734 = vmatpush1.bf16.msra.mxu0 0
  %2735 = vmatprep.subr.bf16.mxu0 0
  %2736 = vmatpush1.bf16.msra.mxu0 0
  %2737 = vmatprep.mubr.bf16.mxu0 0
  %2738 = vmatmul.mubr.bf16.gmra.mrb[0].mxu0 %v2636
  %v2739 = vpop.f32.mrb[0].mxu0
  %v2740 = vadd.f32 0.0, %v2739
  %v2741 = vpop.f32.mrb[0].mxu0
  %v2742 = vpop.f32.mrb[0].mxu0
  %v2743 = vadd.f32 0.0, %v2742
  %v2744 = vpop.f32.mrb[0].mxu0
  %2745 = vmatprep.mubr.bf16.mxu0 0
  %2746 = vmatmul.mubr.bf16.gmra.mrb[0].mxu0 %v2637
  %v2747 = vpop.f32.mrb[0].mxu0
  %v2748 = vadd.f32 0.0, %v2747
  %v2749 = vpop.f32.mrb[0].mxu0
  %v2750 = vpop.f32.mrb[0].mxu0
  %v2751 = vpop.f32.mrb[0].mxu0
  %2752 = vmatprep.mubr.bf16.mxu0 0
  %2753 = vmatmul.mubr.bf16.gmra.mrb[0].mxu0 %v2638
  %v2754 = vpop.f32.mrb[0].mxu0
  %v2755 = vadd.f32 0.0, %v2754
  %v2756 = vpop.f32.mrb[0].mxu0
  %v2757 = vpop.f32.mrb[0].mxu0
  %v2758 = vadd.f32 0.0, %v2757
  %v2759 = vpop.f32.mrb[0].mxu0
  %2760 = vmatprep.mubr.bf16.mxu0 0
  %2761 = vmatmul.mubr.bf16.gmra.mrb[0].mxu0 %v2639
  %v2762 = vpop.f32.mrb[0].mxu0
  %v2763 = vadd.f32 0.0, %v2762
  %v2764 = vpop.f32.mrb[0].mxu0
  %v2765 = vpop.f32.mrb[0].mxu0
  %v2766 = vpop.f32.mrb[0].mxu0
  %2767 = vdwg.mxu0
  %v2768 = vadd.f32 %v2600, %v2740
  %v2769 = vadd.f32 %v2603, %v2743
  %v2770 = vadd.f32 %v2608, %v2748
  %v2771 = vadd.f32 %v2615, %v2755
  %v2772 = vadd.f32 %v2618, %v2758
  %v2773 = vadd.f32 %v2623, %v2763
  %v2774 = vld [vmem:[#allocation3 + $0x3] sm:$0xff]
  %v2775 = vld [vmem:[#allocation3 + $0xb] sm:$0xff]
  %v2776 = vld [vmem:[#allocation3 + $0x13] sm:$0xff]
  %v2777 = vld [vmem:[#allocation3 + $0x1b] sm:$0xff]
  %v2778 = vld [vmem:[#allocation3 + $0x23] sm:$0xff]
  %v2779 = vld [vmem:[#allocation3 + $0x2b] sm:$0xff]
  %v2780 = vld [vmem:[#allocation3 + $0x33] sm:$0xff]
  %v2781 = vld [vmem:[#allocation3 + $0x3b] sm:$0x1]
  %v2782 = vpack.c.bf16 %v2775, %v2774
  %v2783 = vpack.c.bf16 %v2777, %v2776
  %v2784 = vpack.c.bf16 %v2779, %v2778
  %v2785 = vpack.c.bf16 %v2781, %v2780
  %s2786 = scalar_lea.vmem %s5, 192
  %v2787 = vld [vmem:[%s2786] sm:$0xf]
  %v2788 = vld [vmem:[%s2786 + $0x4] sm:$0xf]
  %v2789 = vld [vmem:[%s2786 + $0x8] sm:$0xf]
  %v2790 = vld [vmem:[%s2786 + $0xc] sm:$0xf]
  %v2791 = vld [vmem:[%s2786 + $0x10] sm:$0xf]
  %v2792 = vld [vmem:[%s2786 + $0x14] sm:$0xf]
  %v2793 = vld [vmem:[%s2786 + $0x18] sm:$0xf]
  %v2794 = vld [vmem:[%s2786 + $0x1c] sm:$0xf]
  %v2795 = vld [vmem:[%s2786 + $0x20] sm:$0xf]
  %v2796 = vld [vmem:[%s2786 + $0x24] sm:$0xf]
  %v2797 = vld [vmem:[%s2786 + $0x28] sm:$0xf]
  %v2798 = vld [vmem:[%s2786 + $0x2c] sm:$0xf]
  %v2799 = vld [vmem:[%s2786 + $0x30] sm:$0xf]
  %v2800 = vld [vmem:[%s2786 + $0x34] sm:$0xf]
  %v2801 = vld [vmem:[%s2786 + $0x38] sm:$0xf]
  %v2802 = vld [vmem:[%s2786 + $0x3c] sm:$0xf]
  %v2819 = vunpack.c.l.b16 %v2787
  %v2820 = vunpack.c.l.b16 %v2788
  %v2821 = vunpack.c.l.b16 %v2789
  %v2822 = vunpack.c.l.b16 %v2790
  %v2823 = vunpack.c.l.b16 %v2791
  %v2824 = vunpack.c.l.b16 %v2792
  %v2825 = vunpack.c.l.b16 %v2793
  %v2826 = vunpack.c.l.b16 %v2794
  %v2827 = vunpack.c.l.b16 %v2795
  %v2828 = vunpack.c.l.b16 %v2796
  %v2829 = vunpack.c.l.b16 %v2797
  %v2830 = vunpack.c.l.b16 %v2798
  %v2831 = vunpack.c.l.b16 %v2799
  %v2832 = vunpack.c.l.b16 %v2800
  %v2833 = vunpack.c.l.b16 %v2801
  %v2834 = vunpack.c.l.b16 %v2802
  %v2835 = vpack.c.b16 %v2820, %v2819
  %v2836 = vpack.c.b16 %v2822, %v2821
  %v2837 = vpack.c.b16 %v2824, %v2823
  %v2838 = vpack.c.b16 %v2826, %v2825
  %v2839 = vpack.c.b16 %v2828, %v2827
  %v2840 = vpack.c.b16 %v2830, %v2829
  %v2841 = vpack.c.b16 %v2832, %v2831
  %v2842 = vpack.c.b16 %v2834, %v2833
  %2851 = vmatprep.subr.bf16.mxu0 0
  %2852 = vmatpush1.bf16.msra.mxu0 %v2835
  %2853 = vmatprep.subr.bf16.mxu0 0
  %2854 = vmatpush1.bf16.msra.mxu0 %v2836
  %2855 = vmatprep.subr.bf16.mxu0 0
  %2856 = vmatpush1.bf16.msra.mxu0 %v2837
  %2857 = vmatprep.subr.bf16.mxu0 0
  %2858 = vmatpush1.bf16.msra.mxu0 %v2838
  %2859 = vmatprep.subr.bf16.mxu0 0
  %2860 = vmatpush1.bf16.msra.mxu0 %v2839
  %2861 = vmatprep.subr.bf16.mxu0 0
  %2862 = vmatpush1.bf16.msra.mxu0 %v2840
  %2863 = vmatprep.subr.bf16.mxu0 0
  %2864 = vmatpush1.bf16.msra.mxu0 %v2841
  %2865 = vmatprep.subr.bf16.mxu0 0
  %2866 = vmatpush1.bf16.msra.mxu0 %v2842
  %2867 = vmatprep.subr.bf16.mxu0 0
  %2868 = vmatpush1.bf16.msra.mxu0 0
  %2869 = vmatprep.subr.bf16.mxu0 0
  %2870 = vmatpush1.bf16.msra.mxu0 0
  %2871 = vmatprep.subr.bf16.mxu0 0
  %2872 = vmatpush1.bf16.msra.mxu0 0
  %2873 = vmatprep.subr.bf16.mxu0 0
  %2874 = vmatpush1.bf16.msra.mxu0 0
  %2875 = vmatprep.subr.bf16.mxu0 0
  %2876 = vmatpush1.bf16.msra.mxu0 0
  %2877 = vmatprep.subr.bf16.mxu0 0
  %2878 = vmatpush1.bf16.msra.mxu0 0
  %2879 = vmatprep.subr.bf16.mxu0 0
  %2880 = vmatpush1.bf16.msra.mxu0 0
  %2881 = vmatprep.subr.bf16.mxu0 0
  %2882 = vmatpush1.bf16.msra.mxu0 0
  %2883 = vmatprep.mubr.bf16.mxu0 0
  %2884 = vmatmul.mubr.bf16.gmra.mrb[0].mxu0 %v2782
  %v2885 = vpop.f32.mrb[0].mxu0
  %v2886 = vadd.f32 0.0, %v2885
  %v2887 = vpop.f32.mrb[0].mxu0
  %v2888 = vpop.f32.mrb[0].mxu0
  %v2889 = vadd.f32 0.0, %v2888
  %v2890 = vpop.f32.mrb[0].mxu0
  %2891 = vmatprep.mubr.bf16.mxu0 0
  %2892 = vmatmul.mubr.bf16.gmra.mrb[0].mxu0 %v2783
  %v2893 = vpop.f32.mrb[0].mxu0
  %v2894 = vadd.f32 0.0, %v2893
  %v2895 = vpop.f32.mrb[0].mxu0
  %v2896 = vpop.f32.mrb[0].mxu0
  %v2897 = vpop.f32.mrb[0].mxu0
  %2898 = vmatprep.mubr.bf16.mxu0 0
  %2899 = vmatmul.mubr.bf16.gmra.mrb[0].mxu0 %v2784
  %v2900 = vpop.f32.mrb[0].mxu0
  %v2901 = vadd.f32 0.0, %v2900
  %v2902 = vpop.f32.mrb[0].mxu0
  %v2903 = vpop.f32.mrb[0].mxu0
  %v2904 = vadd.f32 0.0, %v2903
  %v2905 = vpop.f32.mrb[0].mxu0
  %2906 = vmatprep.mubr.bf16.mxu0 0
  %2907 = vmatmul.mubr.bf16.gmra.mrb[0].mxu0 %v2785
  %v2908 = vpop.f32.mrb[0].mxu0
  %v2909 = vadd.f32 0.0, %v2908
  %v2910 = vpop.f32.mrb[0].mxu0
  %v2911 = vpop.f32.mrb[0].mxu0
  %v2912 = vpop.f32.mrb[0].mxu0
  %2913 = vdwg.mxu0
  %v2914 = vadd.f32 %v2768, %v2886
  %v2915 = vadd.f32 %v2769, %v2889
  %v2916 = vadd.f32 %v2770, %v2894
  %v2917 = vadd.f32 %v2771, %v2901
  %v2918 = vadd.f32 %v2772, %v2904
  %v2919 = vadd.f32 %v2773, %v2909
  %v2920 = vld [vmem:[#allocation3 + $0x4] sm:$0xff]
  %v2921 = vld [vmem:[#allocation3 + $0xc] sm:$0xff]
  %v2922 = vld [vmem:[#allocation3 + $0x14] sm:$0xff]
  %v2923 = vld [vmem:[#allocation3 + $0x1c] sm:$0xff]
  %v2924 = vld [vmem:[#allocation3 + $0x24] sm:$0xff]
  %v2925 = vld [vmem:[#allocation3 + $0x2c] sm:$0xff]
  %v2926 = vld [vmem:[#allocation3 + $0x34] sm:$0xff]
  %v2927 = vld [vmem:[#allocation3 + $0x3c] sm:$0x1]
  %v2928 = vpack.c.bf16 %v2921, %v2920
  %v2929 = vpack.c.bf16 %v2923, %v2922
  %v2930 = vpack.c.bf16 %v2925, %v2924
  %v2931 = vpack.c.bf16 %v2927, %v2926
  %s2932 = scalar_lea.vmem %s5, 256
  %v2933 = vld [vmem:[%s2932] sm:$0xf]
  %v2934 = vld [vmem:[%s2932 + $0x4] sm:$0xf]
  %v2935 = vld [vmem:[%s2932 + $0x8] sm:$0xf]
  %v2936 = vld [vmem:[%s2932 + $0xc] sm:$0xf]
  %v2937 = vld [vmem:[%s2932 + $0x10] sm:$0xf]
  %v2938 = vld [vmem:[%s2932 + $0x14] sm:$0xf]
  %v2939 = vld [vmem:[%s2932 + $0x18] sm:$0xf]
  %v2940 = vld [vmem:[%s2932 + $0x1c] sm:$0xf]
  %v2941 = vld [vmem:[%s2932 + $0x20] sm:$0xf]
  %v2942 = vld [vmem:[%s2932 + $0x24] sm:$0xf]
  %v2943 = vld [vmem:[%s2932 + $0x28] sm:$0xf]
  %v2944 = vld [vmem:[%s2932 + $0x2c] sm:$0xf]
  %v2945 = vld [vmem:[%s2932 + $0x30] sm:$0xf]
  %v2946 = vld [vmem:[%s2932 + $0x34] sm:$0xf]
  %v2947 = vld [vmem:[%s2932 + $0x38] sm:$0xf]
  %v2948 = vld [vmem:[%s2932 + $0x3c] sm:$0xf]
  %v2965 = vunpack.c.l.b16 %v2933
  %v2966 = vunpack.c.l.b16 %v2934
  %v2967 = vunpack.c.l.b16 %v2935
  %v2968 = vunpack.c.l.b16 %v2936
  %v2969 = vunpack.c.l.b16 %v2937
  %v2970 = vunpack.c.l.b16 %v2938
  %v2971 = vunpack.c.l.b16 %v2939
  %v2972 = vunpack.c.l.b16 %v2940
  %v2973 = vunpack.c.l.b16 %v2941
  %v2974 = vunpack.c.l.b16 %v2942
  %v2975 = vunpack.c.l.b16 %v2943
  %v2976 = vunpack.c.l.b16 %v2944
  %v2977 = vunpack.c.l.b16 %v2945
  %v2978 = vunpack.c.l.b16 %v2946
  %v2979 = vunpack.c.l.b16 %v2947
  %v2980 = vunpack.c.l.b16 %v2948
  %v2981 = vpack.c.b16 %v2966, %v2965
  %v2982 = vpack.c.b16 %v2968, %v2967
  %v2983 = vpack.c.b16 %v2970, %v2969
  %v2984 = vpack.c.b16 %v2972, %v2971
  %v2985 = vpack.c.b16 %v2974, %v2973
  %v2986 = vpack.c.b16 %v2976, %v2975
  %v2987 = vpack.c.b16 %v2978, %v2977
  %v2988 = vpack.c.b16 %v2980, %v2979
  %2997 = vmatprep.subr.bf16.mxu0 0
  %2998 = vmatpush1.bf16.msra.mxu0 %v2981
  %2999 = vmatprep.subr.bf16.mxu0 0
  %3000 = vmatpush1.bf16.msra.mxu0 %v2982
  %3001 = vmatprep.subr.bf16.mxu0 0
  %3002 = vmatpush1.bf16.msra.mxu0 %v2983
  %3003 = vmatprep.subr.bf16.mxu0 0
  %3004 = vmatpush1.bf16.msra.mxu0 %v2984
  %3005 = vmatprep.subr.bf16.mxu0 0
  %3006 = vmatpush1.bf16.msra.mxu0 %v2985
  %3007 = vmatprep.subr.bf16.mxu0 0
  %3008 = vmatpush1.bf16.msra.mxu0 %v2986
  %3009 = vmatprep.subr.bf16.mxu0 0
  %3010 = vmatpush1.bf16.msra.mxu0 %v2987
  %3011 = vmatprep.subr.bf16.mxu0 0
  %3012 = vmatpush1.bf16.msra.mxu0 %v2988
  %3013 = vmatprep.subr.bf16.mxu0 0
  %3014 = vmatpush1.bf16.msra.mxu0 0
  %3015 = vmatprep.subr.bf16.mxu0 0
  %3016 = vmatpush1.bf16.msra.mxu0 0
  %3017 = vmatprep.subr.bf16.mxu0 0
  %3018 = vmatpush1.bf16.msra.mxu0 0
  %3019 = vmatprep.subr.bf16.mxu0 0
  %3020 = vmatpush1.bf16.msra.mxu0 0
  %3021 = vmatprep.subr.bf16.mxu0 0
  %3022 = vmatpush1.bf16.msra.mxu0 0
  %3023 = vmatprep.subr.bf16.mxu0 0
  %3024 = vmatpush1.bf16.msra.mxu0 0
  %3025 = vmatprep.subr.bf16.mxu0 0
  %3026 = vmatpush1.bf16.msra.mxu0 0
  %3027 = vmatprep.subr.bf16.mxu0 0
  %3028 = vmatpush1.bf16.msra.mxu0 0
  %3029 = vmatprep.mubr.bf16.mxu0 0
  %3030 = vmatmul.mubr.bf16.gmra.mrb[0].mxu0 %v2928
  %v3031 = vpop.f32.mrb[0].mxu0
  %v3032 = vadd.f32 0.0, %v3031
  %v3033 = vpop.f32.mrb[0].mxu0
  %v3034 = vpop.f32.mrb[0].mxu0
  %v3035 = vadd.f32 0.0, %v3034
  %v3036 = vpop.f32.mrb[0].mxu0
  %3037 = vmatprep.mubr.bf16.mxu0 0
  %3038 = vmatmul.mubr.bf16.gmra.mrb[0].mxu0 %v2929
  %v3039 = vpop.f32.mrb[0].mxu0
  %v3040 = vadd.f32 0.0, %v3039
  %v3041 = vpop.f32.mrb[0].mxu0
  %v3042 = vpop.f32.mrb[0].mxu0
  %v3043 = vpop.f32.mrb[0].mxu0
  %3044 = vmatprep.mubr.bf16.mxu0 0
  %3045 = vmatmul.mubr.bf16.gmra.mrb[0].mxu0 %v2930
  %v3046 = vpop.f32.mrb[0].mxu0
  %v3047 = vadd.f32 0.0, %v3046
  %v3048 = vpop.f32.mrb[0].mxu0
  %v3049 = vpop.f32.mrb[0].mxu0
  %v3050 = vadd.f32 0.0, %v3049
  %v3051 = vpop.f32.mrb[0].mxu0
  %3052 = vmatprep.mubr.bf16.mxu0 0
  %3053 = vmatmul.mubr.bf16.gmra.mrb[0].mxu0 %v2931
  %v3054 = vpop.f32.mrb[0].mxu0
  %v3055 = vadd.f32 0.0, %v3054
  %v3056 = vpop.f32.mrb[0].mxu0
  %v3057 = vpop.f32.mrb[0].mxu0
  %v3058 = vpop.f32.mrb[0].mxu0
  %3059 = vdwg.mxu0
  %v3060 = vadd.f32 %v2914, %v3032
  %v3061 = vadd.f32 %v2915, %v3035
  %v3062 = vadd.f32 %v2916, %v3040
  %v3063 = vadd.f32 %v2917, %v3047
  %v3064 = vadd.f32 %v2918, %v3050
  %v3065 = vadd.f32 %v2919, %v3055
  %v3066 = vld [vmem:[#allocation3 + $0x5] sm:$0xff]
  %v3067 = vld [vmem:[#allocation3 + $0xd] sm:$0xff]
  %v3068 = vld [vmem:[#allocation3 + $0x15] sm:$0xff]
  %v3069 = vld [vmem:[#allocation3 + $0x1d] sm:$0xff]
  %v3070 = vld [vmem:[#allocation3 + $0x25] sm:$0xff]
  %v3071 = vld [vmem:[#allocation3 + $0x2d] sm:$0xff]
  %v3072 = vld [vmem:[#allocation3 + $0x35] sm:$0xff]
  %v3073 = vld [vmem:[#allocation3 + $0x3d] sm:$0x1]
  %v3074 = vpack.c.bf16 %v3067, %v3066
  %v3075 = vpack.c.bf16 %v3069, %v3068
  %v3076 = vpack.c.bf16 %v3071, %v3070
  %v3077 = vpack.c.bf16 %v3073, %v3072
  %s3078 = scalar_lea.vmem %s5, 320
  %v3079 = vld [vmem:[%s3078] sm:$0xf]
  %v3080 = vld [vmem:[%s3078 + $0x4] sm:$0xf]
  %v3081 = vld [vmem:[%s3078 + $0x8] sm:$0xf]
  %v3082 = vld [vmem:[%s3078 + $0xc] sm:$0xf]
  %v3083 = vld [vmem:[%s3078 + $0x10] sm:$0xf]
  %v3084 = vld [vmem:[%s3078 + $0x14] sm:$0xf]
  %v3085 = vld [vmem:[%s3078 + $0x18] sm:$0xf]
  %v3086 = vld [vmem:[%s3078 + $0x1c] sm:$0xf]
  %v3087 = vld [vmem:[%s3078 + $0x20] sm:$0xf]
  %v3088 = vld [vmem:[%s3078 + $0x24] sm:$0xf]
  %v3089 = vld [vmem:[%s3078 + $0x28] sm:$0xf]
  %v3090 = vld [vmem:[%s3078 + $0x2c] sm:$0xf]
  %v3091 = vld [vmem:[%s3078 + $0x30] sm:$0xf]
  %v3092 = vld [vmem:[%s3078 + $0x34] sm:$0xf]
  %v3093 = vld [vmem:[%s3078 + $0x38] sm:$0xf]
  %v3094 = vld [vmem:[%s3078 + $0x3c] sm:$0xf]
  %v3111 = vunpack.c.l.b16 %v3079
  %v3112 = vunpack.c.l.b16 %v3080
  %v3113 = vunpack.c.l.b16 %v3081
  %v3114 = vunpack.c.l.b16 %v3082
  %v3115 = vunpack.c.l.b16 %v3083
  %v3116 = vunpack.c.l.b16 %v3084
  %v3117 = vunpack.c.l.b16 %v3085
  %v3118 = vunpack.c.l.b16 %v3086
  %v3119 = vunpack.c.l.b16 %v3087
  %v3120 = vunpack.c.l.b16 %v3088
  %v3121 = vunpack.c.l.b16 %v3089
  %v3122 = vunpack.c.l.b16 %v3090
  %v3123 = vunpack.c.l.b16 %v3091
  %v3124 = vunpack.c.l.b16 %v3092
  %v3125 = vunpack.c.l.b16 %v3093
  %v3126 = vunpack.c.l.b16 %v3094
  %v3127 = vpack.c.b16 %v3112, %v3111
  %v3128 = vpack.c.b16 %v3114, %v3113
  %v3129 = vpack.c.b16 %v3116, %v3115
  %v3130 = vpack.c.b16 %v3118, %v3117
  %v3131 = vpack.c.b16 %v3120, %v3119
  %v3132 = vpack.c.b16 %v3122, %v3121
  %v3133 = vpack.c.b16 %v3124, %v3123
  %v3134 = vpack.c.b16 %v3126, %v3125
  %3143 = vmatprep.subr.bf16.mxu0 0
  %3144 = vmatpush1.bf16.msra.mxu0 %v3127
  %3145 = vmatprep.subr.bf16.mxu0 0
  %3146 = vmatpush1.bf16.msra.mxu0 %v3128
  %3147 = vmatprep.subr.bf16.mxu0 0
  %3148 = vmatpush1.bf16.msra.mxu0 %v3129
  %3149 = vmatprep.subr.bf16.mxu0 0
  %3150 = vmatpush1.bf16.msra.mxu0 %v3130
  %3151 = vmatprep.subr.bf16.mxu0 0
  %3152 = vmatpush1.bf16.msra.mxu0 %v3131
  %3153 = vmatprep.subr.bf16.mxu0 0
  %3154 = vmatpush1.bf16.msra.mxu0 %v3132
  %3155 = vmatprep.subr.bf16.mxu0 0
  %3156 = vmatpush1.bf16.msra.mxu0 %v3133
  %3157 = vmatprep.subr.bf16.mxu0 0
  %3158 = vmatpush1.bf16.msra.mxu0 %v3134
  %3159 = vmatprep.subr.bf16.mxu0 0
  %3160 = vmatpush1.bf16.msra.mxu0 0
  %3161 = vmatprep.subr.bf16.mxu0 0
  %3162 = vmatpush1.bf16.msra.mxu0 0
  %3163 = vmatprep.subr.bf16.mxu0 0
  %3164 = vmatpush1.bf16.msra.mxu0 0
  %3165 = vmatprep.subr.bf16.mxu0 0
  %3166 = vmatpush1.bf16.msra.mxu0 0
  %3167 = vmatprep.subr.bf16.mxu0 0
  %3168 = vmatpush1.bf16.msra.mxu0 0
  %3169 = vmatprep.subr.bf16.mxu0 0
  %3170 = vmatpush1.bf16.msra.mxu0 0
  %3171 = vmatprep.subr.bf16.mxu0 0
  %3172 = vmatpush1.bf16.msra.mxu0 0
  %3173 = vmatprep.subr.bf16.mxu0 0
  %3174 = vmatpush1.bf16.msra.mxu0 0
  %3175 = vmatprep.mubr.bf16.mxu0 0
  %3176 = vmatmul.mubr.bf16.gmra.mrb[0].mxu0 %v3074
  %v3177 = vpop.f32.mrb[0].mxu0
  %v3178 = vadd.f32 0.0, %v3177
  %v3179 = vpop.f32.mrb[0].mxu0
  %v3180 = vpop.f32.mrb[0].mxu0
  %v3181 = vadd.f32 0.0, %v3180
  %v3182 = vpop.f32.mrb[0].mxu0
  %3183 = vmatprep.mubr.bf16.mxu0 0
  %3184 = vmatmul.mubr.bf16.gmra.mrb[0].mxu0 %v3075
  %v3185 = vpop.f32.mrb[0].mxu0
  %v3186 = vadd.f32 0.0, %v3185
  %v3187 = vpop.f32.mrb[0].mxu0
  %v3188 = vpop.f32.mrb[0].mxu0
  %v3189 = vpop.f32.mrb[0].mxu0
  %3190 = vmatprep.mubr.bf16.mxu0 0
  %3191 = vmatmul.mubr.bf16.gmra.mrb[0].mxu0 %v3076
  %v3192 = vpop.f32.mrb[0].mxu0
  %v3193 = vadd.f32 0.0, %v3192
  %v3194 = vpop.f32.mrb[0].mxu0
  %v3195 = vpop.f32.mrb[0].mxu0
  %v3196 = vadd.f32 0.0, %v3195
  %v3197 = vpop.f32.mrb[0].mxu0
  %3198 = vmatprep.mubr.bf16.mxu0 0
  %3199 = vmatmul.mubr.bf16.gmra.mrb[0].mxu0 %v3077
  %v3200 = vpop.f32.mrb[0].mxu0
  %v3201 = vadd.f32 0.0, %v3200
  %v3202 = vpop.f32.mrb[0].mxu0
  %v3203 = vpop.f32.mrb[0].mxu0
  %v3204 = vpop.f32.mrb[0].mxu0
  %3205 = vdwg.mxu0
  %v3206 = vadd.f32 %v3060, %v3178
  %v3207 = vadd.f32 %v3061, %v3181
  %v3208 = vadd.f32 %v3062, %v3186
  %v3209 = vadd.f32 %v3063, %v3193
  %v3210 = vadd.f32 %v3064, %v3196
  %v3211 = vadd.f32 %v3065, %v3201
  %v3212 = vld [vmem:[#allocation3 + $0x6] sm:$0xff]
  %v3213 = vld [vmem:[#allocation3 + $0xe] sm:$0xff]
  %v3214 = vld [vmem:[#allocation3 + $0x16] sm:$0xff]
  %v3215 = vld [vmem:[#allocation3 + $0x1e] sm:$0xff]
  %v3216 = vld [vmem:[#allocation3 + $0x26] sm:$0xff]
  %v3217 = vld [vmem:[#allocation3 + $0x2e] sm:$0xff]
  %v3218 = vld [vmem:[#allocation3 + $0x36] sm:$0xff]
  %v3219 = vld [vmem:[#allocation3 + $0x3e] sm:$0x1]
  %v3220 = vpack.c.bf16 %v3213, %v3212
  %v3221 = vpack.c.bf16 %v3215, %v3214
  %v3222 = vpack.c.bf16 %v3217, %v3216
  %v3223 = vpack.c.bf16 %v3219, %v3218
  %s3224 = scalar_lea.vmem %s5, 384
  %v3225 = vld [vmem:[%s3224] sm:$0xf]
  %v3226 = vld [vmem:[%s3224 + $0x4] sm:$0xf]
  %v3227 = vld [vmem:[%s3224 + $0x8] sm:$0xf]
  %v3228 = vld [vmem:[%s3224 + $0xc] sm:$0xf]
  %v3229 = vld [vmem:[%s3224 + $0x10] sm:$0xf]
  %v3230 = vld [vmem:[%s3224 + $0x14] sm:$0xf]
  %v3231 = vld [vmem:[%s3224 + $0x18] sm:$0xf]
  %v3232 = vld [vmem:[%s3224 + $0x1c] sm:$0xf]
  %v3233 = vld [vmem:[%s3224 + $0x20] sm:$0xf]
  %v3234 = vld [vmem:[%s3224 + $0x24] sm:$0xf]
  %v3235 = vld [vmem:[%s3224 + $0x28] sm:$0xf]
  %v3236 = vld [vmem:[%s3224 + $0x2c] sm:$0xf]
  %v3237 = vld [vmem:[%s3224 + $0x30] sm:$0xf]
  %v3238 = vld [vmem:[%s3224 + $0x34] sm:$0xf]
  %v3239 = vld [vmem:[%s3224 + $0x38] sm:$0xf]
  %v3240 = vld [vmem:[%s3224 + $0x3c] sm:$0xf]
  %v3257 = vunpack.c.l.b16 %v3225
  %v3258 = vunpack.c.l.b16 %v3226
  %v3259 = vunpack.c.l.b16 %v3227
  %v3260 = vunpack.c.l.b16 %v3228
  %v3261 = vunpack.c.l.b16 %v3229
  %v3262 = vunpack.c.l.b16 %v3230
  %v3263 = vunpack.c.l.b16 %v3231
  %v3264 = vunpack.c.l.b16 %v3232
  %v3265 = vunpack.c.l.b16 %v3233
  %v3266 = vunpack.c.l.b16 %v3234
  %v3267 = vunpack.c.l.b16 %v3235
  %v3268 = vunpack.c.l.b16 %v3236
  %v3269 = vunpack.c.l.b16 %v3237
  %v3270 = vunpack.c.l.b16 %v3238
  %v3271 = vunpack.c.l.b16 %v3239
  %v3272 = vunpack.c.l.b16 %v3240
  %v3273 = vpack.c.b16 %v3258, %v3257
  %v3274 = vpack.c.b16 %v3260, %v3259
  %v3275 = vpack.c.b16 %v3262, %v3261
  %v3276 = vpack.c.b16 %v3264, %v3263
  %v3277 = vpack.c.b16 %v3266, %v3265
  %v3278 = vpack.c.b16 %v3268, %v3267
  %v3279 = vpack.c.b16 %v3270, %v3269
  %v3280 = vpack.c.b16 %v3272, %v3271
  %3289 = vmatprep.subr.bf16.mxu0 0
  %3290 = vmatpush1.bf16.msra.mxu0 %v3273
  %3291 = vmatprep.subr.bf16.mxu0 0
  %3292 = vmatpush1.bf16.msra.mxu0 %v3274
  %3293 = vmatprep.subr.bf16.mxu0 0
  %3294 = vmatpush1.bf16.msra.mxu0 %v3275
  %3295 = vmatprep.subr.bf16.mxu0 0
  %3296 = vmatpush1.bf16.msra.mxu0 %v3276
  %3297 = vmatprep.subr.bf16.mxu0 0
  %3298 = vmatpush1.bf16.msra.mxu0 %v3277
  %3299 = vmatprep.subr.bf16.mxu0 0
  %3300 = vmatpush1.bf16.msra.mxu0 %v3278
  %3301 = vmatprep.subr.bf16.mxu0 0
  %3302 = vmatpush1.bf16.msra.mxu0 %v3279
  %3303 = vmatprep.subr.bf16.mxu0 0
  %3304 = vmatpush1.bf16.msra.mxu0 %v3280
  %3305 = vmatprep.subr.bf16.mxu0 0
  %3306 = vmatpush1.bf16.msra.mxu0 0
  %3307 = vmatprep.subr.bf16.mxu0 0
  %3308 = vmatpush1.bf16.msra.mxu0 0
  %3309 = vmatprep.subr.bf16.mxu0 0
  %3310 = vmatpush1.bf16.msra.mxu0 0
  %3311 = vmatprep.subr.bf16.mxu0 0
  %3312 = vmatpush1.bf16.msra.mxu0 0
  %3313 = vmatprep.subr.bf16.mxu0 0
  %3314 = vmatpush1.bf16.msra.mxu0 0
  %3315 = vmatprep.subr.bf16.mxu0 0
  %3316 = vmatpush1.bf16.msra.mxu0 0
  %3317 = vmatprep.subr.bf16.mxu0 0
  %3318 = vmatpush1.bf16.msra.mxu0 0
  %3319 = vmatprep.subr.bf16.mxu0 0
  %3320 = vmatpush1.bf16.msra.mxu0 0
  %3321 = vmatprep.mubr.bf16.mxu0 0
  %3322 = vmatmul.mubr.bf16.gmra.mrb[0].mxu0 %v3220
  %v3323 = vpop.f32.mrb[0].mxu0
  %v3324 = vadd.f32 0.0, %v3323
  %v3325 = vpop.f32.mrb[0].mxu0
  %v3326 = vpop.f32.mrb[0].mxu0
  %v3327 = vadd.f32 0.0, %v3326
  %v3328 = vpop.f32.mrb[0].mxu0
  %3329 = vmatprep.mubr.bf16.mxu0 0
  %3330 = vmatmul.mubr.bf16.gmra.mrb[0].mxu0 %v3221
  %v3331 = vpop.f32.mrb[0].mxu0
  %v3332 = vadd.f32 0.0, %v3331
  %v3333 = vpop.f32.mrb[0].mxu0
  %v3334 = vpop.f32.mrb[0].mxu0
  %v3335 = vpop.f32.mrb[0].mxu0
  %3336 = vmatprep.mubr.bf16.mxu0 0
  %3337 = vmatmul.mubr.bf16.gmra.mrb[0].mxu0 %v3222
  %v3338 = vpop.f32.mrb[0].mxu0
  %v3339 = vadd.f32 0.0, %v3338
  %v3340 = vpop.f32.mrb[0].mxu0
  %v3341 = vpop.f32.mrb[0].mxu0
  %v3342 = vadd.f32 0.0, %v3341
  %v3343 = vpop.f32.mrb[0].mxu0
  %3344 = vmatprep.mubr.bf16.mxu0 0
  %3345 = vmatmul.mubr.bf16.gmra.mrb[0].mxu0 %v3223
  %v3346 = vpop.f32.mrb[0].mxu0
  %v3347 = vadd.f32 0.0, %v3346
  %v3348 = vpop.f32.mrb[0].mxu0
  %v3349 = vpop.f32.mrb[0].mxu0
  %v3350 = vpop.f32.mrb[0].mxu0
  %3351 = vdwg.mxu0
  %v3352 = vadd.f32 %v3206, %v3324
  %v3353 = vadd.f32 %v3207, %v3327
  %v3354 = vadd.f32 %v3208, %v3332
  %v3355 = vadd.f32 %v3209, %v3339
  %v3356 = vadd.f32 %v3210, %v3342
  %v3357 = vadd.f32 %v3211, %v3347
  %v3358 = vld [vmem:[#allocation3 + $0x7] sm:$0xff]
  %v3359 = vld [vmem:[#allocation3 + $0xf] sm:$0xff]
  %v3360 = vld [vmem:[#allocation3 + $0x17] sm:$0xff]
  %v3361 = vld [vmem:[#allocation3 + $0x1f] sm:$0xff]
  %v3362 = vld [vmem:[#allocation3 + $0x27] sm:$0xff]
  %v3363 = vld [vmem:[#allocation3 + $0x2f] sm:$0xff]
  %v3364 = vld [vmem:[#allocation3 + $0x37] sm:$0xff]
  %v3365 = vld [vmem:[#allocation3 + $0x3f] sm:$0x1]
  %v3366 = vpack.c.bf16 %v3359, %v3358
  %v3367 = vpack.c.bf16 %v3361, %v3360
  %v3368 = vpack.c.bf16 %v3363, %v3362
  %v3369 = vpack.c.bf16 %v3365, %v3364
  %s3370 = scalar_lea.vmem %s5, 448
  %v3371 = vld [vmem:[%s3370] sm:$0xf]
  %v3372 = vld [vmem:[%s3370 + $0x4] sm:$0xf]
  %v3373 = vld [vmem:[%s3370 + $0x8] sm:$0xf]
  %v3374 = vld [vmem:[%s3370 + $0xc] sm:$0xf]
  %v3375 = vld [vmem:[%s3370 + $0x10] sm:$0xf]
  %v3376 = vld [vmem:[%s3370 + $0x14] sm:$0xf]
  %v3377 = vld [vmem:[%s3370 + $0x18] sm:$0xf]
  %v3378 = vld [vmem:[%s3370 + $0x1c] sm:$0xf]
  %v3379 = vld [vmem:[%s3370 + $0x20] sm:$0xf]
  %v3380 = vld [vmem:[%s3370 + $0x24] sm:$0xf]
  %v3381 = vld [vmem:[%s3370 + $0x28] sm:$0xf]
  %v3382 = vld [vmem:[%s3370 + $0x2c] sm:$0xf]
  %v3383 = vld [vmem:[%s3370 + $0x30] sm:$0xf]
  %v3384 = vld [vmem:[%s3370 + $0x34] sm:$0xf]
  %v3385 = vld [vmem:[%s3370 + $0x38] sm:$0xf]
  %v3386 = vld [vmem:[%s3370 + $0x3c] sm:$0xf]
  %v3403 = vunpack.c.l.b16 %v3371
  %v3404 = vunpack.c.l.b16 %v3372
  %v3405 = vunpack.c.l.b16 %v3373
  %v3406 = vunpack.c.l.b16 %v3374
  %v3407 = vunpack.c.l.b16 %v3375
  %v3408 = vunpack.c.l.b16 %v3376
  %v3409 = vunpack.c.l.b16 %v3377
  %v3410 = vunpack.c.l.b16 %v3378
  %v3411 = vunpack.c.l.b16 %v3379
  %v3412 = vunpack.c.l.b16 %v3380
  %v3413 = vunpack.c.l.b16 %v3381
  %v3414 = vunpack.c.l.b16 %v3382
  %v3415 = vunpack.c.l.b16 %v3383
  %v3416 = vunpack.c.l.b16 %v3384
  %v3417 = vunpack.c.l.b16 %v3385
  %v3418 = vunpack.c.l.b16 %v3386
  %v3419 = vpack.c.b16 %v3404, %v3403
  %v3420 = vpack.c.b16 %v3406, %v3405
  %v3421 = vpack.c.b16 %v3408, %v3407
  %v3422 = vpack.c.b16 %v3410, %v3409
  %v3423 = vpack.c.b16 %v3412, %v3411
  %v3424 = vpack.c.b16 %v3414, %v3413
  %v3425 = vpack.c.b16 %v3416, %v3415
  %v3426 = vpack.c.b16 %v3418, %v3417
  %3435 = vmatprep.subr.bf16.mxu0 0
  %3436 = vmatpush1.bf16.msra.mxu0 %v3419
  %3437 = vmatprep.subr.bf16.mxu0 0
  %3438 = vmatpush1.bf16.msra.mxu0 %v3420
  %3439 = vmatprep.subr.bf16.mxu0 0
  %3440 = vmatpush1.bf16.msra.mxu0 %v3421
  %3441 = vmatprep.subr.bf16.mxu0 0
  %3442 = vmatpush1.bf16.msra.mxu0 %v3422
  %3443 = vmatprep.subr.bf16.mxu0 0
  %3444 = vmatpush1.bf16.msra.mxu0 %v3423
  %3445 = vmatprep.subr.bf16.mxu0 0
  %3446 = vmatpush1.bf16.msra.mxu0 %v3424
  %3447 = vmatprep.subr.bf16.mxu0 0
  %3448 = vmatpush1.bf16.msra.mxu0 %v3425
  %3449 = vmatprep.subr.bf16.mxu0 0
  %3450 = vmatpush1.bf16.msra.mxu0 %v3426
  %3451 = vmatprep.subr.bf16.mxu0 0
  %3452 = vmatpush1.bf16.msra.mxu0 0
  %3453 = vmatprep.subr.bf16.mxu0 0
  %3454 = vmatpush1.bf16.msra.mxu0 0
  %3455 = vmatprep.subr.bf16.mxu0 0
  %3456 = vmatpush1.bf16.msra.mxu0 0
  %3457 = vmatprep.subr.bf16.mxu0 0
  %3458 = vmatpush1.bf16.msra.mxu0 0
  %3459 = vmatprep.subr.bf16.mxu0 0
  %3460 = vmatpush1.bf16.msra.mxu0 0
  %3461 = vmatprep.subr.bf16.mxu0 0
  %3462 = vmatpush1.bf16.msra.mxu0 0
  %3463 = vmatprep.subr.bf16.mxu0 0
  %3464 = vmatpush1.bf16.msra.mxu0 0
  %3465 = vmatprep.subr.bf16.mxu0 0
  %3466 = vmatpush1.bf16.msra.mxu0 0
  %3467 = vmatprep.mubr.bf16.mxu0 0
  %3468 = vmatmul.mubr.bf16.gmra.mrb[0].mxu0 %v3366
  %v3469 = vpop.f32.mrb[0].mxu0
  %v3470 = vadd.f32 0.0, %v3469
  %v3471 = vpop.f32.mrb[0].mxu0
  %v3472 = vpop.f32.mrb[0].mxu0
  %v3473 = vadd.f32 0.0, %v3472
  %v3474 = vpop.f32.mrb[0].mxu0
  %3475 = vmatprep.mubr.bf16.mxu0 0
  %3476 = vmatmul.mubr.bf16.gmra.mrb[0].mxu0 %v3367
  %v3477 = vpop.f32.mrb[0].mxu0
  %v3478 = vadd.f32 0.0, %v3477
  %v3479 = vpop.f32.mrb[0].mxu0
  %v3480 = vpop.f32.mrb[0].mxu0
  %v3481 = vpop.f32.mrb[0].mxu0
  %3482 = vmatprep.mubr.bf16.mxu0 0
  %3483 = vmatmul.mubr.bf16.gmra.mrb[0].mxu0 %v3368
  %v3484 = vpop.f32.mrb[0].mxu0
  %v3485 = vadd.f32 0.0, %v3484
  %v3486 = vpop.f32.mrb[0].mxu0
  %v3487 = vpop.f32.mrb[0].mxu0
  %v3488 = vadd.f32 0.0, %v3487
  %v3489 = vpop.f32.mrb[0].mxu0
  %3490 = vmatprep.mubr.bf16.mxu0 0
  %3491 = vmatmul.mubr.bf16.gmra.mrb[0].mxu0 %v3369
  %v3492 = vpop.f32.mrb[0].mxu0
  %v3493 = vadd.f32 0.0, %v3492
  %v3494 = vpop.f32.mrb[0].mxu0
  %v3495 = vpop.f32.mrb[0].mxu0
  %v3496 = vpop.f32.mrb[0].mxu0
  %3497 = vdwg.mxu0
  %v3498 = vadd.f32 %v3352, %v3470
  %v3499 = vadd.f32 %v3353, %v3473
  %v3500 = vadd.f32 %v3354, %v3478
  %v3501 = vadd.f32 %v3355, %v3485
  %v3502 = vadd.f32 %v3356, %v3488
  %v3503 = vadd.f32 %v3357, %v3493
  %v3504 = vld [vmem:[%s6] sm:$0x1]
  %v3506 = vlaneseq
  %v3507 = vshrl.u32 %v3506, 7
  %v3508 = vsub.s32 0, %v3507
  %v3509 = vrot.slane %v3504, %v3508
  %v3511 = vadd.f32 %v3498, %v3509
  %v3512 = vadd.f32 %v3499, %v3509
  %v3513 = vadd.f32 %v3500, %v3509
  %v3514 = vadd.f32 %v3501, %v3509
  %v3515 = vadd.f32 %v3502, %v3509
  %v3516 = vadd.f32 %v3503, %v3509
  %vm3517 = vcmp.ge.f32.partialorder %v3511, 0.0
  %vm3518 = vcmp.ge.f32.partialorder %v3512, 0.0
  %vm3519 = vcmp.ge.f32.partialorder %v3513, 0.0
  %vm3520 = vcmp.ge.f32.partialorder %v3514, 0.0
  %vm3521 = vcmp.ge.f32.partialorder %v3515, 0.0
  %vm3522 = vcmp.ge.f32.partialorder %v3516, 0.0
  %v3523 = vmul.f32 %v3511, 0.1
  %v3524 = vmul.f32 %v3512, 0.1
  %v3525 = vmul.f32 %v3513, 0.1
  %v3526 = vmul.f32 %v3514, 0.1
  %v3527 = vmul.f32 %v3515, 0.1
  %v3528 = vmul.f32 %v3516, 0.1
  %v3529 = vsel %vm3517, %v3511, %v3523
  %v3530 = vsel %vm3518, %v3512, %v3524
  %v3531 = vsel %vm3519, %v3513, %v3525
  %v3532 = vsel %vm3520, %v3514, %v3526
  %v3533 = vsel %vm3521, %v3515, %v3527
  %v3534 = vsel %vm3522, %v3516, %v3528
  %v3535 = vld [vmem:[%s7] sm:$0xff]
  %v3536 = vld [vmem:[%s7 + $0x8] sm:$0xff]
  %v3537 = vld [vmem:[%s7 + $0x10] sm:$0xff]
  %v3538 = vmul.f32 %v3529, %v3535
  %v3539 = vmul.f32 %v3530, %v3536
  %v3540 = vmul.f32 %v3531, %v3537
  %v3541 = vadd.f32 %v3538, %v3539
  %v3542 = vadd.f32 %v3541, %v3540
  %v3543 = vrot.slane %v3542, 4
  %v3544 = vadd.f32 %v3542, %v3543
  %v3545 = vrot.slane %v3544, 2
  %v3546 = vadd.f32 %v3544, %v3545
  %v3547 = vrot.slane %v3546, 1
  %v3548 = vadd.f32 %v3546, %v3547
  %v3549 = vmul.f32 %v3532, %v3535
  %v3550 = vmul.f32 %v3533, %v3536
  %v3551 = vmul.f32 %v3534, %v3537
  %v3552 = vadd.f32 %v3549, %v3550
  %v3553 = vadd.f32 %v3552, %v3551
  %v3554 = vrot.slane %v3553, 4
  %v3555 = vadd.f32 %v3553, %v3554
  %v3556 = vrot.slane %v3555, 2
  %v3557 = vadd.f32 %v3555, %v3556
  %v3558 = vrot.slane %v3557, 1
  %v3559 = vadd.f32 %v3557, %v3558
  %vm3560 = vcmask 1040384
  %v3561 = vsel %vm3560, %v3548, %v3559
  %vm3562 = vcmask 1041408
  %v3563 = vsel %vm3562, %v3561, 0.0
  %3564 = vadd.xlane.f32.xlu0 %v3563
  %v3565 = vpop.xlane.xlu0 %3564
  %v3566 = vld [vmem:[#allocation4] sm:$0x1]
  %v3568 = vlaneseq
  %v3569 = vshrl.u32 %v3568, 7
  %v3570 = vsub.s32 0, %v3569
  %v3571 = vrot.slane %v3566, %v3570
  %v3573 = vadd.f32 %v3565, %v3571
  %v3574 = vsub.f32 0.0, %v3573
  %v3575 = vmul.f32 %v3574, 1.442695
  %v3576 = vpow.pop %v3575
  %v3577 = vadd.f32 %v3576, 1.0
  %v3578 = vrcp.pop %v3577
  %v3579 = vmul.f32 1.0, %v3578
  %vm3580 = vcmask 1024
  %3581 = vst.msk [vmem:[%s9] sm:$0x3] %vm3580, %v3579
  // Predicated region
  $region38: #{discriminator_forward.1} parent=0 // pred_check
    _
  $region39: #{discriminator_forward.1} parent=0 // pred_check_branch
    %3583 = sbr.rel (0) target = $region41
  $region40: #{discriminator_forward.1} parent=0 // pred_region
    _
  $region41: #{discriminator_forward.1} parent=0 // pred_fallthru
    _
  // Predicated region
  $region42: #{discriminator_forward.1} parent=0 // pred_check
    _
  $region43: #{discriminator_forward.1} parent=0 // pred_check_branch
    %3585 = sbr.rel (0) target = $region45
  $region44: #{discriminator_forward.1} parent=0 // pred_region
    _
  $region45: #{discriminator_forward.1} parent=0 // pred_fallthru
    _

</llo_original>
